<compile_context>
chip_gen: v6e
topology: v6e:2x2x1
jax: 0.10.0
libtpu: 0.0.40
codegen_flags: <defaults>
</compile_context>

<pallas_src>
import jax
import jax.numpy as jnp
from jax.experimental import pallas as pl
from jax.experimental.pallas import tpu as pltpu


# ----------------------------- Pallas kernel --------------------------------
def gru_block_kernel(x_ref, wih_ref, whh_ref, bih_ref, bhh_ref,
                     out_ref, state_ref, gi_scr, h_scr):
    """One GRU layer over a (batch-block, time-block) grid.

    Grid axes: (batch blocks [parallel], time blocks [sequential/arbitrary]).

    x_ref     : (Tt, Bt, I)   bf16  input slab for this (batch, time) block
    wih_ref   : (I, 3H)       bf16  input->gate weights  (r|z|n columns)
    whh_ref   : (H, 3H)       bf16  hidden->gate weights
    bih_ref   : (1, 3H)       f32
    bhh_ref   : (1, 3H)       f32
    out_ref   : (Tt, Bt, H)   bf16/f32  per-step hidden outputs
    state_ref : (Bt, H)       f32   final hidden state (resident; written once)
    gi_scr    : (Tt, Bt, 3H)  bf16 VMEM  staged input projection for the block
    h_scr     : (Bt, H)       f32  VMEM  hidden state carried across time blocks
    """
    tb = pl.program_id(1)                       # time-block index (sequential)

    Tt, Bt, I = x_ref.shape
    H = h_scr.shape[-1]

    @pl.when(tb == 0)
    def _():
        h_scr[...] = jnp.zeros_like(h_scr)

    # ---- Input projection for the whole time block: one batched MXU matmul
    #      (no sequential dependency), hoisted out of the recurrence.
    #      bf16 operands, f32 accumulation; bias added once; staged in bf16
    #      (halves the block store + the Tt per-step reloads).
    x_blk = x_ref[...].reshape(Tt * Bt, I)
    gi = jnp.dot(x_blk, wih_ref[...], preferred_element_type=jnp.float32)
    gi_scr[...] = (gi + bih_ref[...]).reshape(Tt, Bt, 3 * H).astype(gi_scr.dtype)

    # Hoisted loop-invariants (JAX does not CSE broadcast_in_dim inside loops).
    bhh = jnp.broadcast_to(bhh_ref[...], (Bt, 3 * H))   # f32
    whh = whh_ref[...]                                   # (H, 3H) bf16, once

    # ---- Recurrence: only h @ W_hh remains in the serial loop.  Tt is small
    #      (<= ~16), so a static Python loop == full unroll with static slices;
    #      switch to lax.fori_loop(..., unroll=True) if Tt is grown further.
    h = h_scr[...]                              # (Bt, H) f32
    for t in range(Tt):
        gi_t = gi_scr[t]                        # (Bt, 3H) bf16, static slice
        gh = jnp.dot(h.astype(whh.dtype), whh,
                     preferred_element_type=jnp.float32) + bhh
        r = jax.nn.sigmoid(gi_t[:, :H] + gh[:, :H])
        z = jax.nn.sigmoid(gi_t[:, H:2 * H] + gh[:, H:2 * H])
        n = jnp.tanh(gi_t[:, 2 * H:] + r * gh[:, 2 * H:])
        h = n + z * (h - n)                     # == (1-z)*n + z*h, 1 fewer vmul
        out_ref[t] = h.astype(out_ref.dtype)

    h_scr[...] = h

    # Final state: write only once, on the last (sequential) time block.
    @pl.when(tb == pl.num_programs(1) - 1)
    def _():
        state_ref[...] = h.astype(state_ref.dtype)


# ------------------------------- helpers -------------------------------------
def _round_up(n, m):
    return ((n + m - 1) // m) * m


def _largest_divisor_leq(n, target):
    """Largest divisor of n that is <= target (bounded block, no full-extent
    fallback -> gi_scr scratch stays bounded even for long T)."""
    t = max(1, min(n, target))
    while n % t:
        t -= 1
    return t


def gru_layer(x_seq, w_ih, w_hh, b_ih, b_hh, *, block_t=8, block_b=128,
              out_dtype=jnp.bfloat16, mxu_dtype=jnp.bfloat16):
    """Run one GRU layer over a time-major (T, B, I) sequence.

    w_ih: (3H, I), w_hh: (3H, H), b_*: (3H,)  -- PyTorch nn.GRU layout.
    Returns (out (T, B, H) out_dtype, h_T (B, H) f32).

    block_b=128 fills the MXU M rows on v5e and keeps >= 2 batch blocks for
    v7x megacore once B >= 256 (on v6e/v7x block_b=256 is also reasonable when
    B is large and megacore sharding is not needed).
    """
    T, B, I = x_seq.shape
    H = w_hh.shape[1]

    # Lane-pad the contraction dim I to a multiple of 128 (zero rows in W_ih,
    # zero features in x) so the x@W_ih pass has dense K and unmasked loads.
    # For layer 0 this is better done once on the embedding table at init;
    # here it is handled generically.
    I_pad = _round_up(I, 128)
    if I_pad != I:
        x_seq = jnp.pad(x_seq, ((0, 0), (0, 0), (0, I_pad - I)))
        w_ih = jnp.pad(w_ih, ((0, 0), (0, I_pad - I)))

    Tt = _largest_divisor_leq(T, block_t)
    Bt = _largest_divisor_leq(B, block_b)

    # bf16 weights/activations feed the MXU; biases and gate math stay f32
    # (NOTE: bf16 W_hh / per-step h cast compounds error with T; keep f32 via
    #  mxu_dtype=jnp.float32 for very long sequences if accuracy demands it).
    wih_t = jnp.transpose(w_ih).astype(mxu_dtype)        # (I_pad, 3H)
    whh_t = jnp.transpose(w_hh).astype(mxu_dtype)        # (H, 3H)
    bih2 = b_ih.reshape(1, 3 * H).astype(jnp.float32)
    bhh2 = b_hh.reshape(1, 3 * H).astype(jnp.float32)
    x_in = x_seq.astype(mxu_dtype)                       # bf16 input DMA

    grid = (B // Bt, T // Tt)

    grid_spec = pltpu.PrefetchScalarGridSpec(
        num_scalar_prefetch=0,
        grid=grid,
        in_specs=[
            pl.BlockSpec((Tt, Bt, I_pad), lambda b, t: (t, b, 0)),
            pl.BlockSpec((I_pad, 3 * H), lambda b, t: (0, 0)),   # grid-invariant
            pl.BlockSpec((H, 3 * H), lambda b, t: (0, 0)),       # grid-invariant
            pl.BlockSpec((1, 3 * H), lambda b, t: (0, 0)),
            pl.BlockSpec((1, 3 * H), lambda b, t: (0, 0)),
        ],
        out_specs=[
            pl.BlockSpec((Tt, Bt, H), lambda b, t: (t, b, 0)),
            pl.BlockSpec((Bt, H), lambda b, t: (b, 0)),
        ],
        scratch_shapes=[
            pltpu.VMEM((Tt, Bt, 3 * H), mxu_dtype),   # staged x @ W_ih (bf16)
            pltpu.VMEM((Bt, H), jnp.float32),         # carried hidden state
        ],
    )

    out, state = pl.pallas_call(
        gru_block_kernel,
        out_shape=(jax.ShapeDtypeStruct((T, B, H), out_dtype),
                   jax.ShapeDtypeStruct((B, H), jnp.float32)),
        grid_spec=grid_spec,
        compiler_params=pltpu.CompilerParams(
            # Batch blocks are independent; time blocks MUST stay sequential
            # ("arbitrary") because h is carried in VMEM scratch and the state
            # block is written only on the last time block.
            dimension_semantics=("parallel", "arbitrary"),
            # Above v5e's 16 MiB scoped default, well under every gen's
            # physical VMEM (incl. v7x's 64 MiB).
            vmem_limit_bytes=48 * 1024 * 1024),
    )(x_in, wih_t, whh_t, bih2, bhh2)
    return out, state


# --------------------------- Encoder forward ---------------------------------
def init_params(key, vocab_size, embed_size, num_hiddens, num_layers):
    """Deterministic parameter init mirroring the PyTorch module's shapes."""
    keys = jax.random.split(key, 1 + 4 * num_layers)
    params = {"embedding": jax.random.normal(keys[0], (vocab_size, embed_size),
                                             dtype=jnp.float32)}
    k = 1.0 / jnp.sqrt(num_hiddens)
    layers = []
    for l in range(num_layers):
        in_size = embed_size if l == 0 else num_hiddens
        k0, k1, k2, k3 = keys[1 + 4 * l: 1 + 4 * (l + 1)]
        layers.append({
            "w_ih": jax.random.uniform(k0, (3 * num_hiddens, in_size),
                                       minval=-k, maxval=k, dtype=jnp.float32),
            "w_hh": jax.random.uniform(k1, (3 * num_hiddens, num_hiddens),
                                       minval=-k, maxval=k, dtype=jnp.float32),
            "b_ih": jax.random.uniform(k2, (3 * num_hiddens,),
                                       minval=-k, maxval=k, dtype=jnp.float32),
            "b_hh": jax.random.uniform(k3, (3 * num_hiddens,),
                                       minval=-k, maxval=k, dtype=jnp.float32),
        })
    params["layers"] = layers
    return params


def seq2seq_encoder_forward(params, X, valid_len=None):
    """X: (batch, seq_len) int32 token ids.  valid_len unused (as in PyTorch).

    Returns: output (seq_len, batch, num_hiddens) f32,
             state  (num_layers, batch, num_hiddens) f32.
    """
    del valid_len
    # Embedding lookup (XLA glue) + permute(1, 0, 2) -> time-major (T, B, E).
    emb = jnp.take(params["embedding"], X, axis=0)       # (B, T, E)
    x = jnp.transpose(emb, (1, 0, 2))                    # (T, B, E)

    num_layers = len(params["layers"])
    states = []
    for l, layer in enumerate(params["layers"]):
        last = (l == num_layers - 1)
        # dropout=0 in the module default, so no inter-layer dropout.
        # Inter-layer activations stay bf16 (halves the HBM round trip);
        # final layer emits f32 to preserve the module's output dtype.
        x, h_T = gru_layer(x, layer["w_ih"], layer["w_hh"],
                           layer["b_ih"], layer["b_hh"],
                           out_dtype=jnp.float32 if last else jnp.bfloat16)
        states.append(h_T)
    state = jnp.stack(states, axis=0)                    # (num_layers, B, H)
    return x, state


# --------------------------- pure-JAX reference ------------------------------
def _gru_layer_ref(x_seq, w_ih, w_hh, b_ih, b_hh):
    H = w_hh.shape[1]

    def step(h, x):
        gi = x @ w_ih.T + b_ih
        gh = h @ w_hh.T + b_hh
        r = jax.nn.sigmoid(gi[:, :H] + gh[:, :H])
        z = jax.nn.sigmoid(gi[:, H:2 * H] + gh[:, H:2 * H])
        n = jnp.tanh(gi[:, 2 * H:] + r * gh[:, 2 * H:])
        h_new = (1.0 - z) * n + z * h
        return h_new, h_new

    h0 = jnp.zeros((x_seq.shape[1], H), jnp.float32)
    h_T, out = jax.lax.scan(step, h0, x_seq)
    return out, h_T


def _encoder_ref(params, X):
    emb = jnp.take(params["embedding"], X, axis=0)
    x = jnp.transpose(emb, (1, 0, 2))
    states = []
    for layer in params["layers"]:
        x, h_T = _gru_layer_ref(x, layer["w_ih"], layer["w_hh"],
                                layer["b_ih"], layer["b_hh"])
        states.append(h_T)
    return x, jnp.stack(states, axis=0)


# --------------------------------- main ---------------------------------------
if __name__ == "__main__":
    # Small but representative: B multiple of 8 (sublanes), H multiple of 128
    # (lanes), T > Tt so the hidden-state carry across time blocks is hit, and
    # embed_size=64 exercises the I->128 lane-padding path.
    vocab_size, embed_size, num_hiddens, num_layers = 50, 64, 128, 2
    batch, seq_len = 16, 16

    key = jax.random.PRNGKey(0)
    pkey, xkey = jax.random.split(key)
    params = init_params(pkey, vocab_size, embed_size, num_hiddens, num_layers)

    X = jax.random.randint(xkey, (batch, seq_len), 0, vocab_size, dtype=jnp.int32)
    valid_len = jnp.full((batch,), seq_len, dtype=jnp.int32)  # unused, as in PyTorch

    fwd = jax.jit(seq2seq_encoder_forward)
    output, state = fwd(params, X, valid_len)
    output = jax.block_until_ready(output)
    state = jax.block_until_ready(state)

    assert output.shape == (seq_len, batch, num_hiddens)
    assert output.dtype == jnp.float32
    assert state.shape == (num_layers, batch, num_hiddens)

    # Sanity check against the pure-f32 JAX reference; tolerance accounts for
    # bf16 MXU operands, bf16 gi staging and bf16 inter-layer activations
    # (f32 accumulation and gate math in the kernel).
    ref_out, ref_state = _encoder_ref(params, X)
    assert jnp.allclose(output, ref_out, atol=7e-2, rtol=7e-2)
    assert jnp.allclose(state, ref_state, atol=7e-2, rtol=7e-2)

    print("KERNEL_OK")
</pallas_src>

<mosaic_0001>
module attributes {stable_mosaic.version = 11 : i64} {
  func.func @gru_block_kernel(%arg0: i32, %arg1: i32, %arg2: memref<8x16x128xbf16, #tpu.memory_space<vmem>>, %arg3: memref<128x384xbf16, #tpu.memory_space<vmem>>, %arg4: memref<128x384xbf16, #tpu.memory_space<vmem>>, %arg5: memref<1x384xf32, #tpu.memory_space<vmem>>, %arg6: memref<1x384xf32, #tpu.memory_space<vmem>>, %arg7: memref<8x16x128xbf16, #tpu.memory_space<vmem>>, %arg8: memref<16x128xf32, #tpu.memory_space<vmem>>, %arg9: memref<8x16x384xbf16, #tpu.memory_space<vmem>>, %arg10: memref<16x128xf32, #tpu.memory_space<vmem>>) attributes {dimension_semantics = [#tpu.dimension_semantics<parallel>, #tpu.dimension_semantics<arbitrary>], iteration_bounds = array<i64: 1, 2>, scalar_prefetch = 0 : i64, scratch_operands = 2 : i64, tpu.core_type = #tpu.core_type<tc>, window_params = [{transform_indices = @transform_0, window_bounds = array<i64: 8, 16, 128>}, {pipeline_mode = #tpu.pipeline_mode<synchronous>, transform_indices = @transform_1, window_bounds = array<i64: 128, 384>}, {pipeline_mode = #tpu.pipeline_mode<synchronous>, transform_indices = @transform_2, window_bounds = array<i64: 128, 384>}, {pipeline_mode = #tpu.pipeline_mode<synchronous>, transform_indices = @transform_3, window_bounds = array<i64: 1, 384>}, {pipeline_mode = #tpu.pipeline_mode<synchronous>, transform_indices = @transform_4, window_bounds = array<i64: 1, 384>}, {transform_indices = @transform_5, window_bounds = array<i64: 8, 16, 128>}, {transform_indices = @transform_6, window_bounds = array<i64: 16, 128>}]} {
    %c0_i32 = arith.constant 0 : i32
    %0 = arith.cmpi eq, %arg1, %c0_i32 : i32
    %1 = arith.extui %0 : i1 to i32
    %c0_i32_0 = arith.constant 0 : i32
    %2 = arith.cmpi ne, %1, %c0_i32_0 : i32
    scf.if %2 {
      %cst_84 = arith.constant 0.000000e+00 : f32
      %310 = vector.broadcast %cst_84 : f32 to vector<16x128xf32>
      %c0_85 = arith.constant 0 : index
      %c0_86 = arith.constant 0 : index
      %311 = vector.load %arg10[%c0_85, %c0_86] : memref<16x128xf32, #tpu.memory_space<vmem>>, vector<16x128xf32>
      tpu.vector_store %arg10[%c0_85, %c0_86], %310 {strides = array<i32>} : memref<16x128xf32, #tpu.memory_space<vmem>>, vector<16x128xf32>,
    } else {
    }
    %c0 = arith.constant 0 : index
    %c0_1 = arith.constant 0 : index
    %c0_2 = arith.constant 0 : index
    %3 = vector.load %arg2[%c0, %c0_1, %c0_2] : memref<8x16x128xbf16, #tpu.memory_space<vmem>>, vector<8x16x128xbf16>
    %4 = vector.shape_cast %3 : vector<8x16x128xbf16> to vector<128x128xbf16>
    %c0_3 = arith.constant 0 : index
    %c0_4 = arith.constant 0 : index
    %5 = vector.load %arg3[%c0_3, %c0_4] : memref<128x384xbf16, #tpu.memory_space<vmem>>, vector<128x384xbf16>
    %cst = arith.constant dense<0.000000e+00> : vector<128x384xf32>
    %6 = tpu.matmul %4, %5, %cst {dimension_numbers = #tpu.dot_dimension_numbers<[1], [0], [0], [1], [0, 0, 1, 1], [], []>} : vector<128x128xbf16>, vector<128x384xbf16>, vector<128x384xf32> -> vector<128x384xf32>
    %c0_5 = arith.constant 0 : index
    %c0_6 = arith.constant 0 : index
    %7 = vector.load %arg5[%c0_5, %c0_6] : memref<1x384xf32, #tpu.memory_space<vmem>>, vector<1x384xf32>
    %8 = vector.broadcast %7 : vector<1x384xf32> to vector<128x384xf32>
    %9 = arith.addf %6, %8 : vector<128x384xf32>
    %10 = vector.shape_cast %9 : vector<128x384xf32> to vector<8x16x384xf32>
    %11 = arith.truncf %10 : vector<8x16x384xf32> to vector<8x16x384xbf16>
    %c0_7 = arith.constant 0 : index
    %c0_8 = arith.constant 0 : index
    %c0_9 = arith.constant 0 : index
    %12 = vector.load %arg9[%c0_7, %c0_8, %c0_9] : memref<8x16x384xbf16, #tpu.memory_space<vmem>>, vector<8x16x384xbf16>
    tpu.vector_store %arg9[%c0_7, %c0_8, %c0_9], %11 {strides = array<i32>} : memref<8x16x384xbf16, #tpu.memory_space<vmem>>, vector<8x16x384xbf16>,
    %c0_10 = arith.constant 0 : index
    %c0_11 = arith.constant 0 : index
    %13 = vector.load %arg6[%c0_10, %c0_11] : memref<1x384xf32, #tpu.memory_space<vmem>>, vector<1x384xf32>
    %14 = vector.shape_cast %13 : vector<1x384xf32> to vector<1x384xf32>
    %15 = vector.broadcast %14 : vector<1x384xf32> to vector<16x384xf32>
    %c0_12 = arith.constant 0 : index
    %c0_13 = arith.constant 0 : index
    %16 = vector.load %arg4[%c0_12, %c0_13] : memref<128x384xbf16, #tpu.memory_space<vmem>>, vector<128x384xbf16>
    %c0_14 = arith.constant 0 : index
    %c0_15 = arith.constant 0 : index
    %17 = vector.load %arg10[%c0_14, %c0_15] : memref<16x128xf32, #tpu.memory_space<vmem>>, vector<16x128xf32>
    %c0_16 = arith.constant 0 : index
    %c0_17 = arith.constant 0 : index
    %c0_18 = arith.constant 0 : index
    %18 = vector.load %arg9[%c0_16, %c0_17, %c0_18] : memref<8x16x384xbf16, #tpu.memory_space<vmem>>, vector<1x16x384xbf16>
    %19 = vector.shape_cast %18 : vector<1x16x384xbf16> to vector<16x384xbf16>
    %20 = arith.truncf %17 : vector<16x128xf32> to vector<16x128xbf16>
    %cst_19 = arith.constant dense<0.000000e+00> : vector<16x384xf32>
    %21 = tpu.matmul %20, %16, %cst_19 {dimension_numbers = #tpu.dot_dimension_numbers<[1], [0], [0], [1], [0, 0, 1, 1], [], []>} : vector<16x128xbf16>, vector<128x384xbf16>, vector<16x384xf32> -> vector<16x384xf32>
    %22 = arith.addf %21, %15 : vector<16x384xf32>
    %23 = vector.extract_strided_slice %19 {offsets = [0, 0], sizes = [16, 128], strides = [1, 1]} : vector<16x384xbf16> to vector<16x128xbf16>
    %24 = vector.extract_strided_slice %22 {offsets = [0, 0], sizes = [16, 128], strides = [1, 1]} : vector<16x384xf32> to vector<16x128xf32>
    %25 = arith.extf %23 : vector<16x128xbf16> to vector<16x128xf32>
    %26 = arith.addf %25, %24 : vector<16x128xf32>
    %27 = arith.negf %26 : vector<16x128xf32>
    %28 = math.exp %27 : vector<16x128xf32>
    %cst_20 = arith.constant 1.000000e+00 : f32
    %29 = vector.broadcast %cst_20 : f32 to vector<16x128xf32>
    %30 = arith.addf %29, %28 : vector<16x128xf32>
    %31 = arith.divf %29, %30 : vector<16x128xf32>
    %32 = vector.extract_strided_slice %19 {offsets = [0, 128], sizes = [16, 128], strides = [1, 1]} : vector<16x384xbf16> to vector<16x128xbf16>
    %33 = vector.extract_strided_slice %22 {offsets = [0, 128], sizes = [16, 128], strides = [1, 1]} : vector<16x384xf32> to vector<16x128xf32>
    %34 = arith.extf %32 : vector<16x128xbf16> to vector<16x128xf32>
    %35 = arith.addf %34, %33 : vector<16x128xf32>
    %36 = arith.negf %35 : vector<16x128xf32>
    %37 = math.exp %36 : vector<16x128xf32>
    %cst_21 = arith.constant 1.000000e+00 : f32
    %38 = vector.broadcast %cst_21 : f32 to vector<16x128xf32>
    %39 = arith.addf %38, %37 : vector<16x128xf32>
    %40 = arith.divf %38, %39 : vector<16x128xf32>
    %41 = vector.extract_strided_slice %19 {offsets = [0, 256], sizes = [16, 128], strides = [1, 1]} : vector<16x384xbf16> to vector<16x128xbf16>
    %42 = vector.extract_strided_slice %22 {offsets = [0, 256], sizes = [16, 128], strides = [1, 1]} : vector<16x384xf32> to vector<16x128xf32>
    %43 = arith.mulf %31, %42 : vector<16x128xf32>
    %44 = arith.extf %41 : vector<16x128xbf16> to vector<16x128xf32>
    %45 = arith.addf %44, %43 : vector<16x128xf32>
    %46 = math.tanh %45 : vector<16x128xf32>
    %47 = arith.subf %17, %46 : vector<16x128xf32>
    %48 = arith.mulf %40, %47 : vector<16x128xf32>
    %49 = arith.addf %46, %48 : vector<16x128xf32>
    %50 = arith.truncf %49 : vector<16x128xf32> to vector<16x128xbf16>
    %c0_22 = arith.constant 0 : index
    %c0_23 = arith.constant 0 : index
    %c0_24 = arith.constant 0 : index
    %51 = vector.load %arg7[%c0_22, %c0_23, %c0_24] : memref<8x16x128xbf16, #tpu.memory_space<vmem>>, vector<1x16x128xbf16>
    %52 = vector.shape_cast %51 : vector<1x16x128xbf16> to vector<16x128xbf16>
    %53 = vector.shape_cast %50 : vector<16x128xbf16> to vector<1x16x128xbf16>
    tpu.vector_store %arg7[%c0_22, %c0_23, %c0_24], %53 {strides = array<i32>} : memref<8x16x128xbf16, #tpu.memory_space<vmem>>, vector<1x16x128xbf16>,
    %c1 = arith.constant 1 : index
    %c0_25 = arith.constant 0 : index
    %c0_26 = arith.constant 0 : index
    %54 = vector.load %arg9[%c1, %c0_25, %c0_26] : memref<8x16x384xbf16, #tpu.memory_space<vmem>>, vector<1x16x384xbf16>
    %55 = vector.shape_cast %54 : vector<1x16x384xbf16> to vector<16x384xbf16>
    %56 = arith.truncf %49 : vector<16x128xf32> to vector<16x128xbf16>
    %cst_27 = arith.constant dense<0.000000e+00> : vector<16x384xf32>
    %57 = tpu.matmul %56, %16, %cst_27 {dimension_numbers = #tpu.dot_dimension_numbers<[1], [0], [0], [1], [0, 0, 1, 1], [], []>} : vector<16x128xbf16>, vector<128x384xbf16>, vector<16x384xf32> -> vector<16x384xf32>
    %58 = arith.addf %57, %15 : vector<16x384xf32>
    %59 = vector.extract_strided_slice %55 {offsets = [0, 0], sizes = [16, 128], strides = [1, 1]} : vector<16x384xbf16> to vector<16x128xbf16>
    %60 = vector.extract_strided_slice %58 {offsets = [0, 0], sizes = [16, 128], strides = [1, 1]} : vector<16x384xf32> to vector<16x128xf32>
    %61 = arith.extf %59 : vector<16x128xbf16> to vector<16x128xf32>
    %62 = arith.addf %61, %60 : vector<16x128xf32>
    %63 = arith.negf %62 : vector<16x128xf32>
    %64 = math.exp %63 : vector<16x128xf32>
    %cst_28 = arith.constant 1.000000e+00 : f32
    %65 = vector.broadcast %cst_28 : f32 to vector<16x128xf32>
    %66 = arith.addf %65, %64 : vector<16x128xf32>
    %67 = arith.divf %65, %66 : vector<16x128xf32>
    %68 = vector.extract_strided_slice %55 {offsets = [0, 128], sizes = [16, 128], strides = [1, 1]} : vector<16x384xbf16> to vector<16x128xbf16>
    %69 = vector.extract_strided_slice %58 {offsets = [0, 128], sizes = [16, 128], strides = [1, 1]} : vector<16x384xf32> to vector<16x128xf32>
    %70 = arith.extf %68 : vector<16x128xbf16> to vector<16x128xf32>
    %71 = arith.addf %70, %69 : vector<16x128xf32>
    %72 = arith.negf %71 : vector<16x128xf32>
    %73 = math.exp %72 : vector<16x128xf32>
    %cst_29 = arith.constant 1.000000e+00 : f32
    %74 = vector.broadcast %cst_29 : f32 to vector<16x128xf32>
    %75 = arith.addf %74, %73 : vector<16x128xf32>
    %76 = arith.divf %74, %75 : vector<16x128xf32>
    %77 = vector.extract_strided_slice %55 {offsets = [0, 256], sizes = [16, 128], strides = [1, 1]} : vector<16x384xbf16> to vector<16x128xbf16>
    %78 = vector.extract_strided_slice %58 {offsets = [0, 256], sizes = [16, 128], strides = [1, 1]} : vector<16x384xf32> to vector<16x128xf32>
    %79 = arith.mulf %67, %78 : vector<16x128xf32>
    %80 = arith.extf %77 : vector<16x128xbf16> to vector<16x128xf32>
    %81 = arith.addf %80, %79 : vector<16x128xf32>
    %82 = math.tanh %81 : vector<16x128xf32>
    %83 = arith.subf %49, %82 : vector<16x128xf32>
    %84 = arith.mulf %76, %83 : vector<16x128xf32>
    %85 = arith.addf %82, %84 : vector<16x128xf32>
    %86 = arith.truncf %85 : vector<16x128xf32> to vector<16x128xbf16>
    %c1_30 = arith.constant 1 : index
    %c0_31 = arith.constant 0 : index
    %c0_32 = arith.constant 0 : index
    %87 = vector.load %arg7[%c1_30, %c0_31, %c0_32] : memref<8x16x128xbf16, #tpu.memory_space<vmem>>, vector<1x16x128xbf16>
    %88 = vector.shape_cast %87 : vector<1x16x128xbf16> to vector<16x128xbf16>
    %89 = vector.shape_cast %86 : vector<16x128xbf16> to vector<1x16x128xbf16>
    tpu.vector_store %arg7[%c1_30, %c0_31, %c0_32], %89 {strides = array<i32>} : memref<8x16x128xbf16, #tpu.memory_space<vmem>>, vector<1x16x128xbf16>,
    %c2 = arith.constant 2 : index
    %c0_33 = arith.constant 0 : index
    %c0_34 = arith.constant 0 : index
    %90 = vector.load %arg9[%c2, %c0_33, %c0_34] : memref<8x16x384xbf16, #tpu.memory_space<vmem>>, vector<1x16x384xbf16>
    %91 = vector.shape_cast %90 : vector<1x16x384xbf16> to vector<16x384xbf16>
    %92 = arith.truncf %85 : vector<16x128xf32> to vector<16x128xbf16>
    %cst_35 = arith.constant dense<0.000000e+00> : vector<16x384xf32>
    %93 = tpu.matmul %92, %16, %cst_35 {dimension_numbers = #tpu.dot_dimension_numbers<[1], [0], [0], [1], [0, 0, 1, 1], [], []>} : vector<16x128xbf16>, vector<128x384xbf16>, vector<16x384xf32> -> vector<16x384xf32>
    %94 = arith.addf %93, %15 : vector<16x384xf32>
    %95 = vector.extract_strided_slice %91 {offsets = [0, 0], sizes = [16, 128], strides = [1, 1]} : vector<16x384xbf16> to vector<16x128xbf16>
    %96 = vector.extract_strided_slice %94 {offsets = [0, 0], sizes = [16, 128], strides = [1, 1]} : vector<16x384xf32> to vector<16x128xf32>
    %97 = arith.extf %95 : vector<16x128xbf16> to vector<16x128xf32>
    %98 = arith.addf %97, %96 : vector<16x128xf32>
    %99 = arith.negf %98 : vector<16x128xf32>
    %100 = math.exp %99 : vector<16x128xf32>
    %cst_36 = arith.constant 1.000000e+00 : f32
    %101 = vector.broadcast %cst_36 : f32 to vector<16x128xf32>
    %102 = arith.addf %101, %100 : vector<16x128xf32>
    %103 = arith.divf %101, %102 : vector<16x128xf32>
    %104 = vector.extract_strided_slice %91 {offsets = [0, 128], sizes = [16, 128], strides = [1, 1]} : vector<16x384xbf16> to vector<16x128xbf16>
    %105 = vector.extract_strided_slice %94 {offsets = [0, 128], sizes = [16, 128], strides = [1, 1]} : vector<16x384xf32> to vector<16x128xf32>
    %106 = arith.extf %104 : vector<16x128xbf16> to vector<16x128xf32>
    %107 = arith.addf %106, %105 : vector<16x128xf32>
    %108 = arith.negf %107 : vector<16x128xf32>
    %109 = math.exp %108 : vector<16x128xf32>
    %cst_37 = arith.constant 1.000000e+00 : f32
    %110 = vector.broadcast %cst_37 : f32 to vector<16x128xf32>
    %111 = arith.addf %110, %109 : vector<16x128xf32>
    %112 = arith.divf %110, %111 : vector<16x128xf32>
    %113 = vector.extract_strided_slice %91 {offsets = [0, 256], sizes = [16, 128], strides = [1, 1]} : vector<16x384xbf16> to vector<16x128xbf16>
    %114 = vector.extract_strided_slice %94 {offsets = [0, 256], sizes = [16, 128], strides = [1, 1]} : vector<16x384xf32> to vector<16x128xf32>
    %115 = arith.mulf %103, %114 : vector<16x128xf32>
    %116 = arith.extf %113 : vector<16x128xbf16> to vector<16x128xf32>
    %117 = arith.addf %116, %115 : vector<16x128xf32>
    %118 = math.tanh %117 : vector<16x128xf32>
    %119 = arith.subf %85, %118 : vector<16x128xf32>
    %120 = arith.mulf %112, %119 : vector<16x128xf32>
    %121 = arith.addf %118, %120 : vector<16x128xf32>
    %122 = arith.truncf %121 : vector<16x128xf32> to vector<16x128xbf16>
    %c2_38 = arith.constant 2 : index
    %c0_39 = arith.constant 0 : index
    %c0_40 = arith.constant 0 : index
    %123 = vector.load %arg7[%c2_38, %c0_39, %c0_40] : memref<8x16x128xbf16, #tpu.memory_space<vmem>>, vector<1x16x128xbf16>
    %124 = vector.shape_cast %123 : vector<1x16x128xbf16> to vector<16x128xbf16>
    %125 = vector.shape_cast %122 : vector<16x128xbf16> to vector<1x16x128xbf16>
    tpu.vector_store %arg7[%c2_38, %c0_39, %c0_40], %125 {strides = array<i32>} : memref<8x16x128xbf16, #tpu.memory_space<vmem>>, vector<1x16x128xbf16>,
    %c3 = arith.constant 3 : index
    %c0_41 = arith.constant 0 : index
    %c0_42 = arith.constant 0 : index
    %126 = vector.load %arg9[%c3, %c0_41, %c0_42] : memref<8x16x384xbf16, #tpu.memory_space<vmem>>, vector<1x16x384xbf16>
    %127 = vector.shape_cast %126 : vector<1x16x384xbf16> to vector<16x384xbf16>
    %128 = arith.truncf %121 : vector<16x128xf32> to vector<16x128xbf16>
    %cst_43 = arith.constant dense<0.000000e+00> : vector<16x384xf32>
    %129 = tpu.matmul %128, %16, %cst_43 {dimension_numbers = #tpu.dot_dimension_numbers<[1], [0], [0], [1], [0, 0, 1, 1], [], []>} : vector<16x128xbf16>, vector<128x384xbf16>, vector<16x384xf32> -> vector<16x384xf32>
    %130 = arith.addf %129, %15 : vector<16x384xf32>
    %131 = vector.extract_strided_slice %127 {offsets = [0, 0], sizes = [16, 128], strides = [1, 1]} : vector<16x384xbf16> to vector<16x128xbf16>
    %132 = vector.extract_strided_slice %130 {offsets = [0, 0], sizes = [16, 128], strides = [1, 1]} : vector<16x384xf32> to vector<16x128xf32>
    %133 = arith.extf %131 : vector<16x128xbf16> to vector<16x128xf32>
    %134 = arith.addf %133, %132 : vector<16x128xf32>
    %135 = arith.negf %134 : vector<16x128xf32>
    %136 = math.exp %135 : vector<16x128xf32>
    %cst_44 = arith.constant 1.000000e+00 : f32
    %137 = vector.broadcast %cst_44 : f32 to vector<16x128xf32>
    %138 = arith.addf %137, %136 : vector<16x128xf32>
    %139 = arith.divf %137, %138 : vector<16x128xf32>
    %140 = vector.extract_strided_slice %127 {offsets = [0, 128], sizes = [16, 128], strides = [1, 1]} : vector<16x384xbf16> to vector<16x128xbf16>
    %141 = vector.extract_strided_slice %130 {offsets = [0, 128], sizes = [16, 128], strides = [1, 1]} : vector<16x384xf32> to vector<16x128xf32>
    %142 = arith.extf %140 : vector<16x128xbf16> to vector<16x128xf32>
    %143 = arith.addf %142, %141 : vector<16x128xf32>
    %144 = arith.negf %143 : vector<16x128xf32>
    %145 = math.exp %144 : vector<16x128xf32>
    %cst_45 = arith.constant 1.000000e+00 : f32
    %146 = vector.broadcast %cst_45 : f32 to vector<16x128xf32>
    %147 = arith.addf %146, %145 : vector<16x128xf32>
    %148 = arith.divf %146, %147 : vector<16x128xf32>
    %149 = vector.extract_strided_slice %127 {offsets = [0, 256], sizes = [16, 128], strides = [1, 1]} : vector<16x384xbf16> to vector<16x128xbf16>
    %150 = vector.extract_strided_slice %130 {offsets = [0, 256], sizes = [16, 128], strides = [1, 1]} : vector<16x384xf32> to vector<16x128xf32>
    %151 = arith.mulf %139, %150 : vector<16x128xf32>
    %152 = arith.extf %149 : vector<16x128xbf16> to vector<16x128xf32>
    %153 = arith.addf %152, %151 : vector<16x128xf32>
    %154 = math.tanh %153 : vector<16x128xf32>
    %155 = arith.subf %121, %154 : vector<16x128xf32>
    %156 = arith.mulf %148, %155 : vector<16x128xf32>
    %157 = arith.addf %154, %156 : vector<16x128xf32>
    %158 = arith.truncf %157 : vector<16x128xf32> to vector<16x128xbf16>
    %c3_46 = arith.constant 3 : index
    %c0_47 = arith.constant 0 : index
    %c0_48 = arith.constant 0 : index
    %159 = vector.load %arg7[%c3_46, %c0_47, %c0_48] : memref<8x16x128xbf16, #tpu.memory_space<vmem>>, vector<1x16x128xbf16>
    %160 = vector.shape_cast %159 : vector<1x16x128xbf16> to vector<16x128xbf16>
    %161 = vector.shape_cast %158 : vector<16x128xbf16> to vector<1x16x128xbf16>
    tpu.vector_store %arg7[%c3_46, %c0_47, %c0_48], %161 {strides = array<i32>} : memref<8x16x128xbf16, #tpu.memory_space<vmem>>, vector<1x16x128xbf16>,
    %c4 = arith.constant 4 : index
    %c0_49 = arith.constant 0 : index
    %c0_50 = arith.constant 0 : index
    %162 = vector.load %arg9[%c4, %c0_49, %c0_50] : memref<8x16x384xbf16, #tpu.memory_space<vmem>>, vector<1x16x384xbf16>
    %163 = vector.shape_cast %162 : vector<1x16x384xbf16> to vector<16x384xbf16>
    %164 = arith.truncf %157 : vector<16x128xf32> to vector<16x128xbf16>
    %cst_51 = arith.constant dense<0.000000e+00> : vector<16x384xf32>
    %165 = tpu.matmul %164, %16, %cst_51 {dimension_numbers = #tpu.dot_dimension_numbers<[1], [0], [0], [1], [0, 0, 1, 1], [], []>} : vector<16x128xbf16>, vector<128x384xbf16>, vector<16x384xf32> -> vector<16x384xf32>
    %166 = arith.addf %165, %15 : vector<16x384xf32>
    %167 = vector.extract_strided_slice %163 {offsets = [0, 0], sizes = [16, 128], strides = [1, 1]} : vector<16x384xbf16> to vector<16x128xbf16>
    %168 = vector.extract_strided_slice %166 {offsets = [0, 0], sizes = [16, 128], strides = [1, 1]} : vector<16x384xf32> to vector<16x128xf32>
    %169 = arith.extf %167 : vector<16x128xbf16> to vector<16x128xf32>
    %170 = arith.addf %169, %168 : vector<16x128xf32>
    %171 = arith.negf %170 : vector<16x128xf32>
    %172 = math.exp %171 : vector<16x128xf32>
    %cst_52 = arith.constant 1.000000e+00 : f32
    %173 = vector.broadcast %cst_52 : f32 to vector<16x128xf32>
    %174 = arith.addf %173, %172 : vector<16x128xf32>
    %175 = arith.divf %173, %174 : vector<16x128xf32>
    %176 = vector.extract_strided_slice %163 {offsets = [0, 128], sizes = [16, 128], strides = [1, 1]} : vector<16x384xbf16> to vector<16x128xbf16>
    %177 = vector.extract_strided_slice %166 {offsets = [0, 128], sizes = [16, 128], strides = [1, 1]} : vector<16x384xf32> to vector<16x128xf32>
    %178 = arith.extf %176 : vector<16x128xbf16> to vector<16x128xf32>
    %179 = arith.addf %178, %177 : vector<16x128xf32>
    %180 = arith.negf %179 : vector<16x128xf32>
    %181 = math.exp %180 : vector<16x128xf32>
    %cst_53 = arith.constant 1.000000e+00 : f32
    %182 = vector.broadcast %cst_53 : f32 to vector<16x128xf32>
    %183 = arith.addf %182, %181 : vector<16x128xf32>
    %184 = arith.divf %182, %183 : vector<16x128xf32>
    %185 = vector.extract_strided_slice %163 {offsets = [0, 256], sizes = [16, 128], strides = [1, 1]} : vector<16x384xbf16> to vector<16x128xbf16>
    %186 = vector.extract_strided_slice %166 {offsets = [0, 256], sizes = [16, 128], strides = [1, 1]} : vector<16x384xf32> to vector<16x128xf32>
    %187 = arith.mulf %175, %186 : vector<16x128xf32>
    %188 = arith.extf %185 : vector<16x128xbf16> to vector<16x128xf32>
    %189 = arith.addf %188, %187 : vector<16x128xf32>
    %190 = math.tanh %189 : vector<16x128xf32>
    %191 = arith.subf %157, %190 : vector<16x128xf32>
    %192 = arith.mulf %184, %191 : vector<16x128xf32>
    %193 = arith.addf %190, %192 : vector<16x128xf32>
    %194 = arith.truncf %193 : vector<16x128xf32> to vector<16x128xbf16>
    %c4_54 = arith.constant 4 : index
    %c0_55 = arith.constant 0 : index
    %c0_56 = arith.constant 0 : index
    %195 = vector.load %arg7[%c4_54, %c0_55, %c0_56] : memref<8x16x128xbf16, #tpu.memory_space<vmem>>, vector<1x16x128xbf16>
    %196 = vector.shape_cast %195 : vector<1x16x128xbf16> to vector<16x128xbf16>
    %197 = vector.shape_cast %194 : vector<16x128xbf16> to vector<1x16x128xbf16>
    tpu.vector_store %arg7[%c4_54, %c0_55, %c0_56], %197 {strides = array<i32>} : memref<8x16x128xbf16, #tpu.memory_space<vmem>>, vector<1x16x128xbf16>,
    %c5 = arith.constant 5 : index
    %c0_57 = arith.constant 0 : index
    %c0_58 = arith.constant 0 : index
    %198 = vector.load %arg9[%c5, %c0_57, %c0_58] : memref<8x16x384xbf16, #tpu.memory_space<vmem>>, vector<1x16x384xbf16>
    %199 = vector.shape_cast %198 : vector<1x16x384xbf16> to vector<16x384xbf16>
    %200 = arith.truncf %193 : vector<16x128xf32> to vector<16x128xbf16>
    %cst_59 = arith.constant dense<0.000000e+00> : vector<16x384xf32>
    %201 = tpu.matmul %200, %16, %cst_59 {dimension_numbers = #tpu.dot_dimension_numbers<[1], [0], [0], [1], [0, 0, 1, 1], [], []>} : vector<16x128xbf16>, vector<128x384xbf16>, vector<16x384xf32> -> vector<16x384xf32>
    %202 = arith.addf %201, %15 : vector<16x384xf32>
    %203 = vector.extract_strided_slice %199 {offsets = [0, 0], sizes = [16, 128], strides = [1, 1]} : vector<16x384xbf16> to vector<16x128xbf16>
    %204 = vector.extract_strided_slice %202 {offsets = [0, 0], sizes = [16, 128], strides = [1, 1]} : vector<16x384xf32> to vector<16x128xf32>
    %205 = arith.extf %203 : vector<16x128xbf16> to vector<16x128xf32>
    %206 = arith.addf %205, %204 : vector<16x128xf32>
    %207 = arith.negf %206 : vector<16x128xf32>
    %208 = math.exp %207 : vector<16x128xf32>
    %cst_60 = arith.constant 1.000000e+00 : f32
    %209 = vector.broadcast %cst_60 : f32 to vector<16x128xf32>
    %210 = arith.addf %209, %208 : vector<16x128xf32>
    %211 = arith.divf %209, %210 : vector<16x128xf32>
    %212 = vector.extract_strided_slice %199 {offsets = [0, 128], sizes = [16, 128], strides = [1, 1]} : vector<16x384xbf16> to vector<16x128xbf16>
    %213 = vector.extract_strided_slice %202 {offsets = [0, 128], sizes = [16, 128], strides = [1, 1]} : vector<16x384xf32> to vector<16x128xf32>
    %214 = arith.extf %212 : vector<16x128xbf16> to vector<16x128xf32>
    %215 = arith.addf %214, %213 : vector<16x128xf32>
    %216 = arith.negf %215 : vector<16x128xf32>
    %217 = math.exp %216 : vector<16x128xf32>
    %cst_61 = arith.constant 1.000000e+00 : f32
    %218 = vector.broadcast %cst_61 : f32 to vector<16x128xf32>
    %219 = arith.addf %218, %217 : vector<16x128xf32>
    %220 = arith.divf %218, %219 : vector<16x128xf32>
    %221 = vector.extract_strided_slice %199 {offsets = [0, 256], sizes = [16, 128], strides = [1, 1]} : vector<16x384xbf16> to vector<16x128xbf16>
    %222 = vector.extract_strided_slice %202 {offsets = [0, 256], sizes = [16, 128], strides = [1, 1]} : vector<16x384xf32> to vector<16x128xf32>
    %223 = arith.mulf %211, %222 : vector<16x128xf32>
    %224 = arith.extf %221 : vector<16x128xbf16> to vector<16x128xf32>
    %225 = arith.addf %224, %223 : vector<16x128xf32>
    %226 = math.tanh %225 : vector<16x128xf32>
    %227 = arith.subf %193, %226 : vector<16x128xf32>
    %228 = arith.mulf %220, %227 : vector<16x128xf32>
    %229 = arith.addf %226, %228 : vector<16x128xf32>
    %230 = arith.truncf %229 : vector<16x128xf32> to vector<16x128xbf16>
    %c5_62 = arith.constant 5 : index
    %c0_63 = arith.constant 0 : index
    %c0_64 = arith.constant 0 : index
    %231 = vector.load %arg7[%c5_62, %c0_63, %c0_64] : memref<8x16x128xbf16, #tpu.memory_space<vmem>>, vector<1x16x128xbf16>
    %232 = vector.shape_cast %231 : vector<1x16x128xbf16> to vector<16x128xbf16>
    %233 = vector.shape_cast %230 : vector<16x128xbf16> to vector<1x16x128xbf16>
    tpu.vector_store %arg7[%c5_62, %c0_63, %c0_64], %233 {strides = array<i32>} : memref<8x16x128xbf16, #tpu.memory_space<vmem>>, vector<1x16x128xbf16>,
    %c6 = arith.constant 6 : index
    %c0_65 = arith.constant 0 : index
    %c0_66 = arith.constant 0 : index
    %234 = vector.load %arg9[%c6, %c0_65, %c0_66] : memref<8x16x384xbf16, #tpu.memory_space<vmem>>, vector<1x16x384xbf16>
    %235 = vector.shape_cast %234 : vector<1x16x384xbf16> to vector<16x384xbf16>
    %236 = arith.truncf %229 : vector<16x128xf32> to vector<16x128xbf16>
    %cst_67 = arith.constant dense<0.000000e+00> : vector<16x384xf32>
    %237 = tpu.matmul %236, %16, %cst_67 {dimension_numbers = #tpu.dot_dimension_numbers<[1], [0], [0], [1], [0, 0, 1, 1], [], []>} : vector<16x128xbf16>, vector<128x384xbf16>, vector<16x384xf32> -> vector<16x384xf32>
    %238 = arith.addf %237, %15 : vector<16x384xf32>
    %239 = vector.extract_strided_slice %235 {offsets = [0, 0], sizes = [16, 128], strides = [1, 1]} : vector<16x384xbf16> to vector<16x128xbf16>
    %240 = vector.extract_strided_slice %238 {offsets = [0, 0], sizes = [16, 128], strides = [1, 1]} : vector<16x384xf32> to vector<16x128xf32>
    %241 = arith.extf %239 : vector<16x128xbf16> to vector<16x128xf32>
    %242 = arith.addf %241, %240 : vector<16x128xf32>
    %243 = arith.negf %242 : vector<16x128xf32>
    %244 = math.exp %243 : vector<16x128xf32>
    %cst_68 = arith.constant 1.000000e+00 : f32
    %245 = vector.broadcast %cst_68 : f32 to vector<16x128xf32>
    %246 = arith.addf %245, %244 : vector<16x128xf32>
    %247 = arith.divf %245, %246 : vector<16x128xf32>
    %248 = vector.extract_strided_slice %235 {offsets = [0, 128], sizes = [16, 128], strides = [1, 1]} : vector<16x384xbf16> to vector<16x128xbf16>
    %249 = vector.extract_strided_slice %238 {offsets = [0, 128], sizes = [16, 128], strides = [1, 1]} : vector<16x384xf32> to vector<16x128xf32>
    %250 = arith.extf %248 : vector<16x128xbf16> to vector<16x128xf32>
    %251 = arith.addf %250, %249 : vector<16x128xf32>
    %252 = arith.negf %251 : vector<16x128xf32>
    %253 = math.exp %252 : vector<16x128xf32>
    %cst_69 = arith.constant 1.000000e+00 : f32
    %254 = vector.broadcast %cst_69 : f32 to vector<16x128xf32>
    %255 = arith.addf %254, %253 : vector<16x128xf32>
    %256 = arith.divf %254, %255 : vector<16x128xf32>
    %257 = vector.extract_strided_slice %235 {offsets = [0, 256], sizes = [16, 128], strides = [1, 1]} : vector<16x384xbf16> to vector<16x128xbf16>
    %258 = vector.extract_strided_slice %238 {offsets = [0, 256], sizes = [16, 128], strides = [1, 1]} : vector<16x384xf32> to vector<16x128xf32>
    %259 = arith.mulf %247, %258 : vector<16x128xf32>
    %260 = arith.extf %257 : vector<16x128xbf16> to vector<16x128xf32>
    %261 = arith.addf %260, %259 : vector<16x128xf32>
    %262 = math.tanh %261 : vector<16x128xf32>
    %263 = arith.subf %229, %262 : vector<16x128xf32>
    %264 = arith.mulf %256, %263 : vector<16x128xf32>
    %265 = arith.addf %262, %264 : vector<16x128xf32>
    %266 = arith.truncf %265 : vector<16x128xf32> to vector<16x128xbf16>
    %c6_70 = arith.constant 6 : index
    %c0_71 = arith.constant 0 : index
    %c0_72 = arith.constant 0 : index
    %267 = vector.load %arg7[%c6_70, %c0_71, %c0_72] : memref<8x16x128xbf16, #tpu.memory_space<vmem>>, vector<1x16x128xbf16>
    %268 = vector.shape_cast %267 : vector<1x16x128xbf16> to vector<16x128xbf16>
    %269 = vector.shape_cast %266 : vector<16x128xbf16> to vector<1x16x128xbf16>
    tpu.vector_store %arg7[%c6_70, %c0_71, %c0_72], %269 {strides = array<i32>} : memref<8x16x128xbf16, #tpu.memory_space<vmem>>, vector<1x16x128xbf16>,
    %c7 = arith.constant 7 : index
    %c0_73 = arith.constant 0 : index
    %c0_74 = arith.constant 0 : index
    %270 = vector.load %arg9[%c7, %c0_73, %c0_74] : memref<8x16x384xbf16, #tpu.memory_space<vmem>>, vector<1x16x384xbf16>
    %271 = vector.shape_cast %270 : vector<1x16x384xbf16> to vector<16x384xbf16>
    %272 = arith.truncf %265 : vector<16x128xf32> to vector<16x128xbf16>
    %cst_75 = arith.constant dense<0.000000e+00> : vector<16x384xf32>
    %273 = tpu.matmul %272, %16, %cst_75 {dimension_numbers = #tpu.dot_dimension_numbers<[1], [0], [0], [1], [0, 0, 1, 1], [], []>} : vector<16x128xbf16>, vector<128x384xbf16>, vector<16x384xf32> -> vector<16x384xf32>
    %274 = arith.addf %273, %15 : vector<16x384xf32>
    %275 = vector.extract_strided_slice %271 {offsets = [0, 0], sizes = [16, 128], strides = [1, 1]} : vector<16x384xbf16> to vector<16x128xbf16>
    %276 = vector.extract_strided_slice %274 {offsets = [0, 0], sizes = [16, 128], strides = [1, 1]} : vector<16x384xf32> to vector<16x128xf32>
    %277 = arith.extf %275 : vector<16x128xbf16> to vector<16x128xf32>
    %278 = arith.addf %277, %276 : vector<16x128xf32>
    %279 = arith.negf %278 : vector<16x128xf32>
    %280 = math.exp %279 : vector<16x128xf32>
    %cst_76 = arith.constant 1.000000e+00 : f32
    %281 = vector.broadcast %cst_76 : f32 to vector<16x128xf32>
    %282 = arith.addf %281, %280 : vector<16x128xf32>
    %283 = arith.divf %281, %282 : vector<16x128xf32>
    %284 = vector.extract_strided_slice %271 {offsets = [0, 128], sizes = [16, 128], strides = [1, 1]} : vector<16x384xbf16> to vector<16x128xbf16>
    %285 = vector.extract_strided_slice %274 {offsets = [0, 128], sizes = [16, 128], strides = [1, 1]} : vector<16x384xf32> to vector<16x128xf32>
    %286 = arith.extf %284 : vector<16x128xbf16> to vector<16x128xf32>
    %287 = arith.addf %286, %285 : vector<16x128xf32>
    %288 = arith.negf %287 : vector<16x128xf32>
    %289 = math.exp %288 : vector<16x128xf32>
    %cst_77 = arith.constant 1.000000e+00 : f32
    %290 = vector.broadcast %cst_77 : f32 to vector<16x128xf32>
    %291 = arith.addf %290, %289 : vector<16x128xf32>
    %292 = arith.divf %290, %291 : vector<16x128xf32>
    %293 = vector.extract_strided_slice %271 {offsets = [0, 256], sizes = [16, 128], strides = [1, 1]} : vector<16x384xbf16> to vector<16x128xbf16>
    %294 = vector.extract_strided_slice %274 {offsets = [0, 256], sizes = [16, 128], strides = [1, 1]} : vector<16x384xf32> to vector<16x128xf32>
    %295 = arith.mulf %283, %294 : vector<16x128xf32>
    %296 = arith.extf %293 : vector<16x128xbf16> to vector<16x128xf32>
    %297 = arith.addf %296, %295 : vector<16x128xf32>
    %298 = math.tanh %297 : vector<16x128xf32>
    %299 = arith.subf %265, %298 : vector<16x128xf32>
    %300 = arith.mulf %292, %299 : vector<16x128xf32>
    %301 = arith.addf %298, %300 : vector<16x128xf32>
    %302 = arith.truncf %301 : vector<16x128xf32> to vector<16x128xbf16>
    %c7_78 = arith.constant 7 : index
    %c0_79 = arith.constant 0 : index
    %c0_80 = arith.constant 0 : index
    %303 = vector.load %arg7[%c7_78, %c0_79, %c0_80] : memref<8x16x128xbf16, #tpu.memory_space<vmem>>, vector<1x16x128xbf16>
    %304 = vector.shape_cast %303 : vector<1x16x128xbf16> to vector<16x128xbf16>
    %305 = vector.shape_cast %302 : vector<16x128xbf16> to vector<1x16x128xbf16>
    tpu.vector_store %arg7[%c7_78, %c0_79, %c0_80], %305 {strides = array<i32>} : memref<8x16x128xbf16, #tpu.memory_space<vmem>>, vector<1x16x128xbf16>,
    %c0_81 = arith.constant 0 : index
    %c0_82 = arith.constant 0 : index
    %306 = vector.load %arg10[%c0_81, %c0_82] : memref<16x128xf32, #tpu.memory_space<vmem>>, vector<16x128xf32>
    tpu.vector_store %arg10[%c0_81, %c0_82], %301 {strides = array<i32>} : memref<16x128xf32, #tpu.memory_space<vmem>>, vector<16x128xf32>,
    %c1_i32 = arith.constant 1 : i32
    %307 = arith.cmpi eq, %arg1, %c1_i32 : i32
    %308 = arith.extui %307 : i1 to i32
    %c0_i32_83 = arith.constant 0 : i32
    %309 = arith.cmpi ne, %308, %c0_i32_83 : i32
    scf.if %309 {
      %c0_84 = arith.constant 0 : index
      %c0_85 = arith.constant 0 : index
      %310 = vector.load %arg8[%c0_84, %c0_85] : memref<16x128xf32, #tpu.memory_space<vmem>>, vector<16x128xf32>
      tpu.vector_store %arg8[%c0_84, %c0_85], %301 {strides = array<i32>} : memref<16x128xf32, #tpu.memory_space<vmem>>, vector<16x128xf32>,
    } else {
    }
    return
  }
  func.func @transform_0(%arg0: i32, %arg1: i32) -> (i32, i32, i32) {
    %c0_i32 = arith.constant 0 : i32
    %c0_i32_0 = arith.constant 0 : i32
    return %arg1, %arg0, %c0_i32 : i32, i32, i32
  }
  func.func @transform_1(%arg0: i32, %arg1: i32) -> (i32, i32) {
    %c0_i32 = arith.constant 0 : i32
    %c0_i32_0 = arith.constant 0 : i32
    %c0_i32_1 = arith.constant 0 : i32
    return %c0_i32, %c0_i32_0 : i32, i32
  }
  func.func @transform_2(%arg0: i32, %arg1: i32) -> (i32, i32) {
    %c0_i32 = arith.constant 0 : i32
    %c0_i32_0 = arith.constant 0 : i32
    %c0_i32_1 = arith.constant 0 : i32
    return %c0_i32, %c0_i32_0 : i32, i32
  }
  func.func @transform_3(%arg0: i32, %arg1: i32) -> (i32, i32) {
    %c0_i32 = arith.constant 0 : i32
    %c0_i32_0 = arith.constant 0 : i32
    %c0_i32_1 = arith.constant 0 : i32
    return %c0_i32, %c0_i32_0 : i32, i32
  }
  func.func @transform_4(%arg0: i32, %arg1: i32) -> (i32, i32) {
    %c0_i32 = arith.constant 0 : i32
    %c0_i32_0 = arith.constant 0 : i32
    %c0_i32_1 = arith.constant 0 : i32
    return %c0_i32, %c0_i32_0 : i32, i32
  }
  func.func @transform_5(%arg0: i32, %arg1: i32) -> (i32, i32, i32) {
    %c0_i32 = arith.constant 0 : i32
    %c0_i32_0 = arith.constant 0 : i32
    return %arg1, %arg0, %c0_i32 : i32, i32, i32
  }
  func.func @transform_6(%arg0: i32, %arg1: i32) -> (i32, i32) {
    %c0_i32 = arith.constant 0 : i32
    %c0_i32_0 = arith.constant 0 : i32
    return %arg0, %c0_i32 : i32, i32
  }
}

module attributes {stable_mosaic.version = 11 : i64} {
  func.func @gru_block_kernel(%arg0: i32, %arg1: i32, %arg2: memref<8x16x128xbf16, #tpu.memory_space<vmem>>, %arg3: memref<128x384xbf16, #tpu.memory_space<vmem>>, %arg4: memref<128x384xbf16, #tpu.memory_space<vmem>>, %arg5: memref<1x384xf32, #tpu.memory_space<vmem>>, %arg6: memref<1x384xf32, #tpu.memory_space<vmem>>, %arg7: memref<8x16x128xf32, #tpu.memory_space<vmem>>, %arg8: memref<16x128xf32, #tpu.memory_space<vmem>>, %arg9: memref<8x16x384xbf16, #tpu.memory_space<vmem>>, %arg10: memref<16x128xf32, #tpu.memory_space<vmem>>) attributes {dimension_semantics = [#tpu.dimension_semantics<parallel>, #tpu.dimension_semantics<arbitrary>], iteration_bounds = array<i64: 1, 2>, scalar_prefetch = 0 : i64, scratch_operands = 2 : i64, tpu.core_type = #tpu.core_type<tc>, window_params = [{transform_indices = @transform_0, window_bounds = array<i64: 8, 16, 128>}, {pipeline_mode = #tpu.pipeline_mode<synchronous>, transform_indices = @transform_1, window_bounds = array<i64: 128, 384>}, {pipeline_mode = #tpu.pipeline_mode<synchronous>, transform_indices = @transform_2, window_bounds = array<i64: 128, 384>}, {pipeline_mode = #tpu.pipeline_mode<synchronous>, transform_indices = @transform_3, window_bounds = array<i64: 1, 384>}, {pipeline_mode = #tpu.pipeline_mode<synchronous>, transform_indices = @transform_4, window_bounds = array<i64: 1, 384>}, {transform_indices = @transform_5, window_bounds = array<i64: 8, 16, 128>}, {transform_indices = @transform_6, window_bounds = array<i64: 16, 128>}]} {
    %c0_i32 = arith.constant 0 : i32
    %0 = arith.cmpi eq, %arg1, %c0_i32 : i32
    %1 = arith.extui %0 : i1 to i32
    %c0_i32_0 = arith.constant 0 : i32
    %2 = arith.cmpi ne, %1, %c0_i32_0 : i32
    scf.if %2 {
      %cst_84 = arith.constant 0.000000e+00 : f32
      %302 = vector.broadcast %cst_84 : f32 to vector<16x128xf32>
      %c0_85 = arith.constant 0 : index
      %c0_86 = arith.constant 0 : index
      %303 = vector.load %arg10[%c0_85, %c0_86] : memref<16x128xf32, #tpu.memory_space<vmem>>, vector<16x128xf32>
      tpu.vector_store %arg10[%c0_85, %c0_86], %302 {strides = array<i32>} : memref<16x128xf32, #tpu.memory_space<vmem>>, vector<16x128xf32>,
    } else {
    }
    %c0 = arith.constant 0 : index
    %c0_1 = arith.constant 0 : index
    %c0_2 = arith.constant 0 : index
    %3 = vector.load %arg2[%c0, %c0_1, %c0_2] : memref<8x16x128xbf16, #tpu.memory_space<vmem>>, vector<8x16x128xbf16>
    %4 = vector.shape_cast %3 : vector<8x16x128xbf16> to vector<128x128xbf16>
    %c0_3 = arith.constant 0 : index
    %c0_4 = arith.constant 0 : index
    %5 = vector.load %arg3[%c0_3, %c0_4] : memref<128x384xbf16, #tpu.memory_space<vmem>>, vector<128x384xbf16>
    %cst = arith.constant dense<0.000000e+00> : vector<128x384xf32>
    %6 = tpu.matmul %4, %5, %cst {dimension_numbers = #tpu.dot_dimension_numbers<[1], [0], [0], [1], [0, 0, 1, 1], [], []>} : vector<128x128xbf16>, vector<128x384xbf16>, vector<128x384xf32> -> vector<128x384xf32>
    %c0_5 = arith.constant 0 : index
    %c0_6 = arith.constant 0 : index
    %7 = vector.load %arg5[%c0_5, %c0_6] : memref<1x384xf32, #tpu.memory_space<vmem>>, vector<1x384xf32>
    %8 = vector.broadcast %7 : vector<1x384xf32> to vector<128x384xf32>
    %9 = arith.addf %6, %8 : vector<128x384xf32>
    %10 = vector.shape_cast %9 : vector<128x384xf32> to vector<8x16x384xf32>
    %11 = arith.truncf %10 : vector<8x16x384xf32> to vector<8x16x384xbf16>
    %c0_7 = arith.constant 0 : index
    %c0_8 = arith.constant 0 : index
    %c0_9 = arith.constant 0 : index
    %12 = vector.load %arg9[%c0_7, %c0_8, %c0_9] : memref<8x16x384xbf16, #tpu.memory_space<vmem>>, vector<8x16x384xbf16>
    tpu.vector_store %arg9[%c0_7, %c0_8, %c0_9], %11 {strides = array<i32>} : memref<8x16x384xbf16, #tpu.memory_space<vmem>>, vector<8x16x384xbf16>,
    %c0_10 = arith.constant 0 : index
    %c0_11 = arith.constant 0 : index
    %13 = vector.load %arg6[%c0_10, %c0_11] : memref<1x384xf32, #tpu.memory_space<vmem>>, vector<1x384xf32>
    %14 = vector.shape_cast %13 : vector<1x384xf32> to vector<1x384xf32>
    %15 = vector.broadcast %14 : vector<1x384xf32> to vector<16x384xf32>
    %c0_12 = arith.constant 0 : index
    %c0_13 = arith.constant 0 : index
    %16 = vector.load %arg4[%c0_12, %c0_13] : memref<128x384xbf16, #tpu.memory_space<vmem>>, vector<128x384xbf16>
    %c0_14 = arith.constant 0 : index
    %c0_15 = arith.constant 0 : index
    %17 = vector.load %arg10[%c0_14, %c0_15] : memref<16x128xf32, #tpu.memory_space<vmem>>, vector<16x128xf32>
    %c0_16 = arith.constant 0 : index
    %c0_17 = arith.constant 0 : index
    %c0_18 = arith.constant 0 : index
    %18 = vector.load %arg9[%c0_16, %c0_17, %c0_18] : memref<8x16x384xbf16, #tpu.memory_space<vmem>>, vector<1x16x384xbf16>
    %19 = vector.shape_cast %18 : vector<1x16x384xbf16> to vector<16x384xbf16>
    %20 = arith.truncf %17 : vector<16x128xf32> to vector<16x128xbf16>
    %cst_19 = arith.constant dense<0.000000e+00> : vector<16x384xf32>
    %21 = tpu.matmul %20, %16, %cst_19 {dimension_numbers = #tpu.dot_dimension_numbers<[1], [0], [0], [1], [0, 0, 1, 1], [], []>} : vector<16x128xbf16>, vector<128x384xbf16>, vector<16x384xf32> -> vector<16x384xf32>
    %22 = arith.addf %21, %15 : vector<16x384xf32>
    %23 = vector.extract_strided_slice %19 {offsets = [0, 0], sizes = [16, 128], strides = [1, 1]} : vector<16x384xbf16> to vector<16x128xbf16>
    %24 = vector.extract_strided_slice %22 {offsets = [0, 0], sizes = [16, 128], strides = [1, 1]} : vector<16x384xf32> to vector<16x128xf32>
    %25 = arith.extf %23 : vector<16x128xbf16> to vector<16x128xf32>
    %26 = arith.addf %25, %24 : vector<16x128xf32>
    %27 = arith.negf %26 : vector<16x128xf32>
    %28 = math.exp %27 : vector<16x128xf32>
    %cst_20 = arith.constant 1.000000e+00 : f32
    %29 = vector.broadcast %cst_20 : f32 to vector<16x128xf32>
    %30 = arith.addf %29, %28 : vector<16x128xf32>
    %31 = arith.divf %29, %30 : vector<16x128xf32>
    %32 = vector.extract_strided_slice %19 {offsets = [0, 128], sizes = [16, 128], strides = [1, 1]} : vector<16x384xbf16> to vector<16x128xbf16>
    %33 = vector.extract_strided_slice %22 {offsets = [0, 128], sizes = [16, 128], strides = [1, 1]} : vector<16x384xf32> to vector<16x128xf32>
    %34 = arith.extf %32 : vector<16x128xbf16> to vector<16x128xf32>
    %35 = arith.addf %34, %33 : vector<16x128xf32>
    %36 = arith.negf %35 : vector<16x128xf32>
    %37 = math.exp %36 : vector<16x128xf32>
    %cst_21 = arith.constant 1.000000e+00 : f32
    %38 = vector.broadcast %cst_21 : f32 to vector<16x128xf32>
    %39 = arith.addf %38, %37 : vector<16x128xf32>
    %40 = arith.divf %38, %39 : vector<16x128xf32>
    %41 = vector.extract_strided_slice %19 {offsets = [0, 256], sizes = [16, 128], strides = [1, 1]} : vector<16x384xbf16> to vector<16x128xbf16>
    %42 = vector.extract_strided_slice %22 {offsets = [0, 256], sizes = [16, 128], strides = [1, 1]} : vector<16x384xf32> to vector<16x128xf32>
    %43 = arith.mulf %31, %42 : vector<16x128xf32>
    %44 = arith.extf %41 : vector<16x128xbf16> to vector<16x128xf32>
    %45 = arith.addf %44, %43 : vector<16x128xf32>
    %46 = math.tanh %45 : vector<16x128xf32>
    %47 = arith.subf %17, %46 : vector<16x128xf32>
    %48 = arith.mulf %40, %47 : vector<16x128xf32>
    %49 = arith.addf %46, %48 : vector<16x128xf32>
    %c0_22 = arith.constant 0 : index
    %c0_23 = arith.constant 0 : index
    %c0_24 = arith.constant 0 : index
    %50 = vector.load %arg7[%c0_22, %c0_23, %c0_24] : memref<8x16x128xf32, #tpu.memory_space<vmem>>, vector<1x16x128xf32>
    %51 = vector.shape_cast %50 : vector<1x16x128xf32> to vector<16x128xf32>
    %52 = vector.shape_cast %49 : vector<16x128xf32> to vector<1x16x128xf32>
    tpu.vector_store %arg7[%c0_22, %c0_23, %c0_24], %52 {strides = array<i32>} : memref<8x16x128xf32, #tpu.memory_space<vmem>>, vector<1x16x128xf32>,
    %c1 = arith.constant 1 : index
    %c0_25 = arith.constant 0 : index
    %c0_26 = arith.constant 0 : index
    %53 = vector.load %arg9[%c1, %c0_25, %c0_26] : memref<8x16x384xbf16, #tpu.memory_space<vmem>>, vector<1x16x384xbf16>
    %54 = vector.shape_cast %53 : vector<1x16x384xbf16> to vector<16x384xbf16>
    %55 = arith.truncf %49 : vector<16x128xf32> to vector<16x128xbf16>
    %cst_27 = arith.constant dense<0.000000e+00> : vector<16x384xf32>
    %56 = tpu.matmul %55, %16, %cst_27 {dimension_numbers = #tpu.dot_dimension_numbers<[1], [0], [0], [1], [0, 0, 1, 1], [], []>} : vector<16x128xbf16>, vector<128x384xbf16>, vector<16x384xf32> -> vector<16x384xf32>
    %57 = arith.addf %56, %15 : vector<16x384xf32>
    %58 = vector.extract_strided_slice %54 {offsets = [0, 0], sizes = [16, 128], strides = [1, 1]} : vector<16x384xbf16> to vector<16x128xbf16>
    %59 = vector.extract_strided_slice %57 {offsets = [0, 0], sizes = [16, 128], strides = [1, 1]} : vector<16x384xf32> to vector<16x128xf32>
    %60 = arith.extf %58 : vector<16x128xbf16> to vector<16x128xf32>
    %61 = arith.addf %60, %59 : vector<16x128xf32>
    %62 = arith.negf %61 : vector<16x128xf32>
    %63 = math.exp %62 : vector<16x128xf32>
    %cst_28 = arith.constant 1.000000e+00 : f32
    %64 = vector.broadcast %cst_28 : f32 to vector<16x128xf32>
    %65 = arith.addf %64, %63 : vector<16x128xf32>
    %66 = arith.divf %64, %65 : vector<16x128xf32>
    %67 = vector.extract_strided_slice %54 {offsets = [0, 128], sizes = [16, 128], strides = [1, 1]} : vector<16x384xbf16> to vector<16x128xbf16>
    %68 = vector.extract_strided_slice %57 {offsets = [0, 128], sizes = [16, 128], strides = [1, 1]} : vector<16x384xf32> to vector<16x128xf32>
    %69 = arith.extf %67 : vector<16x128xbf16> to vector<16x128xf32>
    %70 = arith.addf %69, %68 : vector<16x128xf32>
    %71 = arith.negf %70 : vector<16x128xf32>
    %72 = math.exp %71 : vector<16x128xf32>
    %cst_29 = arith.constant 1.000000e+00 : f32
    %73 = vector.broadcast %cst_29 : f32 to vector<16x128xf32>
    %74 = arith.addf %73, %72 : vector<16x128xf32>
    %75 = arith.divf %73, %74 : vector<16x128xf32>
    %76 = vector.extract_strided_slice %54 {offsets = [0, 256], sizes = [16, 128], strides = [1, 1]} : vector<16x384xbf16> to vector<16x128xbf16>
    %77 = vector.extract_strided_slice %57 {offsets = [0, 256], sizes = [16, 128], strides = [1, 1]} : vector<16x384xf32> to vector<16x128xf32>
    %78 = arith.mulf %66, %77 : vector<16x128xf32>
    %79 = arith.extf %76 : vector<16x128xbf16> to vector<16x128xf32>
    %80 = arith.addf %79, %78 : vector<16x128xf32>
    %81 = math.tanh %80 : vector<16x128xf32>
    %82 = arith.subf %49, %81 : vector<16x128xf32>
    %83 = arith.mulf %75, %82 : vector<16x128xf32>
    %84 = arith.addf %81, %83 : vector<16x128xf32>
    %c1_30 = arith.constant 1 : index
    %c0_31 = arith.constant 0 : index
    %c0_32 = arith.constant 0 : index
    %85 = vector.load %arg7[%c1_30, %c0_31, %c0_32] : memref<8x16x128xf32, #tpu.memory_space<vmem>>, vector<1x16x128xf32>
    %86 = vector.shape_cast %85 : vector<1x16x128xf32> to vector<16x128xf32>
    %87 = vector.shape_cast %84 : vector<16x128xf32> to vector<1x16x128xf32>
    tpu.vector_store %arg7[%c1_30, %c0_31, %c0_32], %87 {strides = array<i32>} : memref<8x16x128xf32, #tpu.memory_space<vmem>>, vector<1x16x128xf32>,
    %c2 = arith.constant 2 : index
    %c0_33 = arith.constant 0 : index
    %c0_34 = arith.constant 0 : index
    %88 = vector.load %arg9[%c2, %c0_33, %c0_34] : memref<8x16x384xbf16, #tpu.memory_space<vmem>>, vector<1x16x384xbf16>
    %89 = vector.shape_cast %88 : vector<1x16x384xbf16> to vector<16x384xbf16>
    %90 = arith.truncf %84 : vector<16x128xf32> to vector<16x128xbf16>
    %cst_35 = arith.constant dense<0.000000e+00> : vector<16x384xf32>
    %91 = tpu.matmul %90, %16, %cst_35 {dimension_numbers = #tpu.dot_dimension_numbers<[1], [0], [0], [1], [0, 0, 1, 1], [], []>} : vector<16x128xbf16>, vector<128x384xbf16>, vector<16x384xf32> -> vector<16x384xf32>
    %92 = arith.addf %91, %15 : vector<16x384xf32>
    %93 = vector.extract_strided_slice %89 {offsets = [0, 0], sizes = [16, 128], strides = [1, 1]} : vector<16x384xbf16> to vector<16x128xbf16>
    %94 = vector.extract_strided_slice %92 {offsets = [0, 0], sizes = [16, 128], strides = [1, 1]} : vector<16x384xf32> to vector<16x128xf32>
    %95 = arith.extf %93 : vector<16x128xbf16> to vector<16x128xf32>
    %96 = arith.addf %95, %94 : vector<16x128xf32>
    %97 = arith.negf %96 : vector<16x128xf32>
    %98 = math.exp %97 : vector<16x128xf32>
    %cst_36 = arith.constant 1.000000e+00 : f32
    %99 = vector.broadcast %cst_36 : f32 to vector<16x128xf32>
    %100 = arith.addf %99, %98 : vector<16x128xf32>
    %101 = arith.divf %99, %100 : vector<16x128xf32>
    %102 = vector.extract_strided_slice %89 {offsets = [0, 128], sizes = [16, 128], strides = [1, 1]} : vector<16x384xbf16> to vector<16x128xbf16>
    %103 = vector.extract_strided_slice %92 {offsets = [0, 128], sizes = [16, 128], strides = [1, 1]} : vector<16x384xf32> to vector<16x128xf32>
    %104 = arith.extf %102 : vector<16x128xbf16> to vector<16x128xf32>
    %105 = arith.addf %104, %103 : vector<16x128xf32>
    %106 = arith.negf %105 : vector<16x128xf32>
    %107 = math.exp %106 : vector<16x128xf32>
    %cst_37 = arith.constant 1.000000e+00 : f32
    %108 = vector.broadcast %cst_37 : f32 to vector<16x128xf32>
    %109 = arith.addf %108, %107 : vector<16x128xf32>
    %110 = arith.divf %108, %109 : vector<16x128xf32>
    %111 = vector.extract_strided_slice %89 {offsets = [0, 256], sizes = [16, 128], strides = [1, 1]} : vector<16x384xbf16> to vector<16x128xbf16>
    %112 = vector.extract_strided_slice %92 {offsets = [0, 256], sizes = [16, 128], strides = [1, 1]} : vector<16x384xf32> to vector<16x128xf32>
    %113 = arith.mulf %101, %112 : vector<16x128xf32>
    %114 = arith.extf %111 : vector<16x128xbf16> to vector<16x128xf32>
    %115 = arith.addf %114, %113 : vector<16x128xf32>
    %116 = math.tanh %115 : vector<16x128xf32>
    %117 = arith.subf %84, %116 : vector<16x128xf32>
    %118 = arith.mulf %110, %117 : vector<16x128xf32>
    %119 = arith.addf %116, %118 : vector<16x128xf32>
    %c2_38 = arith.constant 2 : index
    %c0_39 = arith.constant 0 : index
    %c0_40 = arith.constant 0 : index
    %120 = vector.load %arg7[%c2_38, %c0_39, %c0_40] : memref<8x16x128xf32, #tpu.memory_space<vmem>>, vector<1x16x128xf32>
    %121 = vector.shape_cast %120 : vector<1x16x128xf32> to vector<16x128xf32>
    %122 = vector.shape_cast %119 : vector<16x128xf32> to vector<1x16x128xf32>
    tpu.vector_store %arg7[%c2_38, %c0_39, %c0_40], %122 {strides = array<i32>} : memref<8x16x128xf32, #tpu.memory_space<vmem>>, vector<1x16x128xf32>,
    %c3 = arith.constant 3 : index
    %c0_41 = arith.constant 0 : index
    %c0_42 = arith.constant 0 : index
    %123 = vector.load %arg9[%c3, %c0_41, %c0_42] : memref<8x16x384xbf16, #tpu.memory_space<vmem>>, vector<1x16x384xbf16>
    %124 = vector.shape_cast %123 : vector<1x16x384xbf16> to vector<16x384xbf16>
    %125 = arith.truncf %119 : vector<16x128xf32> to vector<16x128xbf16>
    %cst_43 = arith.constant dense<0.000000e+00> : vector<16x384xf32>
    %126 = tpu.matmul %125, %16, %cst_43 {dimension_numbers = #tpu.dot_dimension_numbers<[1], [0], [0], [1], [0, 0, 1, 1], [], []>} : vector<16x128xbf16>, vector<128x384xbf16>, vector<16x384xf32> -> vector<16x384xf32>
    %127 = arith.addf %126, %15 : vector<16x384xf32>
    %128 = vector.extract_strided_slice %124 {offsets = [0, 0], sizes = [16, 128], strides = [1, 1]} : vector<16x384xbf16> to vector<16x128xbf16>
    %129 = vector.extract_strided_slice %127 {offsets = [0, 0], sizes = [16, 128], strides = [1, 1]} : vector<16x384xf32> to vector<16x128xf32>
    %130 = arith.extf %128 : vector<16x128xbf16> to vector<16x128xf32>
    %131 = arith.addf %130, %129 : vector<16x128xf32>
    %132 = arith.negf %131 : vector<16x128xf32>
    %133 = math.exp %132 : vector<16x128xf32>
    %cst_44 = arith.constant 1.000000e+00 : f32
    %134 = vector.broadcast %cst_44 : f32 to vector<16x128xf32>
    %135 = arith.addf %134, %133 : vector<16x128xf32>
    %136 = arith.divf %134, %135 : vector<16x128xf32>
    %137 = vector.extract_strided_slice %124 {offsets = [0, 128], sizes = [16, 128], strides = [1, 1]} : vector<16x384xbf16> to vector<16x128xbf16>
    %138 = vector.extract_strided_slice %127 {offsets = [0, 128], sizes = [16, 128], strides = [1, 1]} : vector<16x384xf32> to vector<16x128xf32>
    %139 = arith.extf %137 : vector<16x128xbf16> to vector<16x128xf32>
    %140 = arith.addf %139, %138 : vector<16x128xf32>
    %141 = arith.negf %140 : vector<16x128xf32>
    %142 = math.exp %141 : vector<16x128xf32>
    %cst_45 = arith.constant 1.000000e+00 : f32
    %143 = vector.broadcast %cst_45 : f32 to vector<16x128xf32>
    %144 = arith.addf %143, %142 : vector<16x128xf32>
    %145 = arith.divf %143, %144 : vector<16x128xf32>
    %146 = vector.extract_strided_slice %124 {offsets = [0, 256], sizes = [16, 128], strides = [1, 1]} : vector<16x384xbf16> to vector<16x128xbf16>
    %147 = vector.extract_strided_slice %127 {offsets = [0, 256], sizes = [16, 128], strides = [1, 1]} : vector<16x384xf32> to vector<16x128xf32>
    %148 = arith.mulf %136, %147 : vector<16x128xf32>
    %149 = arith.extf %146 : vector<16x128xbf16> to vector<16x128xf32>
    %150 = arith.addf %149, %148 : vector<16x128xf32>
    %151 = math.tanh %150 : vector<16x128xf32>
    %152 = arith.subf %119, %151 : vector<16x128xf32>
    %153 = arith.mulf %145, %152 : vector<16x128xf32>
    %154 = arith.addf %151, %153 : vector<16x128xf32>
    %c3_46 = arith.constant 3 : index
    %c0_47 = arith.constant 0 : index
    %c0_48 = arith.constant 0 : index
    %155 = vector.load %arg7[%c3_46, %c0_47, %c0_48] : memref<8x16x128xf32, #tpu.memory_space<vmem>>, vector<1x16x128xf32>
    %156 = vector.shape_cast %155 : vector<1x16x128xf32> to vector<16x128xf32>
    %157 = vector.shape_cast %154 : vector<16x128xf32> to vector<1x16x128xf32>
    tpu.vector_store %arg7[%c3_46, %c0_47, %c0_48], %157 {strides = array<i32>} : memref<8x16x128xf32, #tpu.memory_space<vmem>>, vector<1x16x128xf32>,
    %c4 = arith.constant 4 : index
    %c0_49 = arith.constant 0 : index
    %c0_50 = arith.constant 0 : index
    %158 = vector.load %arg9[%c4, %c0_49, %c0_50] : memref<8x16x384xbf16, #tpu.memory_space<vmem>>, vector<1x16x384xbf16>
    %159 = vector.shape_cast %158 : vector<1x16x384xbf16> to vector<16x384xbf16>
    %160 = arith.truncf %154 : vector<16x128xf32> to vector<16x128xbf16>
    %cst_51 = arith.constant dense<0.000000e+00> : vector<16x384xf32>
    %161 = tpu.matmul %160, %16, %cst_51 {dimension_numbers = #tpu.dot_dimension_numbers<[1], [0], [0], [1], [0, 0, 1, 1], [], []>} : vector<16x128xbf16>, vector<128x384xbf16>, vector<16x384xf32> -> vector<16x384xf32>
    %162 = arith.addf %161, %15 : vector<16x384xf32>
    %163 = vector.extract_strided_slice %159 {offsets = [0, 0], sizes = [16, 128], strides = [1, 1]} : vector<16x384xbf16> to vector<16x128xbf16>
    %164 = vector.extract_strided_slice %162 {offsets = [0, 0], sizes = [16, 128], strides = [1, 1]} : vector<16x384xf32> to vector<16x128xf32>
    %165 = arith.extf %163 : vector<16x128xbf16> to vector<16x128xf32>
    %166 = arith.addf %165, %164 : vector<16x128xf32>
    %167 = arith.negf %166 : vector<16x128xf32>
    %168 = math.exp %167 : vector<16x128xf32>
    %cst_52 = arith.constant 1.000000e+00 : f32
    %169 = vector.broadcast %cst_52 : f32 to vector<16x128xf32>
    %170 = arith.addf %169, %168 : vector<16x128xf32>
    %171 = arith.divf %169, %170 : vector<16x128xf32>
    %172 = vector.extract_strided_slice %159 {offsets = [0, 128], sizes = [16, 128], strides = [1, 1]} : vector<16x384xbf16> to vector<16x128xbf16>
    %173 = vector.extract_strided_slice %162 {offsets = [0, 128], sizes = [16, 128], strides = [1, 1]} : vector<16x384xf32> to vector<16x128xf32>
    %174 = arith.extf %172 : vector<16x128xbf16> to vector<16x128xf32>
    %175 = arith.addf %174, %173 : vector<16x128xf32>
    %176 = arith.negf %175 : vector<16x128xf32>
    %177 = math.exp %176 : vector<16x128xf32>
    %cst_53 = arith.constant 1.000000e+00 : f32
    %178 = vector.broadcast %cst_53 : f32 to vector<16x128xf32>
    %179 = arith.addf %178, %177 : vector<16x128xf32>
    %180 = arith.divf %178, %179 : vector<16x128xf32>
    %181 = vector.extract_strided_slice %159 {offsets = [0, 256], sizes = [16, 128], strides = [1, 1]} : vector<16x384xbf16> to vector<16x128xbf16>
    %182 = vector.extract_strided_slice %162 {offsets = [0, 256], sizes = [16, 128], strides = [1, 1]} : vector<16x384xf32> to vector<16x128xf32>
    %183 = arith.mulf %171, %182 : vector<16x128xf32>
    %184 = arith.extf %181 : vector<16x128xbf16> to vector<16x128xf32>
    %185 = arith.addf %184, %183 : vector<16x128xf32>
    %186 = math.tanh %185 : vector<16x128xf32>
    %187 = arith.subf %154, %186 : vector<16x128xf32>
    %188 = arith.mulf %180, %187 : vector<16x128xf32>
    %189 = arith.addf %186, %188 : vector<16x128xf32>
    %c4_54 = arith.constant 4 : index
    %c0_55 = arith.constant 0 : index
    %c0_56 = arith.constant 0 : index
    %190 = vector.load %arg7[%c4_54, %c0_55, %c0_56] : memref<8x16x128xf32, #tpu.memory_space<vmem>>, vector<1x16x128xf32>
    %191 = vector.shape_cast %190 : vector<1x16x128xf32> to vector<16x128xf32>
    %192 = vector.shape_cast %189 : vector<16x128xf32> to vector<1x16x128xf32>
    tpu.vector_store %arg7[%c4_54, %c0_55, %c0_56], %192 {strides = array<i32>} : memref<8x16x128xf32, #tpu.memory_space<vmem>>, vector<1x16x128xf32>,
    %c5 = arith.constant 5 : index
    %c0_57 = arith.constant 0 : index
    %c0_58 = arith.constant 0 : index
    %193 = vector.load %arg9[%c5, %c0_57, %c0_58] : memref<8x16x384xbf16, #tpu.memory_space<vmem>>, vector<1x16x384xbf16>
    %194 = vector.shape_cast %193 : vector<1x16x384xbf16> to vector<16x384xbf16>
    %195 = arith.truncf %189 : vector<16x128xf32> to vector<16x128xbf16>
    %cst_59 = arith.constant dense<0.000000e+00> : vector<16x384xf32>
    %196 = tpu.matmul %195, %16, %cst_59 {dimension_numbers = #tpu.dot_dimension_numbers<[1], [0], [0], [1], [0, 0, 1, 1], [], []>} : vector<16x128xbf16>, vector<128x384xbf16>, vector<16x384xf32> -> vector<16x384xf32>
    %197 = arith.addf %196, %15 : vector<16x384xf32>
    %198 = vector.extract_strided_slice %194 {offsets = [0, 0], sizes = [16, 128], strides = [1, 1]} : vector<16x384xbf16> to vector<16x128xbf16>
    %199 = vector.extract_strided_slice %197 {offsets = [0, 0], sizes = [16, 128], strides = [1, 1]} : vector<16x384xf32> to vector<16x128xf32>
    %200 = arith.extf %198 : vector<16x128xbf16> to vector<16x128xf32>
    %201 = arith.addf %200, %199 : vector<16x128xf32>
    %202 = arith.negf %201 : vector<16x128xf32>
    %203 = math.exp %202 : vector<16x128xf32>
    %cst_60 = arith.constant 1.000000e+00 : f32
    %204 = vector.broadcast %cst_60 : f32 to vector<16x128xf32>
    %205 = arith.addf %204, %203 : vector<16x128xf32>
    %206 = arith.divf %204, %205 : vector<16x128xf32>
    %207 = vector.extract_strided_slice %194 {offsets = [0, 128], sizes = [16, 128], strides = [1, 1]} : vector<16x384xbf16> to vector<16x128xbf16>
    %208 = vector.extract_strided_slice %197 {offsets = [0, 128], sizes = [16, 128], strides = [1, 1]} : vector<16x384xf32> to vector<16x128xf32>
    %209 = arith.extf %207 : vector<16x128xbf16> to vector<16x128xf32>
    %210 = arith.addf %209, %208 : vector<16x128xf32>
    %211 = arith.negf %210 : vector<16x128xf32>
    %212 = math.exp %211 : vector<16x128xf32>
    %cst_61 = arith.constant 1.000000e+00 : f32
    %213 = vector.broadcast %cst_61 : f32 to vector<16x128xf32>
    %214 = arith.addf %213, %212 : vector<16x128xf32>
    %215 = arith.divf %213, %214 : vector<16x128xf32>
    %216 = vector.extract_strided_slice %194 {offsets = [0, 256], sizes = [16, 128], strides = [1, 1]} : vector<16x384xbf16> to vector<16x128xbf16>
    %217 = vector.extract_strided_slice %197 {offsets = [0, 256], sizes = [16, 128], strides = [1, 1]} : vector<16x384xf32> to vector<16x128xf32>
    %218 = arith.mulf %206, %217 : vector<16x128xf32>
    %219 = arith.extf %216 : vector<16x128xbf16> to vector<16x128xf32>
    %220 = arith.addf %219, %218 : vector<16x128xf32>
    %221 = math.tanh %220 : vector<16x128xf32>
    %222 = arith.subf %189, %221 : vector<16x128xf32>
    %223 = arith.mulf %215, %222 : vector<16x128xf32>
    %224 = arith.addf %221, %223 : vector<16x128xf32>
    %c5_62 = arith.constant 5 : index
    %c0_63 = arith.constant 0 : index
    %c0_64 = arith.constant 0 : index
    %225 = vector.load %arg7[%c5_62, %c0_63, %c0_64] : memref<8x16x128xf32, #tpu.memory_space<vmem>>, vector<1x16x128xf32>
    %226 = vector.shape_cast %225 : vector<1x16x128xf32> to vector<16x128xf32>
    %227 = vector.shape_cast %224 : vector<16x128xf32> to vector<1x16x128xf32>
    tpu.vector_store %arg7[%c5_62, %c0_63, %c0_64], %227 {strides = array<i32>} : memref<8x16x128xf32, #tpu.memory_space<vmem>>, vector<1x16x128xf32>,
    %c6 = arith.constant 6 : index
    %c0_65 = arith.constant 0 : index
    %c0_66 = arith.constant 0 : index
    %228 = vector.load %arg9[%c6, %c0_65, %c0_66] : memref<8x16x384xbf16, #tpu.memory_space<vmem>>, vector<1x16x384xbf16>
    %229 = vector.shape_cast %228 : vector<1x16x384xbf16> to vector<16x384xbf16>
    %230 = arith.truncf %224 : vector<16x128xf32> to vector<16x128xbf16>
    %cst_67 = arith.constant dense<0.000000e+00> : vector<16x384xf32>
    %231 = tpu.matmul %230, %16, %cst_67 {dimension_numbers = #tpu.dot_dimension_numbers<[1], [0], [0], [1], [0, 0, 1, 1], [], []>} : vector<16x128xbf16>, vector<128x384xbf16>, vector<16x384xf32> -> vector<16x384xf32>
    %232 = arith.addf %231, %15 : vector<16x384xf32>
    %233 = vector.extract_strided_slice %229 {offsets = [0, 0], sizes = [16, 128], strides = [1, 1]} : vector<16x384xbf16> to vector<16x128xbf16>
    %234 = vector.extract_strided_slice %232 {offsets = [0, 0], sizes = [16, 128], strides = [1, 1]} : vector<16x384xf32> to vector<16x128xf32>
    %235 = arith.extf %233 : vector<16x128xbf16> to vector<16x128xf32>
    %236 = arith.addf %235, %234 : vector<16x128xf32>
    %237 = arith.negf %236 : vector<16x128xf32>
    %238 = math.exp %237 : vector<16x128xf32>
    %cst_68 = arith.constant 1.000000e+00 : f32
    %239 = vector.broadcast %cst_68 : f32 to vector<16x128xf32>
    %240 = arith.addf %239, %238 : vector<16x128xf32>
    %241 = arith.divf %239, %240 : vector<16x128xf32>
    %242 = vector.extract_strided_slice %229 {offsets = [0, 128], sizes = [16, 128], strides = [1, 1]} : vector<16x384xbf16> to vector<16x128xbf16>
    %243 = vector.extract_strided_slice %232 {offsets = [0, 128], sizes = [16, 128], strides = [1, 1]} : vector<16x384xf32> to vector<16x128xf32>
    %244 = arith.extf %242 : vector<16x128xbf16> to vector<16x128xf32>
    %245 = arith.addf %244, %243 : vector<16x128xf32>
    %246 = arith.negf %245 : vector<16x128xf32>
    %247 = math.exp %246 : vector<16x128xf32>
    %cst_69 = arith.constant 1.000000e+00 : f32
    %248 = vector.broadcast %cst_69 : f32 to vector<16x128xf32>
    %249 = arith.addf %248, %247 : vector<16x128xf32>
    %250 = arith.divf %248, %249 : vector<16x128xf32>
    %251 = vector.extract_strided_slice %229 {offsets = [0, 256], sizes = [16, 128], strides = [1, 1]} : vector<16x384xbf16> to vector<16x128xbf16>
    %252 = vector.extract_strided_slice %232 {offsets = [0, 256], sizes = [16, 128], strides = [1, 1]} : vector<16x384xf32> to vector<16x128xf32>
    %253 = arith.mulf %241, %252 : vector<16x128xf32>
    %254 = arith.extf %251 : vector<16x128xbf16> to vector<16x128xf32>
    %255 = arith.addf %254, %253 : vector<16x128xf32>
    %256 = math.tanh %255 : vector<16x128xf32>
    %257 = arith.subf %224, %256 : vector<16x128xf32>
    %258 = arith.mulf %250, %257 : vector<16x128xf32>
    %259 = arith.addf %256, %258 : vector<16x128xf32>
    %c6_70 = arith.constant 6 : index
    %c0_71 = arith.constant 0 : index
    %c0_72 = arith.constant 0 : index
    %260 = vector.load %arg7[%c6_70, %c0_71, %c0_72] : memref<8x16x128xf32, #tpu.memory_space<vmem>>, vector<1x16x128xf32>
    %261 = vector.shape_cast %260 : vector<1x16x128xf32> to vector<16x128xf32>
    %262 = vector.shape_cast %259 : vector<16x128xf32> to vector<1x16x128xf32>
    tpu.vector_store %arg7[%c6_70, %c0_71, %c0_72], %262 {strides = array<i32>} : memref<8x16x128xf32, #tpu.memory_space<vmem>>, vector<1x16x128xf32>,
    %c7 = arith.constant 7 : index
    %c0_73 = arith.constant 0 : index
    %c0_74 = arith.constant 0 : index
    %263 = vector.load %arg9[%c7, %c0_73, %c0_74] : memref<8x16x384xbf16, #tpu.memory_space<vmem>>, vector<1x16x384xbf16>
    %264 = vector.shape_cast %263 : vector<1x16x384xbf16> to vector<16x384xbf16>
    %265 = arith.truncf %259 : vector<16x128xf32> to vector<16x128xbf16>
    %cst_75 = arith.constant dense<0.000000e+00> : vector<16x384xf32>
    %266 = tpu.matmul %265, %16, %cst_75 {dimension_numbers = #tpu.dot_dimension_numbers<[1], [0], [0], [1], [0, 0, 1, 1], [], []>} : vector<16x128xbf16>, vector<128x384xbf16>, vector<16x384xf32> -> vector<16x384xf32>
    %267 = arith.addf %266, %15 : vector<16x384xf32>
    %268 = vector.extract_strided_slice %264 {offsets = [0, 0], sizes = [16, 128], strides = [1, 1]} : vector<16x384xbf16> to vector<16x128xbf16>
    %269 = vector.extract_strided_slice %267 {offsets = [0, 0], sizes = [16, 128], strides = [1, 1]} : vector<16x384xf32> to vector<16x128xf32>
    %270 = arith.extf %268 : vector<16x128xbf16> to vector<16x128xf32>
    %271 = arith.addf %270, %269 : vector<16x128xf32>
    %272 = arith.negf %271 : vector<16x128xf32>
    %273 = math.exp %272 : vector<16x128xf32>
    %cst_76 = arith.constant 1.000000e+00 : f32
    %274 = vector.broadcast %cst_76 : f32 to vector<16x128xf32>
    %275 = arith.addf %274, %273 : vector<16x128xf32>
    %276 = arith.divf %274, %275 : vector<16x128xf32>
    %277 = vector.extract_strided_slice %264 {offsets = [0, 128], sizes = [16, 128], strides = [1, 1]} : vector<16x384xbf16> to vector<16x128xbf16>
    %278 = vector.extract_strided_slice %267 {offsets = [0, 128], sizes = [16, 128], strides = [1, 1]} : vector<16x384xf32> to vector<16x128xf32>
    %279 = arith.extf %277 : vector<16x128xbf16> to vector<16x128xf32>
    %280 = arith.addf %279, %278 : vector<16x128xf32>
    %281 = arith.negf %280 : vector<16x128xf32>
    %282 = math.exp %281 : vector<16x128xf32>
    %cst_77 = arith.constant 1.000000e+00 : f32
    %283 = vector.broadcast %cst_77 : f32 to vector<16x128xf32>
    %284 = arith.addf %283, %282 : vector<16x128xf32>
    %285 = arith.divf %283, %284 : vector<16x128xf32>
    %286 = vector.extract_strided_slice %264 {offsets = [0, 256], sizes = [16, 128], strides = [1, 1]} : vector<16x384xbf16> to vector<16x128xbf16>
    %287 = vector.extract_strided_slice %267 {offsets = [0, 256], sizes = [16, 128], strides = [1, 1]} : vector<16x384xf32> to vector<16x128xf32>
    %288 = arith.mulf %276, %287 : vector<16x128xf32>
    %289 = arith.extf %286 : vector<16x128xbf16> to vector<16x128xf32>
    %290 = arith.addf %289, %288 : vector<16x128xf32>
    %291 = math.tanh %290 : vector<16x128xf32>
    %292 = arith.subf %259, %291 : vector<16x128xf32>
    %293 = arith.mulf %285, %292 : vector<16x128xf32>
    %294 = arith.addf %291, %293 : vector<16x128xf32>
    %c7_78 = arith.constant 7 : index
    %c0_79 = arith.constant 0 : index
    %c0_80 = arith.constant 0 : index
    %295 = vector.load %arg7[%c7_78, %c0_79, %c0_80] : memref<8x16x128xf32, #tpu.memory_space<vmem>>, vector<1x16x128xf32>
    %296 = vector.shape_cast %295 : vector<1x16x128xf32> to vector<16x128xf32>
    %297 = vector.shape_cast %294 : vector<16x128xf32> to vector<1x16x128xf32>
    tpu.vector_store %arg7[%c7_78, %c0_79, %c0_80], %297 {strides = array<i32>} : memref<8x16x128xf32, #tpu.memory_space<vmem>>, vector<1x16x128xf32>,
    %c0_81 = arith.constant 0 : index
    %c0_82 = arith.constant 0 : index
    %298 = vector.load %arg10[%c0_81, %c0_82] : memref<16x128xf32, #tpu.memory_space<vmem>>, vector<16x128xf32>
    tpu.vector_store %arg10[%c0_81, %c0_82], %294 {strides = array<i32>} : memref<16x128xf32, #tpu.memory_space<vmem>>, vector<16x128xf32>,
    %c1_i32 = arith.constant 1 : i32
    %299 = arith.cmpi eq, %arg1, %c1_i32 : i32
    %300 = arith.extui %299 : i1 to i32
    %c0_i32_83 = arith.constant 0 : i32
    %301 = arith.cmpi ne, %300, %c0_i32_83 : i32
    scf.if %301 {
      %c0_84 = arith.constant 0 : index
      %c0_85 = arith.constant 0 : index
      %302 = vector.load %arg8[%c0_84, %c0_85] : memref<16x128xf32, #tpu.memory_space<vmem>>, vector<16x128xf32>
      tpu.vector_store %arg8[%c0_84, %c0_85], %294 {strides = array<i32>} : memref<16x128xf32, #tpu.memory_space<vmem>>, vector<16x128xf32>,
    } else {
    }
    return
  }
  func.func @transform_0(%arg0: i32, %arg1: i32) -> (i32, i32, i32) {
    %c0_i32 = arith.constant 0 : i32
    %c0_i32_0 = arith.constant 0 : i32
    return %arg1, %arg0, %c0_i32 : i32, i32, i32
  }
  func.func @transform_1(%arg0: i32, %arg1: i32) -> (i32, i32) {
    %c0_i32 = arith.constant 0 : i32
    %c0_i32_0 = arith.constant 0 : i32
    %c0_i32_1 = arith.constant 0 : i32
    return %c0_i32, %c0_i32_0 : i32, i32
  }
  func.func @transform_2(%arg0: i32, %arg1: i32) -> (i32, i32) {
    %c0_i32 = arith.constant 0 : i32
    %c0_i32_0 = arith.constant 0 : i32
    %c0_i32_1 = arith.constant 0 : i32
    return %c0_i32, %c0_i32_0 : i32, i32
  }
  func.func @transform_3(%arg0: i32, %arg1: i32) -> (i32, i32) {
    %c0_i32 = arith.constant 0 : i32
    %c0_i32_0 = arith.constant 0 : i32
    %c0_i32_1 = arith.constant 0 : i32
    return %c0_i32, %c0_i32_0 : i32, i32
  }
  func.func @transform_4(%arg0: i32, %arg1: i32) -> (i32, i32) {
    %c0_i32 = arith.constant 0 : i32
    %c0_i32_0 = arith.constant 0 : i32
    %c0_i32_1 = arith.constant 0 : i32
    return %c0_i32, %c0_i32_0 : i32, i32
  }
  func.func @transform_5(%arg0: i32, %arg1: i32) -> (i32, i32, i32) {
    %c0_i32 = arith.constant 0 : i32
    %c0_i32_0 = arith.constant 0 : i32
    return %arg1, %arg0, %c0_i32 : i32, i32, i32
  }
  func.func @transform_6(%arg0: i32, %arg1: i32) -> (i32, i32) {
    %c0_i32 = arith.constant 0 : i32
    %c0_i32_0 = arith.constant 0 : i32
    return %arg0, %c0_i32 : i32, i32
  }
}

</mosaic_0001>

<llo_original>
// kernel: seq2seq_encoder_forward.2
$region0: #{seq2seq_encoder_forward.2}
  #allocation0 [shape = 'u32[]', space=smem, size = 0x4, offset = 0x4, fixed_abs, tag = 'smem constant byte address 0x4 - core index']
  #allocation1 [shape = 'u32[144,128]{1,0:T(1,128)}', space=vmem, size = 0x12000, scoped, tag = 'internal scratch']
  #allocation2 [shape = 'bf16[8,16,384]{2,1,0:T(8,128)(2,1)}', space=vmem, size = 0x18000, scoped, tag = 'scratch operand']
  #allocation3 [shape = 'f32[16,128]{1,0:T(8,128)}', space=vmem, size = 0x2000, scoped, tag = 'scratch operand']
  %s0 = inlined_call_operand.vmem [shape: bf16[16,16,128], index: 0, kind: input, shape index: {}]
  %s1 = inlined_call_operand.vmem [shape: bf16[128,384], index: 1, kind: input, shape index: {}]
  %s2 = inlined_call_operand.vmem [shape: bf16[128,384], index: 2, kind: input, shape index: {}]
  %s3 = inlined_call_operand.vmem [shape: f32[1,384], index: 3, kind: input, shape index: {}]
  %s4 = inlined_call_operand.vmem [shape: f32[1,384], index: 4, kind: input, shape index: {}]
  %s5 = inlined_call_operand.vmem [shape: bf16[16,16,128], index: 5, kind: output, shape index: {0}]
  %s6 = inlined_call_operand.vmem [shape: f32[16,128], index: 6, kind: output, shape index: {1}]
  %7 = xla_tuple %s5, %s6
  %s8 = sld [smem:[#allocation0]]
  $region69: #{seq2seq_encoder_forward.2} parent=0
    _
  %s10 = ssub.s32 1, %s8
  %s11 = scalar_select 0, %s10, %s8
  loop: start=0, step=1, limit=4
  $region2: #{seq2seq_encoder_forward.2} parent=0 // loop_pre_header
    _
  $region3: #{seq2seq_encoder_forward.2} parent=0 // loop_header
    %s13 = sphi 0, %s17
    %p14 = scmp.ge.s32.totalorder %s13, 4
    %s20 = sphi 0, %s32
    %s21 = sphi 0, %s28
    %s22 = sphi 0, %s20
    %s23 = sphi 0, %s21
    %s24 = sphi 0, %s22
    %s25 = sphi 0, %s23
    %s37 = sphi 0, %s39
    %s40 = sphi 0, %s37
    %s41 = sphi 0, %s40
    %s57 = sphi 0, %s41
    %s61 = sphi 0, %s61
    %s63 = sphi 0, %s61
    %s64 = sphi 0, %s63
    %s78 = sphi 0, %s64
    %s82 = sphi 0, %s82
    %s84 = sphi 0, %s82
    %s85 = sphi 0, %s84
    %s99 = sphi 0, %s85
    %s103 = sphi 0, %s103
    %s105 = sphi 0, %s103
    %s106 = sphi 0, %s105
    %s120 = sphi 0, %s106
    %s124 = sphi 0, %s124
    %s126 = sphi 0, %s124
    %s127 = sphi 0, %s126
    %s141 = sphi 0, %s127
    %s149 = sphi 0, %s151
    %s152 = sphi 0, %s149
    %s153 = sphi 0, %s152
    %s169 = sphi 0, %s153
    %s175 = sphi 0, %s177
    %s178 = sphi 0, %s175
    %s179 = sphi 0, %s178
    %s195 = sphi 0, %s179
  $region4: #{seq2seq_encoder_forward.2} parent=0 // loop_header_branch
    %16 = sbr.rel (%p14) target = $region8
  $region5: #{seq2seq_encoder_forward.2} parent=0 // loop_body
    %s18 = ssub.s32 %s13, 1
    %s19 = ssub.s32 %s13, 2
    %s26 = sadd.s32 1, %s21
    %p27 = scmp.ge.s32.totalorder %s26, 2
    %s28 = scalar_select %p27, 0, %s26
    %s29 = sadd.s32 1, %s20
    %s30 = scalar_select %p27, %s29, %s20
    %p31 = scmp.ge.s32.totalorder %s30, 1
    %s32 = scalar_select %p31, 0, %s30
    %s33 = ssub.s32 %s21, %s28
    %s34 = ssub.s32 %s20, %s32
    %s35 = sor.u32 %s33, %s34
    %p36 = scmp.eq.s32.totalorder %s35, 0
    %s38 = sadd.s32 %s37, 1
    %s39 = scalar_select %p36, %s37, %s38
    %p42 = pneg %p36
    %p43 = scmp.eq.s32.totalorder %s13, 1
    %p44 = por %p42, %p43
    %p45 = scmp.ne.s32.totalorder %s37, %s40
    %p46 = scmp.eq.s32.totalorder %s13, 0
    %p47 = por %p45, %p46
    %p48 = scmp.ne.s32.totalorder %s37, %s40
    %p49 = scmp.eq.s32.totalorder %s18, 1
    %p50 = por %p48, %p49
    %p51 = scmp.ne.s32.totalorder %s40, %s41
    %p52 = scmp.eq.s32.totalorder %s18, 0
    %p53 = por %p51, %p52
    %p54 = scmp.ne.s32.totalorder %s40, %s41
    %p55 = scmp.eq.s32.totalorder %s19, 1
    %p56 = por %p54, %p55
    %p58 = scmp.ne.s32.totalorder %s41, %s57
    %p59 = scmp.eq.s32.totalorder %s19, 0
    %p60 = por %p58, %p59
    %s62 = sadd.s32 %s61, 1
    %p65 = scmp.eq.s32.totalorder %s13, 1
    %p66 = scmp.ne.s32.totalorder %s61, %s63
    %p67 = scmp.eq.s32.totalorder %s13, 0
    %p68 = por %p66, %p67
    %p69 = scmp.ne.s32.totalorder %s61, %s63
    %p70 = scmp.eq.s32.totalorder %s18, 1
    %p71 = por %p69, %p70
    %p72 = scmp.ne.s32.totalorder %s63, %s64
    %p73 = scmp.eq.s32.totalorder %s18, 0
    %p74 = por %p72, %p73
    %p75 = scmp.ne.s32.totalorder %s63, %s64
    %p76 = scmp.eq.s32.totalorder %s19, 1
    %p77 = por %p75, %p76
    %p79 = scmp.ne.s32.totalorder %s64, %s78
    %p80 = scmp.eq.s32.totalorder %s19, 0
    %p81 = por %p79, %p80
    %s83 = sadd.s32 %s82, 1
    %p86 = scmp.eq.s32.totalorder %s13, 1
    %p87 = scmp.ne.s32.totalorder %s82, %s84
    %p88 = scmp.eq.s32.totalorder %s13, 0
    %p89 = por %p87, %p88
    %p90 = scmp.ne.s32.totalorder %s82, %s84
    %p91 = scmp.eq.s32.totalorder %s18, 1
    %p92 = por %p90, %p91
    %p93 = scmp.ne.s32.totalorder %s84, %s85
    %p94 = scmp.eq.s32.totalorder %s18, 0
    %p95 = por %p93, %p94
    %p96 = scmp.ne.s32.totalorder %s84, %s85
    %p97 = scmp.eq.s32.totalorder %s19, 1
    %p98 = por %p96, %p97
    %p100 = scmp.ne.s32.totalorder %s85, %s99
    %p101 = scmp.eq.s32.totalorder %s19, 0
    %p102 = por %p100, %p101
    %s104 = sadd.s32 %s103, 1
    %p107 = scmp.eq.s32.totalorder %s13, 1
    %p108 = scmp.ne.s32.totalorder %s103, %s105
    %p109 = scmp.eq.s32.totalorder %s13, 0
    %p110 = por %p108, %p109
    %p111 = scmp.ne.s32.totalorder %s103, %s105
    %p112 = scmp.eq.s32.totalorder %s18, 1
    %p113 = por %p111, %p112
    %p114 = scmp.ne.s32.totalorder %s105, %s106
    %p115 = scmp.eq.s32.totalorder %s18, 0
    %p116 = por %p114, %p115
    %p117 = scmp.ne.s32.totalorder %s105, %s106
    %p118 = scmp.eq.s32.totalorder %s19, 1
    %p119 = por %p117, %p118
    %p121 = scmp.ne.s32.totalorder %s106, %s120
    %p122 = scmp.eq.s32.totalorder %s19, 0
    %p123 = por %p121, %p122
    %s125 = sadd.s32 %s124, 1
    %p128 = scmp.eq.s32.totalorder %s13, 1
    %p129 = scmp.ne.s32.totalorder %s124, %s126
    %p130 = scmp.eq.s32.totalorder %s13, 0
    %p131 = por %p129, %p130
    %p132 = scmp.ne.s32.totalorder %s124, %s126
    %p133 = scmp.eq.s32.totalorder %s18, 1
    %p134 = por %p132, %p133
    %p135 = scmp.ne.s32.totalorder %s126, %s127
    %p136 = scmp.eq.s32.totalorder %s18, 0
    %p137 = por %p135, %p136
    %p138 = scmp.ne.s32.totalorder %s126, %s127
    %p139 = scmp.eq.s32.totalorder %s19, 1
    %p140 = por %p138, %p139
    %p142 = scmp.ne.s32.totalorder %s127, %s141
    %p143 = scmp.eq.s32.totalorder %s19, 0
    %p144 = por %p142, %p143
    %s145 = ssub.s32 %s21, %s28
    %s146 = ssub.s32 %s20, %s32
    %s147 = sor.u32 %s145, %s146
    %p148 = scmp.eq.s32.totalorder %s147, 0
    %s150 = sadd.s32 %s149, 1
    %s151 = scalar_select %p148, %s149, %s150
    %p154 = pneg %p148
    %p155 = scmp.eq.s32.totalorder %s13, 1
    %p156 = por %p154, %p155
    %p157 = scmp.ne.s32.totalorder %s149, %s152
    %p158 = scmp.eq.s32.totalorder %s13, 0
    %p159 = por %p157, %p158
    %p160 = scmp.ne.s32.totalorder %s149, %s152
    %p161 = scmp.eq.s32.totalorder %s18, 1
    %p162 = por %p160, %p161
    %p163 = scmp.ne.s32.totalorder %s152, %s153
    %p164 = scmp.eq.s32.totalorder %s18, 0
    %p165 = por %p163, %p164
    %p166 = scmp.ne.s32.totalorder %s152, %s153
    %p167 = scmp.eq.s32.totalorder %s19, 1
    %p168 = por %p166, %p167
    %p170 = scmp.ne.s32.totalorder %s153, %s169
    %p171 = scmp.eq.s32.totalorder %s19, 0
    %p172 = por %p170, %p171
    %s173 = ssub.s32 %s20, %s32
    %p174 = scmp.eq.s32.totalorder %s173, 0
    %s176 = sadd.s32 %s175, 1
    %s177 = scalar_select %p174, %s175, %s176
    %p180 = pneg %p174
    %p181 = scmp.eq.s32.totalorder %s13, 1
    %p182 = por %p180, %p181
    %p183 = scmp.ne.s32.totalorder %s175, %s178
    %p184 = scmp.eq.s32.totalorder %s13, 0
    %p185 = por %p183, %p184
    %p186 = scmp.ne.s32.totalorder %s175, %s178
    %p187 = scmp.eq.s32.totalorder %s18, 1
    %p188 = por %p186, %p187
    %p189 = scmp.ne.s32.totalorder %s178, %s179
    %p190 = scmp.eq.s32.totalorder %s18, 0
    %p191 = por %p189, %p190
    %p192 = scmp.ne.s32.totalorder %s178, %s179
    %p193 = scmp.eq.s32.totalorder %s19, 1
    %p194 = por %p192, %p193
    %p196 = scmp.ne.s32.totalorder %s179, %s195
    %p197 = scmp.eq.s32.totalorder %s19, 0
    %p198 = por %p196, %p197
    %p199 = scmp.le.s32.totalorder 1, %s13
    %p200 = scmp.lt.s32.totalorder %s13, 3
    %p201 = pnand %p199, %p200
    %p202 = pneg %p201
    // Predicated region
    $region9: #{seq2seq_encoder_forward.2} parent=5 // pred_check
      _
    $region10: #{seq2seq_encoder_forward.2} parent=5 // pred_check_branch
      %204 = sbr.rel (%p201) target = $region12
    $region11: #{seq2seq_encoder_forward.2} parent=5 // pred_region
      %s205 = ssub.s32 %s13, 1
      // Predicated region
      $region13: #{seq2seq_encoder_forward.2} parent=11 // pred_check
        %p206 = pneg %p74
      $region14: #{seq2seq_encoder_forward.2} parent=11 // pred_check_branch
        %208 = sbr.rel (%p206) target = $region16
      $region15: #{seq2seq_encoder_forward.2} parent=11 // pred_region
        _
      $region16: #{seq2seq_encoder_forward.2} parent=11 // pred_fallthru
        _
      // Predicated region
      $region17: #{seq2seq_encoder_forward.2} parent=11 // pred_check
        %p209 = pneg %p95
      $region18: #{seq2seq_encoder_forward.2} parent=11 // pred_check_branch
        %211 = sbr.rel (%p209) target = $region20
      $region19: #{seq2seq_encoder_forward.2} parent=11 // pred_region
        _
      $region20: #{seq2seq_encoder_forward.2} parent=11 // pred_fallthru
        _
      // Predicated region
      $region21: #{seq2seq_encoder_forward.2} parent=11 // pred_check
        %p212 = pneg %p116
      $region22: #{seq2seq_encoder_forward.2} parent=11 // pred_check_branch
        %214 = sbr.rel (%p212) target = $region24
      $region23: #{seq2seq_encoder_forward.2} parent=11 // pred_region
        _
      $region24: #{seq2seq_encoder_forward.2} parent=11 // pred_fallthru
        _
      // Predicated region
      $region25: #{seq2seq_encoder_forward.2} parent=11 // pred_check
        %p215 = pneg %p137
      $region26: #{seq2seq_encoder_forward.2} parent=11 // pred_check_branch
        %217 = sbr.rel (%p215) target = $region28
      $region27: #{seq2seq_encoder_forward.2} parent=11 // pred_region
        _
      $region28: #{seq2seq_encoder_forward.2} parent=11 // pred_fallthru
        _
    $region12: #{seq2seq_encoder_forward.2} parent=5 // pred_fallthru
      _
    %p218 = scmp.lt.s32.totalorder %s13, 2
    // Predicated region
    $region29: #{seq2seq_encoder_forward.2} parent=5 // pred_check
      %p219 = pneg %p218
    $region30: #{seq2seq_encoder_forward.2} parent=5 // pred_check_branch
      %221 = sbr.rel (%p219) target = $region32
    $region31: #{seq2seq_encoder_forward.2} parent=5 // pred_region
      // Predicated region
      $region33: #{seq2seq_encoder_forward.2} parent=31 // pred_check
        %p222 = pneg %p47
      $region34: #{seq2seq_encoder_forward.2} parent=31 // pred_check_branch
        %224 = sbr.rel (%p222) target = $region36
      $region35: #{seq2seq_encoder_forward.2} parent=31 // pred_region
        %s225 = smul.u32 8, %s21
        %s226 = smul.u32 2, %s20
        %p227 = scmp.lt.s32.totalorder %s225, 15
        %s228 = scalar_select %p227, %s225, 15
        %p229 = scmp.lt.s32.totalorder %s226, 1
        %s230 = scalar_select %p229, %s226, 1
        %s231 = smul.addr %s228, 2
        %s232 = sadd.s32 %s230, %s231
        %s233 = smul.addr %s232, 4
        %s234 = scalar_lea.vmem %s0, %s233
        %s235 = smul.u32 8, %s21
        %s236 = smul.u32 2, %s20
      $region36: #{seq2seq_encoder_forward.2} parent=31 // pred_fallthru
        _
    $region32: #{seq2seq_encoder_forward.2} parent=5 // pred_fallthru
      _
    %p237 = scmp.le.s32.totalorder 1, %s13
    %p238 = scmp.lt.s32.totalorder %s13, 3
    %p239 = pnand %p237, %p238
    %p240 = pneg %p239
    // Predicated region
    $region37: #{seq2seq_encoder_forward.2} parent=5 // pred_check
      _
    $region38: #{seq2seq_encoder_forward.2} parent=5 // pred_check_branch
      %242 = sbr.rel (%p239) target = $region40
    $region39: #{seq2seq_encoder_forward.2} parent=5 // pred_region
      %s243 = ssub.s32 %s13, 1
      %s244 = smul.u32 8, %s23
      %s245 = smul.u32 2, %s22
      %p246 = scmp.lt.s32.totalorder %s244, 15
      %s247 = scalar_select %p246, %s244, 15
      %p248 = scmp.lt.s32.totalorder %s245, 1
      %s249 = scalar_select %p248, %s245, 1
      %s250 = smul.addr %s247, 2
      %s251 = sadd.s32 %s249, %s250
      %s252 = smul.addr %s251, 4
      %s253 = scalar_lea.vmem %s0, %s252
      %p254 = pneg %p53
      %p255 = pneg %p50
      %p256 = pneg %p74
      %p257 = pneg %p71
      %p258 = pneg %p95
      %p259 = pneg %p92
      %p260 = pneg %p116
      %p261 = pneg %p113
      %p262 = pneg %p137
      %p263 = pneg %p134
      %p264 = pneg %p165
      %p265 = pneg %p162
      %s266 = smul.u32 8, %s23
      %s267 = smul.u32 2, %s22
      %p268 = scmp.lt.s32.totalorder %s266, 15
      %s269 = scalar_select %p268, %s266, 15
      %p270 = scmp.lt.s32.totalorder %s267, 1
      %s271 = scalar_select %p270, %s267, 1
      %s272 = smul.addr %s269, 2
      %s273 = sadd.s32 %s271, %s272
      %s274 = smul.addr %s273, 4
      %s275 = scalar_lea.vmem %s5, %s274
      %p276 = pneg %p191
      %p277 = pneg %p188
      %s278 = smul.u32 2, %s22
      %p279 = scmp.lt.s32.totalorder %s278, 1
      %s280 = scalar_select %p279, %s278, 1
      %s281 = smul.addr %s280, 8
      %s282 = scalar_lea.vmem %s6, %s281
      %s283 = smul.u32 8, %s23
      %s284 = smul.u32 2, %s22
      %p285 = scmp.lt.s32.totalorder %s283, 15
      %s286 = scalar_select %p285, %s283, 15
      %p287 = scmp.lt.s32.totalorder %s284, 1
      %s288 = scalar_select %p287, %s284, 1
      %s289 = smul.addr %s286, 2
      %s290 = sadd.s32 %s288, %s289
      %s291 = smul.addr %s290, 4
      %s292 = scalar_lea.vmem %s0, %s291
      %s293 = smul.u32 8, %s23
      %s294 = smul.u32 2, %s22
      %s295 = smul.u32 8, %s23
      %s296 = smul.u32 2, %s22
      %p297 = scmp.lt.s32.totalorder %s295, 15
      %s298 = scalar_select %p297, %s295, 15
      %p299 = scmp.lt.s32.totalorder %s296, 1
      %s300 = scalar_select %p299, %s296, 1
      %s301 = smul.addr %s298, 2
      %s302 = sadd.s32 %s300, %s301
      %s303 = smul.addr %s302, 4
      %s304 = scalar_lea.vmem %s5, %s303
      %s305 = smul.u32 8, %s23
      %s306 = smul.u32 2, %s22
      %s307 = smul.u32 2, %s22
      %p308 = scmp.lt.s32.totalorder %s307, 1
      %s309 = scalar_select %p308, %s307, 1
      %s310 = smul.addr %s309, 8
      %s311 = scalar_lea.vmem %s6, %s310
      %s312 = smul.u32 2, %s22
      %p314 = scmp.eq.s32.totalorder %s23, 0
      // Predicated region
      $region41: #{seq2seq_encoder_forward.2} parent=39 // pred_check
        %p315 = pneg %p314
      $region42: #{seq2seq_encoder_forward.2} parent=39 // pred_check_branch
        %317 = sbr.rel (%p315) target = $region44
      $region43: #{seq2seq_encoder_forward.2} parent=39 // pred_region
        %318 = vst [vmem:[#allocation3] sm:$0xff] 0.0
        %319 = vst [vmem:[#allocation3 + $0x8] sm:$0xff] 0.0
      $region44: #{seq2seq_encoder_forward.2} parent=39 // pred_fallthru
        _
      %v320 = vld [vmem:[%s292] sm:$0xf]
      %v321 = vld [vmem:[%s292 + $0x4] sm:$0xf]
      %v322 = vld [vmem:[%s292 + $0x8] sm:$0xf]
      %v323 = vld [vmem:[%s292 + $0xc] sm:$0xf]
      %v324 = vld [vmem:[%s292 + $0x10] sm:$0xf]
      %v325 = vld [vmem:[%s292 + $0x14] sm:$0xf]
      %v326 = vld [vmem:[%s292 + $0x18] sm:$0xf]
      %v327 = vld [vmem:[%s292 + $0x1c] sm:$0xf]
      %v328 = vld [vmem:[%s292 + $0x20] sm:$0xf]
      %v329 = vld [vmem:[%s292 + $0x24] sm:$0xf]
      %v330 = vld [vmem:[%s292 + $0x28] sm:$0xf]
      %v331 = vld [vmem:[%s292 + $0x2c] sm:$0xf]
      %v332 = vld [vmem:[%s292 + $0x30] sm:$0xf]
      %v333 = vld [vmem:[%s292 + $0x34] sm:$0xf]
      %v334 = vld [vmem:[%s292 + $0x38] sm:$0xf]
      %v335 = vld [vmem:[%s292 + $0x3c] sm:$0xf]
      %v336 = vld [vmem:[%s1] sm:$0xff]
      %v337 = vld [vmem:[%s1 + $0x8] sm:$0xf]
      %v338 = vld [vmem:[%s1 + $0xc] sm:$0xff]
      %v339 = vld [vmem:[%s1 + $0x14] sm:$0xf]
      %v340 = vld [vmem:[%s1 + $0x18] sm:$0xff]
      %v341 = vld [vmem:[%s1 + $0x20] sm:$0xf]
      %v342 = vld [vmem:[%s1 + $0x24] sm:$0xff]
      %v343 = vld [vmem:[%s1 + $0x2c] sm:$0xf]
      %v344 = vld [vmem:[%s1 + $0x30] sm:$0xff]
      %v345 = vld [vmem:[%s1 + $0x38] sm:$0xf]
      %v346 = vld [vmem:[%s1 + $0x3c] sm:$0xff]
      %v347 = vld [vmem:[%s1 + $0x44] sm:$0xf]
      %v348 = vld [vmem:[%s1 + $0x48] sm:$0xff]
      %v349 = vld [vmem:[%s1 + $0x50] sm:$0xf]
      %v350 = vld [vmem:[%s1 + $0x54] sm:$0xff]
      %v351 = vld [vmem:[%s1 + $0x5c] sm:$0xf]
      %v352 = vld [vmem:[%s1 + $0x60] sm:$0xff]
      %v353 = vld [vmem:[%s1 + $0x68] sm:$0xf]
      %v354 = vld [vmem:[%s1 + $0x6c] sm:$0xff]
      %v355 = vld [vmem:[%s1 + $0x74] sm:$0xf]
      %v356 = vld [vmem:[%s1 + $0x78] sm:$0xff]
      %v357 = vld [vmem:[%s1 + $0x80] sm:$0xf]
      %v358 = vld [vmem:[%s1 + $0x84] sm:$0xff]
      %v359 = vld [vmem:[%s1 + $0x8c] sm:$0xf]
      %v360 = vld [vmem:[%s1 + $0x90] sm:$0xff]
      %v361 = vld [vmem:[%s1 + $0x98] sm:$0xf]
      %v362 = vld [vmem:[%s1 + $0x9c] sm:$0xff]
      %v363 = vld [vmem:[%s1 + $0xa4] sm:$0xf]
      %v364 = vld [vmem:[%s1 + $0xa8] sm:$0xff]
      %v365 = vld [vmem:[%s1 + $0xb0] sm:$0xf]
      %v366 = vld [vmem:[%s1 + $0xb4] sm:$0xff]
      %v367 = vld [vmem:[%s1 + $0xbc] sm:$0xf]
      %v368 = vld [vmem:[%s3] sm:$0x7]
      %v370 = vlaneseq
      %v371 = vshrl.u32 %v370, 7
      %v372 = vsub.s32 0, %v371
      %v373 = vrot.slane %v368, %v372
      %v374 = vlaneseq
      %v375 = vshrl.u32 %v374, 7
      %v376 = vsub.s32 1, %v375
      %v377 = vrot.slane %v368, %v376
      %v378 = vlaneseq
      %v379 = vshrl.u32 %v378, 7
      %v380 = vsub.s32 2, %v379
      %v381 = vrot.slane %v368, %v380
      %v401 = vunpack.c.l.b16 %v320
      %v402 = vunpack.c.l.b16 %v321
      %v403 = vunpack.c.l.b16 %v322
      %v404 = vunpack.c.l.b16 %v323
      %v405 = vunpack.c.l.b16 %v324
      %v406 = vunpack.c.l.b16 %v325
      %v407 = vunpack.c.l.b16 %v326
      %v408 = vunpack.c.l.b16 %v327
      %v409 = vunpack.c.l.b16 %v328
      %v410 = vunpack.c.l.b16 %v329
      %v411 = vunpack.c.l.b16 %v330
      %v412 = vunpack.c.l.b16 %v331
      %v413 = vunpack.c.l.b16 %v332
      %v414 = vunpack.c.l.b16 %v333
      %v415 = vunpack.c.l.b16 %v334
      %v416 = vunpack.c.l.b16 %v335
      %v417 = vpack.c.b16 %v402, %v401
      %v418 = vpack.c.b16 %v404, %v403
      %v419 = vpack.c.b16 %v406, %v405
      %v420 = vpack.c.b16 %v408, %v407
      %v421 = vpack.c.b16 %v410, %v409
      %v422 = vpack.c.b16 %v412, %v411
      %v423 = vpack.c.b16 %v414, %v413
      %v424 = vpack.c.b16 %v416, %v415
      %v465 = vunpack.c.l.b16 %v336
      %v466 = vunpack.c.h.b16 %v336
      %v467 = vunpack.c.l.b16 %v337
      %v468 = vunpack.c.l.b16 %v338
      %v469 = vunpack.c.h.b16 %v338
      %v470 = vunpack.c.l.b16 %v339
      %v471 = vunpack.c.l.b16 %v340
      %v472 = vunpack.c.h.b16 %v340
      %v473 = vunpack.c.l.b16 %v341
      %v474 = vunpack.c.l.b16 %v342
      %v475 = vunpack.c.h.b16 %v342
      %v476 = vunpack.c.l.b16 %v343
      %v477 = vunpack.c.l.b16 %v344
      %v478 = vunpack.c.h.b16 %v344
      %v479 = vunpack.c.l.b16 %v345
      %v480 = vunpack.c.l.b16 %v346
      %v481 = vunpack.c.h.b16 %v346
      %v482 = vunpack.c.l.b16 %v347
      %v483 = vunpack.c.l.b16 %v348
      %v484 = vunpack.c.h.b16 %v348
      %v485 = vunpack.c.l.b16 %v349
      %v486 = vunpack.c.l.b16 %v350
      %v487 = vunpack.c.h.b16 %v350
      %v488 = vunpack.c.l.b16 %v351
      %v489 = vunpack.c.l.b16 %v352
      %v490 = vunpack.c.h.b16 %v352
      %v491 = vunpack.c.l.b16 %v353
      %v492 = vunpack.c.l.b16 %v354
      %v493 = vunpack.c.h.b16 %v354
      %v494 = vunpack.c.l.b16 %v355
      %v495 = vunpack.c.l.b16 %v356
      %v496 = vunpack.c.h.b16 %v356
      %v497 = vunpack.c.l.b16 %v357
      %v498 = vunpack.c.l.b16 %v358
      %v499 = vunpack.c.h.b16 %v358
      %v500 = vunpack.c.l.b16 %v359
      %v501 = vunpack.c.l.b16 %v360
      %v502 = vunpack.c.h.b16 %v360
      %v503 = vunpack.c.l.b16 %v361
      %v504 = vunpack.c.l.b16 %v362
      %v505 = vunpack.c.h.b16 %v362
      %v506 = vunpack.c.l.b16 %v363
      %v507 = vunpack.c.l.b16 %v364
      %v508 = vunpack.c.h.b16 %v364
      %v509 = vunpack.c.l.b16 %v365
      %v510 = vunpack.c.l.b16 %v366
      %v511 = vunpack.c.h.b16 %v366
      %v512 = vunpack.c.l.b16 %v367
      %v513 = vpack.c.b16 %v468, %v465
      %v514 = vpack.c.b16 %v469, %v466
      %v515 = vpack.c.b16 %v470, %v467
      %v516 = vpack.c.b16 %v474, %v471
      %v517 = vpack.c.b16 %v475, %v472
      %v518 = vpack.c.b16 %v476, %v473
      %v519 = vpack.c.b16 %v480, %v477
      %v520 = vpack.c.b16 %v481, %v478
      %v521 = vpack.c.b16 %v482, %v479
      %v522 = vpack.c.b16 %v486, %v483
      %v523 = vpack.c.b16 %v487, %v484
      %v524 = vpack.c.b16 %v488, %v485
      %v525 = vpack.c.b16 %v492, %v489
      %v526 = vpack.c.b16 %v493, %v490
      %v527 = vpack.c.b16 %v494, %v491
      %v528 = vpack.c.b16 %v498, %v495
      %v529 = vpack.c.b16 %v499, %v496
      %v530 = vpack.c.b16 %v500, %v497
      %v531 = vpack.c.b16 %v504, %v501
      %v532 = vpack.c.b16 %v505, %v502
      %v533 = vpack.c.b16 %v506, %v503
      %v534 = vpack.c.b16 %v510, %v507
      %v535 = vpack.c.b16 %v511, %v508
      %v536 = vpack.c.b16 %v512, %v509
      %561 = vmatprep.subr.bf16.mxu0 %v535
      %562 = vmatpush1.bf16.msra.mxu0 %v534
      %563 = vmatprep.subr.bf16.mxu0 %v532
      %564 = vmatpush1.bf16.msra.mxu0 %v531
      %565 = vmatprep.subr.bf16.mxu0 %v529
      %566 = vmatpush1.bf16.msra.mxu0 %v528
      %567 = vmatprep.subr.bf16.mxu0 %v526
      %568 = vmatpush1.bf16.msra.mxu0 %v525
      %569 = vmatprep.subr.bf16.mxu0 %v523
      %570 = vmatpush1.bf16.msra.mxu0 %v522
      %571 = vmatprep.subr.bf16.mxu0 %v520
      %572 = vmatpush1.bf16.msra.mxu0 %v519
      %573 = vmatprep.subr.bf16.mxu0 %v517
      %574 = vmatpush1.bf16.msra.mxu0 %v516
      %575 = vmatprep.subr.bf16.mxu0 %v514
      %576 = vmatpush1.bf16.msra.mxu0 %v513
      %577 = vmatprep.subr.bf16.mxu0 0
      %578 = vmatpush2.bf16.msra.mxu0 0
      %579 = vmatprep.subr.bf16.mxu0 0
      %580 = vmatpush2.bf16.msra.mxu0 0
      %581 = vmatprep.subr.bf16.mxu0 0
      %582 = vmatpush2.bf16.msra.mxu0 0
      %583 = vmatprep.subr.bf16.mxu0 0
      %584 = vmatpush2.bf16.msra.mxu0 0
      %585 = vmatprep.subr.bf16.mxu0 0
      %586 = vmatpush2.bf16.msra.mxu0 0
      %587 = vmatprep.subr.bf16.mxu0 0
      %588 = vmatpush2.bf16.msra.mxu0 0
      %589 = vmatprep.subr.bf16.mxu0 0
      %590 = vmatpush2.bf16.msra.mxu0 0
      %591 = vmatprep.subr.bf16.mxu0 0
      %592 = vmatpush2.bf16.msra.mxu0 0
      %593 = vmatprep.mubr.bf16.mxu0 0
      %594 = vmatmul.mubr.bf16.gmra.mxu0 %v417
      %v595 = vpop.f32.mrf.mxu0
      %v596 = vadd.f32 %v373, %v595
      %v597 = vpop.f32.mrf.mxu0
      %v598 = vadd.f32 %v377, %v597
      %v599 = vpop.f32.mrf.mxu0
      %v600 = vadd.f32 %v373, %v599
      %v601 = vpop.f32.mrf.mxu0
      %v602 = vadd.f32 %v377, %v601
      %603 = vmatprep.mubr.bf16.mxu0 0
      %604 = vmatmul.mubr.bf16.gmra.mxu0 %v418
      %v605 = vpop.f32.mrf.mxu0
      %v606 = vadd.f32 %v373, %v605
      %v607 = vpop.f32.mrf.mxu0
      %v608 = vadd.f32 %v377, %v607
      %v609 = vpop.f32.mrf.mxu0
      %v610 = vadd.f32 %v373, %v609
      %v611 = vpop.f32.mrf.mxu0
      %v612 = vadd.f32 %v377, %v611
      %613 = vmatprep.mubr.bf16.mxu0 0
      %614 = vmatmul.mubr.bf16.gmra.mxu0 %v419
      %v615 = vpop.f32.mrf.mxu0
      %v616 = vadd.f32 %v373, %v615
      %v617 = vpop.f32.mrf.mxu0
      %v618 = vadd.f32 %v377, %v617
      %v619 = vpop.f32.mrf.mxu0
      %v620 = vadd.f32 %v373, %v619
      %v621 = vpop.f32.mrf.mxu0
      %v622 = vadd.f32 %v377, %v621
      %623 = vmatprep.mubr.bf16.mxu0 0
      %624 = vmatmul.mubr.bf16.gmra.mxu0 %v420
      %v625 = vpop.f32.mrf.mxu0
      %v626 = vadd.f32 %v373, %v625
      %v627 = vpop.f32.mrf.mxu0
      %v628 = vadd.f32 %v377, %v627
      %v629 = vpop.f32.mrf.mxu0
      %v630 = vadd.f32 %v373, %v629
      %v631 = vpop.f32.mrf.mxu0
      %v632 = vadd.f32 %v377, %v631
      %633 = vmatprep.mubr.bf16.mxu0 0
      %634 = vmatmul.mubr.bf16.gmra.mxu0 %v421
      %v635 = vpop.f32.mrf.mxu0
      %v636 = vadd.f32 %v373, %v635
      %v637 = vpop.f32.mrf.mxu0
      %v638 = vadd.f32 %v377, %v637
      %v639 = vpop.f32.mrf.mxu0
      %v640 = vadd.f32 %v373, %v639
      %v641 = vpop.f32.mrf.mxu0
      %v642 = vadd.f32 %v377, %v641
      %643 = vmatprep.mubr.bf16.mxu0 0
      %644 = vmatmul.mubr.bf16.gmra.mxu0 %v422
      %v645 = vpop.f32.mrf.mxu0
      %v646 = vadd.f32 %v373, %v645
      %v647 = vpop.f32.mrf.mxu0
      %v648 = vadd.f32 %v377, %v647
      %v649 = vpop.f32.mrf.mxu0
      %v650 = vadd.f32 %v373, %v649
      %v651 = vpop.f32.mrf.mxu0
      %v652 = vadd.f32 %v377, %v651
      %653 = vmatprep.mubr.bf16.mxu0 0
      %654 = vmatmul.mubr.bf16.gmra.mxu0 %v423
      %v655 = vpop.f32.mrf.mxu0
      %v656 = vadd.f32 %v373, %v655
      %v657 = vpop.f32.mrf.mxu0
      %v658 = vadd.f32 %v377, %v657
      %v659 = vpop.f32.mrf.mxu0
      %v660 = vadd.f32 %v373, %v659
      %v661 = vpop.f32.mrf.mxu0
      %v662 = vadd.f32 %v377, %v661
      %663 = vmatprep.mubr.bf16.mxu0 0
      %664 = vmatmul.mubr.bf16.gmra.mxu0 %v424
      %v665 = vpop.f32.mrf.mxu0
      %v666 = vadd.f32 %v373, %v665
      %v667 = vpop.f32.mrf.mxu0
      %v668 = vadd.f32 %v377, %v667
      %v669 = vpop.f32.mrf.mxu0
      %v670 = vadd.f32 %v373, %v669
      %v671 = vpop.f32.mrf.mxu0
      %v672 = vadd.f32 %v377, %v671
      %673 = vdwg.mxu0
      %674 = vmatprep.subr.bf16.mxu0 0
      %675 = vmatpush1.bf16.msra.mxu0 %v536
      %676 = vmatprep.subr.bf16.mxu0 0
      %677 = vmatpush1.bf16.msra.mxu0 %v533
      %678 = vmatprep.subr.bf16.mxu0 0
      %679 = vmatpush1.bf16.msra.mxu0 %v530
      %680 = vmatprep.subr.bf16.mxu0 0
      %681 = vmatpush1.bf16.msra.mxu0 %v527
      %682 = vmatprep.subr.bf16.mxu0 0
      %683 = vmatpush1.bf16.msra.mxu0 %v524
      %684 = vmatprep.subr.bf16.mxu0 0
      %685 = vmatpush1.bf16.msra.mxu0 %v521
      %686 = vmatprep.subr.bf16.mxu0 0
      %687 = vmatpush1.bf16.msra.mxu0 %v518
      %688 = vmatprep.subr.bf16.mxu0 0
      %689 = vmatpush1.bf16.msra.mxu0 %v515
      %690 = vmatprep.subr.bf16.mxu0 0
      %691 = vmatpush2.bf16.msra.mxu0 0
      %692 = vmatprep.subr.bf16.mxu0 0
      %693 = vmatpush2.bf16.msra.mxu0 0
      %694 = vmatprep.subr.bf16.mxu0 0
      %695 = vmatpush2.bf16.msra.mxu0 0
      %696 = vmatprep.subr.bf16.mxu0 0
      %697 = vmatpush2.bf16.msra.mxu0 0
      %698 = vmatprep.subr.bf16.mxu0 0
      %699 = vmatpush2.bf16.msra.mxu0 0
      %700 = vmatprep.subr.bf16.mxu0 0
      %701 = vmatpush2.bf16.msra.mxu0 0
      %702 = vmatprep.subr.bf16.mxu0 0
      %703 = vmatpush2.bf16.msra.mxu0 0
      %704 = vmatprep.subr.bf16.mxu0 0
      %705 = vmatpush2.bf16.msra.mxu0 0
      %706 = vmatprep.mubr.bf16.mxu0 0
      %707 = vmatmul.mubr.bf16.gmra.mxu0 %v417
      %v708 = vpop.f32.mrf.mxu0
      %v709 = vadd.f32 %v381, %v708
      %v710 = vpop.f32.mrf.mxu0
      %v711 = vpop.f32.mrf.mxu0
      %v712 = vadd.f32 %v381, %v711
      %v713 = vpop.f32.mrf.mxu0
      %714 = vmatprep.mubr.bf16.mxu0 0
      %715 = vmatmul.mubr.bf16.gmra.mxu0 %v418
      %v716 = vpop.f32.mrf.mxu0
      %v717 = vadd.f32 %v381, %v716
      %v718 = vpop.f32.mrf.mxu0
      %v719 = vpop.f32.mrf.mxu0
      %v720 = vadd.f32 %v381, %v719
      %v721 = vpop.f32.mrf.mxu0
      %722 = vmatprep.mubr.bf16.mxu0 0
      %723 = vmatmul.mubr.bf16.gmra.mxu0 %v419
      %v724 = vpop.f32.mrf.mxu0
      %v725 = vadd.f32 %v381, %v724
      %v726 = vpop.f32.mrf.mxu0
      %v727 = vpop.f32.mrf.mxu0
      %v728 = vadd.f32 %v381, %v727
      %v729 = vpop.f32.mrf.mxu0
      %730 = vmatprep.mubr.bf16.mxu0 0
      %731 = vmatmul.mubr.bf16.gmra.mxu0 %v420
      %v732 = vpop.f32.mrf.mxu0
      %v733 = vadd.f32 %v381, %v732
      %v734 = vpop.f32.mrf.mxu0
      %v735 = vpop.f32.mrf.mxu0
      %v736 = vadd.f32 %v381, %v735
      %v737 = vpop.f32.mrf.mxu0
      %738 = vmatprep.mubr.bf16.mxu0 0
      %739 = vmatmul.mubr.bf16.gmra.mxu0 %v421
      %v740 = vpop.f32.mrf.mxu0
      %v741 = vadd.f32 %v381, %v740
      %v742 = vpop.f32.mrf.mxu0
      %v743 = vpop.f32.mrf.mxu0
      %v744 = vadd.f32 %v381, %v743
      %v745 = vpop.f32.mrf.mxu0
      %746 = vmatprep.mubr.bf16.mxu0 0
      %747 = vmatmul.mubr.bf16.gmra.mxu0 %v422
      %v748 = vpop.f32.mrf.mxu0
      %v749 = vadd.f32 %v381, %v748
      %v750 = vpop.f32.mrf.mxu0
      %v751 = vpop.f32.mrf.mxu0
      %v752 = vadd.f32 %v381, %v751
      %v753 = vpop.f32.mrf.mxu0
      %754 = vmatprep.mubr.bf16.mxu0 0
      %755 = vmatmul.mubr.bf16.gmra.mxu0 %v423
      %v756 = vpop.f32.mrf.mxu0
      %v757 = vadd.f32 %v381, %v756
      %v758 = vpop.f32.mrf.mxu0
      %v759 = vpop.f32.mrf.mxu0
      %v760 = vadd.f32 %v381, %v759
      %v761 = vpop.f32.mrf.mxu0
      %762 = vmatprep.mubr.bf16.mxu0 0
      %763 = vmatmul.mubr.bf16.gmra.mxu0 %v424
      %v764 = vpop.f32.mrf.mxu0
      %v765 = vadd.f32 %v381, %v764
      %v766 = vpop.f32.mrf.mxu0
      %v767 = vpop.f32.mrf.mxu0
      %v768 = vadd.f32 %v381, %v767
      %v769 = vpop.f32.mrf.mxu0
      %770 = vdwg.mxu0
      %v771 = vpack.c.bf16 %v600, %v596
      %v772 = vpack.c.bf16 %v602, %v598
      %v773 = vpack.c.bf16 %v712, %v709
      %v774 = vpack.c.bf16 %v610, %v606
      %v775 = vpack.c.bf16 %v612, %v608
      %v776 = vpack.c.bf16 %v720, %v717
      %v777 = vpack.c.bf16 %v620, %v616
      %v778 = vpack.c.bf16 %v622, %v618
      %v779 = vpack.c.bf16 %v728, %v725
      %v780 = vpack.c.bf16 %v630, %v626
      %v781 = vpack.c.bf16 %v632, %v628
      %v782 = vpack.c.bf16 %v736, %v733
      %v783 = vpack.c.bf16 %v640, %v636
      %v784 = vpack.c.bf16 %v642, %v638
      %v785 = vpack.c.bf16 %v744, %v741
      %v786 = vpack.c.bf16 %v650, %v646
      %v787 = vpack.c.bf16 %v652, %v648
      %v788 = vpack.c.bf16 %v752, %v749
      %v789 = vpack.c.bf16 %v660, %v656
      %v790 = vpack.c.bf16 %v662, %v658
      %v791 = vpack.c.bf16 %v760, %v757
      %v792 = vpack.c.bf16 %v670, %v666
      %v793 = vpack.c.bf16 %v672, %v668
      %v794 = vpack.c.bf16 %v768, %v765
      %v819 = vunpack.c.l.b16 %v771
      %v820 = vunpack.c.l.b16 %v772
      %v821 = vunpack.c.l.b16 %v773
      %v822 = vunpack.c.h.b16 %v771
      %v823 = vunpack.c.h.b16 %v772
      %v824 = vunpack.c.h.b16 %v773
      %v825 = vunpack.c.l.b16 %v774
      %v826 = vunpack.c.l.b16 %v775
      %v827 = vunpack.c.l.b16 %v776
      %v828 = vunpack.c.h.b16 %v774
      %v829 = vunpack.c.h.b16 %v775
      %v830 = vunpack.c.h.b16 %v776
      %v831 = vunpack.c.l.b16 %v777
      %v832 = vunpack.c.l.b16 %v778
      %v833 = vunpack.c.l.b16 %v779
      %v834 = vunpack.c.h.b16 %v777
      %v835 = vunpack.c.h.b16 %v778
      %v836 = vunpack.c.h.b16 %v779
      %v837 = vunpack.c.l.b16 %v780
      %v838 = vunpack.c.l.b16 %v781
      %v839 = vunpack.c.l.b16 %v782
      %v840 = vunpack.c.h.b16 %v780
      %v841 = vunpack.c.h.b16 %v781
      %v842 = vunpack.c.h.b16 %v782
      %v843 = vunpack.c.l.b16 %v783
      %v844 = vunpack.c.l.b16 %v784
      %v845 = vunpack.c.l.b16 %v785
      %v846 = vunpack.c.h.b16 %v783
      %v847 = vunpack.c.h.b16 %v784
      %v848 = vunpack.c.h.b16 %v785
      %v849 = vunpack.c.l.b16 %v786
      %v850 = vunpack.c.l.b16 %v787
      %v851 = vunpack.c.l.b16 %v788
      %v852 = vunpack.c.h.b16 %v786
      %v853 = vunpack.c.h.b16 %v787
      %v854 = vunpack.c.h.b16 %v788
      %v855 = vunpack.c.l.b16 %v789
      %v856 = vunpack.c.l.b16 %v790
      %v857 = vunpack.c.l.b16 %v791
      %v858 = vunpack.c.h.b16 %v789
      %v859 = vunpack.c.h.b16 %v790
      %v860 = vunpack.c.h.b16 %v791
      %v861 = vunpack.c.l.b16 %v792
      %v862 = vunpack.c.l.b16 %v793
      %v863 = vunpack.c.l.b16 %v794
      %v864 = vunpack.c.h.b16 %v792
      %v865 = vunpack.c.h.b16 %v793
      %v866 = vunpack.c.h.b16 %v794
      %v867 = vpack.c.b16 %v820, %v819
      %v868 = vpack.c.b16 %v821, %v821
      %v869 = vpack.c.b16 %v823, %v822
      %v870 = vpack.c.b16 %v824, %v824
      %v871 = vpack.c.b16 %v826, %v825
      %v872 = vpack.c.b16 %v827, %v827
      %v873 = vpack.c.b16 %v829, %v828
      %v874 = vpack.c.b16 %v830, %v830
      %v875 = vpack.c.b16 %v832, %v831
      %v876 = vpack.c.b16 %v833, %v833
      %v877 = vpack.c.b16 %v835, %v834
      %v878 = vpack.c.b16 %v836, %v836
      %v879 = vpack.c.b16 %v838, %v837
      %v880 = vpack.c.b16 %v839, %v839
      %v881 = vpack.c.b16 %v841, %v840
      %v882 = vpack.c.b16 %v842, %v842
      %v883 = vpack.c.b16 %v844, %v843
      %v884 = vpack.c.b16 %v845, %v845
      %v885 = vpack.c.b16 %v847, %v846
      %v886 = vpack.c.b16 %v848, %v848
      %v887 = vpack.c.b16 %v850, %v849
      %v888 = vpack.c.b16 %v851, %v851
      %v889 = vpack.c.b16 %v853, %v852
      %v890 = vpack.c.b16 %v854, %v854
      %v891 = vpack.c.b16 %v856, %v855
      %v892 = vpack.c.b16 %v857, %v857
      %v893 = vpack.c.b16 %v859, %v858
      %v894 = vpack.c.b16 %v860, %v860
      %v895 = vpack.c.b16 %v862, %v861
      %v896 = vpack.c.b16 %v863, %v863
      %v897 = vpack.c.b16 %v865, %v864
      %v898 = vpack.c.b16 %v866, %v866
      %931 = vst [vmem:[#allocation2] sm:$0xff] %v867
      %932 = vst [vmem:[#allocation2 + $0x8] sm:$0xf] %v868
      %933 = vst [vmem:[#allocation2 + $0xc] sm:$0xff] %v869
      %934 = vst [vmem:[#allocation2 + $0x14] sm:$0xf] %v870
      %935 = vst [vmem:[#allocation2 + $0x18] sm:$0xff] %v871
      %936 = vst [vmem:[#allocation2 + $0x20] sm:$0xf] %v872
      %937 = vst [vmem:[#allocation2 + $0x24] sm:$0xff] %v873
      %938 = vst [vmem:[#allocation2 + $0x2c] sm:$0xf] %v874
      %939 = vst [vmem:[#allocation2 + $0x30] sm:$0xff] %v875
      %940 = vst [vmem:[#allocation2 + $0x38] sm:$0xf] %v876
      %941 = vst [vmem:[#allocation2 + $0x3c] sm:$0xff] %v877
      %942 = vst [vmem:[#allocation2 + $0x44] sm:$0xf] %v878
      %943 = vst [vmem:[#allocation2 + $0x48] sm:$0xff] %v879
      %944 = vst [vmem:[#allocation2 + $0x50] sm:$0xf] %v880
      %945 = vst [vmem:[#allocation2 + $0x54] sm:$0xff] %v881
      %946 = vst [vmem:[#allocation2 + $0x5c] sm:$0xf] %v882
      %947 = vst [vmem:[#allocation2 + $0x60] sm:$0xff] %v883
      %948 = vst [vmem:[#allocation2 + $0x68] sm:$0xf] %v884
      %949 = vst [vmem:[#allocation2 + $0x6c] sm:$0xff] %v885
      %950 = vst [vmem:[#allocation2 + $0x74] sm:$0xf] %v886
      %951 = vst [vmem:[#allocation2 + $0x78] sm:$0xff] %v887
      %952 = vst [vmem:[#allocation2 + $0x80] sm:$0xf] %v888
      %953 = vst [vmem:[#allocation2 + $0x84] sm:$0xff] %v889
      %954 = vst [vmem:[#allocation2 + $0x8c] sm:$0xf] %v890
      %955 = vst [vmem:[#allocation2 + $0x90] sm:$0xff] %v891
      %956 = vst [vmem:[#allocation2 + $0x98] sm:$0xf] %v892
      %957 = vst [vmem:[#allocation2 + $0x9c] sm:$0xff] %v893
      %958 = vst [vmem:[#allocation2 + $0xa4] sm:$0xf] %v894
      %959 = vst [vmem:[#allocation2 + $0xa8] sm:$0xff] %v895
      %960 = vst [vmem:[#allocation2 + $0xb0] sm:$0xf] %v896
      %961 = vst [vmem:[#allocation2 + $0xb4] sm:$0xff] %v897
      %962 = vst [vmem:[#allocation2 + $0xbc] sm:$0xf] %v898
      %v963 = vld [vmem:[%s4] sm:$0x7]
      %v965 = vlaneseq
      %v966 = vshrl.u32 %v965, 7
      %v967 = vsub.s32 0, %v966
      %v968 = vrot.slane %v963, %v967
      %v969 = vlaneseq
      %v970 = vshrl.u32 %v969, 7
      %v971 = vsub.s32 1, %v970
      %v972 = vrot.slane %v963, %v971
      %v973 = vlaneseq
      %v974 = vshrl.u32 %v973, 7
      %v975 = vsub.s32 2, %v974
      %v976 = vrot.slane %v963, %v975
      %v980 = vld [vmem:[%s2] sm:$0xff]
      %v981 = vld [vmem:[%s2 + $0x8] sm:$0xf]
      %v982 = vld [vmem:[%s2 + $0xc] sm:$0xff]
      %v983 = vld [vmem:[%s2 + $0x14] sm:$0xf]
      %v984 = vld [vmem:[%s2 + $0x18] sm:$0xff]
      %v985 = vld [vmem:[%s2 + $0x20] sm:$0xf]
      %v986 = vld [vmem:[%s2 + $0x24] sm:$0xff]
      %v987 = vld [vmem:[%s2 + $0x2c] sm:$0xf]
      %v988 = vld [vmem:[%s2 + $0x30] sm:$0xff]
      %v989 = vld [vmem:[%s2 + $0x38] sm:$0xf]
      %v990 = vld [vmem:[%s2 + $0x3c] sm:$0xff]
      %v991 = vld [vmem:[%s2 + $0x44] sm:$0xf]
      %v992 = vld [vmem:[%s2 + $0x48] sm:$0xff]
      %v993 = vld [vmem:[%s2 + $0x50] sm:$0xf]
      %v994 = vld [vmem:[%s2 + $0x54] sm:$0xff]
      %v995 = vld [vmem:[%s2 + $0x5c] sm:$0xf]
      %v996 = vld [vmem:[%s2 + $0x60] sm:$0xff]
      %v997 = vld [vmem:[%s2 + $0x68] sm:$0xf]
      %v998 = vld [vmem:[%s2 + $0x6c] sm:$0xff]
      %v999 = vld [vmem:[%s2 + $0x74] sm:$0xf]
      %v1000 = vld [vmem:[%s2 + $0x78] sm:$0xff]
      %v1001 = vld [vmem:[%s2 + $0x80] sm:$0xf]
      %v1002 = vld [vmem:[%s2 + $0x84] sm:$0xff]
      %v1003 = vld [vmem:[%s2 + $0x8c] sm:$0xf]
      %v1004 = vld [vmem:[%s2 + $0x90] sm:$0xff]
      %v1005 = vld [vmem:[%s2 + $0x98] sm:$0xf]
      %v1006 = vld [vmem:[%s2 + $0x9c] sm:$0xff]
      %v1007 = vld [vmem:[%s2 + $0xa4] sm:$0xf]
      %v1008 = vld [vmem:[%s2 + $0xa8] sm:$0xff]
      %v1009 = vld [vmem:[%s2 + $0xb0] sm:$0xf]
      %v1010 = vld [vmem:[%s2 + $0xb4] sm:$0xff]
      %v1011 = vld [vmem:[%s2 + $0xbc] sm:$0xf]
      %v1012 = vld [vmem:[#allocation3] sm:$0xff]
      %v1013 = vld [vmem:[#allocation3 + $0x8] sm:$0xff]
      %v1014 = vld [vmem:[#allocation2] sm:$0xff]
      %v1015 = vld [vmem:[#allocation2 + $0x8] sm:$0xf]
      %v1016 = vld [vmem:[#allocation2 + $0xc] sm:$0xff]
      %v1017 = vld [vmem:[#allocation2 + $0x14] sm:$0xf]
      %v1018 = vpack.c.bf16 %v1013, %v1012
      %v1051 = vunpack.c.l.b16 %v980
      %v1052 = vunpack.c.h.b16 %v980
      %v1053 = vunpack.c.l.b16 %v981
      %v1054 = vunpack.c.l.b16 %v982
      %v1055 = vunpack.c.h.b16 %v982
      %v1056 = vunpack.c.l.b16 %v983
      %v1057 = vunpack.c.l.b16 %v984
      %v1058 = vunpack.c.h.b16 %v984
      %v1059 = vunpack.c.l.b16 %v985
      %v1060 = vunpack.c.l.b16 %v986
      %v1061 = vunpack.c.h.b16 %v986
      %v1062 = vunpack.c.l.b16 %v987
      %v1063 = vunpack.c.l.b16 %v988
      %v1064 = vunpack.c.h.b16 %v988
      %v1065 = vunpack.c.l.b16 %v989
      %v1066 = vunpack.c.l.b16 %v990
      %v1067 = vunpack.c.h.b16 %v990
      %v1068 = vunpack.c.l.b16 %v991
      %v1069 = vunpack.c.l.b16 %v992
      %v1070 = vunpack.c.h.b16 %v992
      %v1071 = vunpack.c.l.b16 %v993
      %v1072 = vunpack.c.l.b16 %v994
      %v1073 = vunpack.c.h.b16 %v994
      %v1074 = vunpack.c.l.b16 %v995
      %v1075 = vunpack.c.l.b16 %v996
      %v1076 = vunpack.c.h.b16 %v996
      %v1077 = vunpack.c.l.b16 %v997
      %v1078 = vunpack.c.l.b16 %v998
      %v1079 = vunpack.c.h.b16 %v998
      %v1080 = vunpack.c.l.b16 %v999
      %v1081 = vunpack.c.l.b16 %v1000
      %v1082 = vunpack.c.h.b16 %v1000
      %v1083 = vunpack.c.l.b16 %v1001
      %v1084 = vunpack.c.l.b16 %v1002
      %v1085 = vunpack.c.h.b16 %v1002
      %v1086 = vunpack.c.l.b16 %v1003
      %v1087 = vunpack.c.l.b16 %v1004
      %v1088 = vunpack.c.h.b16 %v1004
      %v1089 = vunpack.c.l.b16 %v1005
      %v1090 = vunpack.c.l.b16 %v1006
      %v1091 = vunpack.c.h.b16 %v1006
      %v1092 = vunpack.c.l.b16 %v1007
      %v1093 = vunpack.c.l.b16 %v1008
      %v1094 = vunpack.c.h.b16 %v1008
      %v1095 = vunpack.c.l.b16 %v1009
      %v1096 = vunpack.c.l.b16 %v1010
      %v1097 = vunpack.c.h.b16 %v1010
      %v1098 = vunpack.c.l.b16 %v1011
      %v1099 = vpack.c.b16 %v1054, %v1051
      %v1100 = vpack.c.b16 %v1055, %v1052
      %v1101 = vpack.c.b16 %v1056, %v1053
      %v1102 = vpack.c.b16 %v1060, %v1057
      %v1103 = vpack.c.b16 %v1061, %v1058
      %v1104 = vpack.c.b16 %v1062, %v1059
      %v1105 = vpack.c.b16 %v1066, %v1063
      %v1106 = vpack.c.b16 %v1067, %v1064
      %v1107 = vpack.c.b16 %v1068, %v1065
      %v1108 = vpack.c.b16 %v1072, %v1069
      %v1109 = vpack.c.b16 %v1073, %v1070
      %v1110 = vpack.c.b16 %v1074, %v1071
      %v1111 = vpack.c.b16 %v1078, %v1075
      %v1112 = vpack.c.b16 %v1079, %v1076
      %v1113 = vpack.c.b16 %v1080, %v1077
      %v1114 = vpack.c.b16 %v1084, %v1081
      %v1115 = vpack.c.b16 %v1085, %v1082
      %v1116 = vpack.c.b16 %v1086, %v1083
      %v1117 = vpack.c.b16 %v1090, %v1087
      %v1118 = vpack.c.b16 %v1091, %v1088
      %v1119 = vpack.c.b16 %v1092, %v1089
      %v1120 = vpack.c.b16 %v1096, %v1093
      %v1121 = vpack.c.b16 %v1097, %v1094
      %v1122 = vpack.c.b16 %v1098, %v1095
      %1147 = vmatprep.subr.bf16.mxu0 %v1121
      %1148 = vmatpush1.bf16.msra.mxu0 %v1120
      %1149 = vmatprep.subr.bf16.mxu0 %v1118
      %1150 = vmatpush1.bf16.msra.mxu0 %v1117
      %1151 = vmatprep.subr.bf16.mxu0 %v1115
      %1152 = vmatpush1.bf16.msra.mxu0 %v1114
      %1153 = vmatprep.subr.bf16.mxu0 %v1112
      %1154 = vmatpush1.bf16.msra.mxu0 %v1111
      %1155 = vmatprep.subr.bf16.mxu0 %v1109
      %1156 = vmatpush1.bf16.msra.mxu0 %v1108
      %1157 = vmatprep.subr.bf16.mxu0 %v1106
      %1158 = vmatpush1.bf16.msra.mxu0 %v1105
      %1159 = vmatprep.subr.bf16.mxu0 %v1103
      %1160 = vmatpush1.bf16.msra.mxu0 %v1102
      %1161 = vmatprep.subr.bf16.mxu0 %v1100
      %1162 = vmatpush1.bf16.msra.mxu0 %v1099
      %1163 = vmatprep.subr.bf16.mxu0 0
      %1164 = vmatpush2.bf16.msra.mxu0 0
      %1165 = vmatprep.subr.bf16.mxu0 0
      %1166 = vmatpush2.bf16.msra.mxu0 0
      %1167 = vmatprep.subr.bf16.mxu0 0
      %1168 = vmatpush2.bf16.msra.mxu0 0
      %1169 = vmatprep.subr.bf16.mxu0 0
      %1170 = vmatpush2.bf16.msra.mxu0 0
      %1171 = vmatprep.subr.bf16.mxu0 0
      %1172 = vmatpush2.bf16.msra.mxu0 0
      %1173 = vmatprep.subr.bf16.mxu0 0
      %1174 = vmatpush2.bf16.msra.mxu0 0
      %1175 = vmatprep.subr.bf16.mxu0 0
      %1176 = vmatpush2.bf16.msra.mxu0 0
      %1177 = vmatprep.subr.bf16.mxu0 0
      %1178 = vmatpush2.bf16.msra.mxu0 0
      %1179 = vmatprep.mubr.bf16.mxu0 0
      %1180 = vmatmul.mubr.bf16.gmra.mxu0 %v1018
      %v1181 = vpop.f32.mrf.mxu0
      %v1182 = vadd.f32 %v968, %v1181
      %v1183 = vpop.f32.mrf.mxu0
      %v1184 = vadd.f32 %v972, %v1183
      %v1185 = vpop.f32.mrf.mxu0
      %v1186 = vadd.f32 %v968, %v1185
      %v1187 = vpop.f32.mrf.mxu0
      %v1188 = vadd.f32 %v972, %v1187
      %1189 = vdwg.mxu0
      %1190 = vmatprep.subr.bf16.mxu0 0
      %1191 = vmatpush1.bf16.msra.mxu0 %v1122
      %1192 = vmatprep.subr.bf16.mxu0 0
      %1193 = vmatpush1.bf16.msra.mxu0 %v1119
      %1194 = vmatprep.subr.bf16.mxu0 0
      %1195 = vmatpush1.bf16.msra.mxu0 %v1116
      %1196 = vmatprep.subr.bf16.mxu0 0
      %1197 = vmatpush1.bf16.msra.mxu0 %v1113
      %1198 = vmatprep.subr.bf16.mxu0 0
      %1199 = vmatpush1.bf16.msra.mxu0 %v1110
      %1200 = vmatprep.subr.bf16.mxu0 0
      %1201 = vmatpush1.bf16.msra.mxu0 %v1107
      %1202 = vmatprep.subr.bf16.mxu0 0
      %1203 = vmatpush1.bf16.msra.mxu0 %v1104
      %1204 = vmatprep.subr.bf16.mxu0 0
      %1205 = vmatpush1.bf16.msra.mxu0 %v1101
      %1206 = vmatprep.subr.bf16.mxu0 0
      %1207 = vmatpush2.bf16.msra.mxu0 0
      %1208 = vmatprep.subr.bf16.mxu0 0
      %1209 = vmatpush2.bf16.msra.mxu0 0
      %1210 = vmatprep.subr.bf16.mxu0 0
      %1211 = vmatpush2.bf16.msra.mxu0 0
      %1212 = vmatprep.subr.bf16.mxu0 0
      %1213 = vmatpush2.bf16.msra.mxu0 0
      %1214 = vmatprep.subr.bf16.mxu0 0
      %1215 = vmatpush2.bf16.msra.mxu0 0
      %1216 = vmatprep.subr.bf16.mxu0 0
      %1217 = vmatpush2.bf16.msra.mxu0 0
      %1218 = vmatprep.subr.bf16.mxu0 0
      %1219 = vmatpush2.bf16.msra.mxu0 0
      %1220 = vmatprep.subr.bf16.mxu0 0
      %1221 = vmatpush2.bf16.msra.mxu0 0
      %1222 = vmatprep.mubr.bf16.mxu0 0
      %1223 = vmatmul.mubr.bf16.gmra.mxu0 %v1018
      %v1224 = vpop.f32.mrf.mxu0
      %v1225 = vadd.f32 %v976, %v1224
      %v1226 = vpop.f32.mrf.mxu0
      %v1227 = vpop.f32.mrf.mxu0
      %v1228 = vadd.f32 %v976, %v1227
      %v1229 = vpop.f32.mrf.mxu0
      %1230 = vdwg.mxu0
      %v1231 = vunpack.c.l.bf16 %v1014
      %v1232 = vunpack.c.l.bf16 %v1016
      %v1233 = vadd.f32 %v1231, %v1182
      %v1234 = vadd.f32 %v1232, %v1186
      %v1235 = vxor.u32 %v1233, 2147483648
      %v1236 = vxor.u32 %v1234, 2147483648
      %v1237 = vmul.f32 %v1235, 1.442695
      %v1238 = vpow.pop %v1237
      %v1239 = vmul.f32 %v1236, 1.442695
      %v1240 = vpow.pop %v1239
      %v1241 = vadd.f32 %v1238, 1.0
      %v1242 = vadd.f32 %v1240, 1.0
      %v1243 = vrcp.pop %v1241
      %v1244 = vmul.f32 1.0, %v1243
      %v1245 = vrcp.pop %v1242
      %v1246 = vmul.f32 1.0, %v1245
      %v1249 = vrot.slane %v1014, 4
      %v1250 = vrot.slane %v1016, 4
      %v1253 = vunpack.c.l.bf16 %v1249
      %v1254 = vunpack.c.l.bf16 %v1250
      %v1255 = vadd.f32 %v1253, %v1184
      %v1256 = vadd.f32 %v1254, %v1188
      %v1257 = vxor.u32 %v1255, 2147483648
      %v1258 = vxor.u32 %v1256, 2147483648
      %v1259 = vmul.f32 %v1257, 1.442695
      %v1260 = vpow.pop %v1259
      %v1261 = vmul.f32 %v1258, 1.442695
      %v1262 = vpow.pop %v1261
      %v1263 = vadd.f32 %v1260, 1.0
      %v1264 = vadd.f32 %v1262, 1.0
      %v1265 = vrcp.pop %v1263
      %v1266 = vmul.f32 1.0, %v1265
      %v1267 = vrcp.pop %v1264
      %v1268 = vmul.f32 1.0, %v1267
      %v1269 = vmul.f32 %v1244, %v1225
      %v1270 = vmul.f32 %v1246, %v1228
      %v1271 = vunpack.c.l.bf16 %v1015
      %v1272 = vunpack.c.l.bf16 %v1017
      %v1273 = vadd.f32 %v1271, %v1269
      %v1274 = vadd.f32 %v1272, %v1270
      %v1275 = vtanh.pop %v1273
      %v1276 = vtanh.pop %v1274
      %v1277 = vsub.f32 %v1012, %v1275
      %v1278 = vsub.f32 %v1013, %v1276
      %v1279 = vmul.f32 %v1266, %v1277
      %v1280 = vmul.f32 %v1268, %v1278
      %v1281 = vadd.f32 %v1275, %v1279
      %v1282 = vadd.f32 %v1276, %v1280
      %v1283 = vpack.c.bf16 %v1282, %v1281
      %v1285 = vunpack.c.l.b16 %v1283
      %v1286 = vunpack.c.h.b16 %v1283
      %v1287 = vpack.c.b16 %v1285, %v1285
      %v1288 = vpack.c.b16 %v1286, %v1286
      %1291 = vst [vmem:[%s304] sm:$0xf] %v1287
      %1292 = vst [vmem:[%s304 + $0x4] sm:$0xf] %v1288
      %s1293 = scalar_lea.vmem [#allocation2], 24
      %v1294 = vld [vmem:[%s1293] sm:$0xff]
      %v1295 = vld [vmem:[%s1293 + $0x8] sm:$0xf]
      %v1296 = vld [vmem:[%s1293 + $0xc] sm:$0xff]
      %v1297 = vld [vmem:[%s1293 + $0x14] sm:$0xf]
      %1298 = vmatprep.subr.bf16.mxu0 %v1121
      %1299 = vmatpush1.bf16.msra.mxu0 %v1120
      %1300 = vmatprep.subr.bf16.mxu0 %v1118
      %1301 = vmatpush1.bf16.msra.mxu0 %v1117
      %1302 = vmatprep.subr.bf16.mxu0 %v1115
      %1303 = vmatpush1.bf16.msra.mxu0 %v1114
      %1304 = vmatprep.subr.bf16.mxu0 %v1112
      %1305 = vmatpush1.bf16.msra.mxu0 %v1111
      %1306 = vmatprep.subr.bf16.mxu0 %v1109
      %1307 = vmatpush1.bf16.msra.mxu0 %v1108
      %1308 = vmatprep.subr.bf16.mxu0 %v1106
      %1309 = vmatpush1.bf16.msra.mxu0 %v1105
      %1310 = vmatprep.subr.bf16.mxu0 %v1103
      %1311 = vmatpush1.bf16.msra.mxu0 %v1102
      %1312 = vmatprep.subr.bf16.mxu0 %v1100
      %1313 = vmatpush1.bf16.msra.mxu0 %v1099
      %1314 = vmatprep.subr.bf16.mxu0 0
      %1315 = vmatpush2.bf16.msra.mxu0 0
      %1316 = vmatprep.subr.bf16.mxu0 0
      %1317 = vmatpush2.bf16.msra.mxu0 0
      %1318 = vmatprep.subr.bf16.mxu0 0
      %1319 = vmatpush2.bf16.msra.mxu0 0
      %1320 = vmatprep.subr.bf16.mxu0 0
      %1321 = vmatpush2.bf16.msra.mxu0 0
      %1322 = vmatprep.subr.bf16.mxu0 0
      %1323 = vmatpush2.bf16.msra.mxu0 0
      %1324 = vmatprep.subr.bf16.mxu0 0
      %1325 = vmatpush2.bf16.msra.mxu0 0
      %1326 = vmatprep.subr.bf16.mxu0 0
      %1327 = vmatpush2.bf16.msra.mxu0 0
      %1328 = vmatprep.subr.bf16.mxu0 0
      %1329 = vmatpush2.bf16.msra.mxu0 0
      %1330 = vmatprep.mubr.bf16.mxu0 0
      %1331 = vmatmul.mubr.bf16.gmra.mxu0 %v1283
      %v1332 = vpop.f32.mrf.mxu0
      %v1333 = vadd.f32 %v968, %v1332
      %v1334 = vpop.f32.mrf.mxu0
      %v1335 = vadd.f32 %v972, %v1334
      %v1336 = vpop.f32.mrf.mxu0
      %v1337 = vadd.f32 %v968, %v1336
      %v1338 = vpop.f32.mrf.mxu0
      %v1339 = vadd.f32 %v972, %v1338
      %1340 = vdwg.mxu0
      %1341 = vmatprep.subr.bf16.mxu0 0
      %1342 = vmatpush1.bf16.msra.mxu0 %v1122
      %1343 = vmatprep.subr.bf16.mxu0 0
      %1344 = vmatpush1.bf16.msra.mxu0 %v1119
      %1345 = vmatprep.subr.bf16.mxu0 0
      %1346 = vmatpush1.bf16.msra.mxu0 %v1116
      %1347 = vmatprep.subr.bf16.mxu0 0
      %1348 = vmatpush1.bf16.msra.mxu0 %v1113
      %1349 = vmatprep.subr.bf16.mxu0 0
      %1350 = vmatpush1.bf16.msra.mxu0 %v1110
      %1351 = vmatprep.subr.bf16.mxu0 0
      %1352 = vmatpush1.bf16.msra.mxu0 %v1107
      %1353 = vmatprep.subr.bf16.mxu0 0
      %1354 = vmatpush1.bf16.msra.mxu0 %v1104
      %1355 = vmatprep.subr.bf16.mxu0 0
      %1356 = vmatpush1.bf16.msra.mxu0 %v1101
      %1357 = vmatprep.subr.bf16.mxu0 0
      %1358 = vmatpush2.bf16.msra.mxu0 0
      %1359 = vmatprep.subr.bf16.mxu0 0
      %1360 = vmatpush2.bf16.msra.mxu0 0
      %1361 = vmatprep.subr.bf16.mxu0 0
      %1362 = vmatpush2.bf16.msra.mxu0 0
      %1363 = vmatprep.subr.bf16.mxu0 0
      %1364 = vmatpush2.bf16.msra.mxu0 0
      %1365 = vmatprep.subr.bf16.mxu0 0
      %1366 = vmatpush2.bf16.msra.mxu0 0
      %1367 = vmatprep.subr.bf16.mxu0 0
      %1368 = vmatpush2.bf16.msra.mxu0 0
      %1369 = vmatprep.subr.bf16.mxu0 0
      %1370 = vmatpush2.bf16.msra.mxu0 0
      %1371 = vmatprep.subr.bf16.mxu0 0
      %1372 = vmatpush2.bf16.msra.mxu0 0
      %1373 = vmatprep.mubr.bf16.mxu0 0
      %1374 = vmatmul.mubr.bf16.gmra.mxu0 %v1283
      %v1375 = vpop.f32.mrf.mxu0
      %v1376 = vadd.f32 %v976, %v1375
      %v1377 = vpop.f32.mrf.mxu0
      %v1378 = vpop.f32.mrf.mxu0
      %v1379 = vadd.f32 %v976, %v1378
      %v1380 = vpop.f32.mrf.mxu0
      %1381 = vdwg.mxu0
      %v1382 = vunpack.c.l.bf16 %v1294
      %v1383 = vunpack.c.l.bf16 %v1296
      %v1384 = vadd.f32 %v1382, %v1333
      %v1385 = vadd.f32 %v1383, %v1337
      %v1386 = vxor.u32 %v1384, 2147483648
      %v1387 = vxor.u32 %v1385, 2147483648
      %v1388 = vmul.f32 %v1386, 1.442695
      %v1389 = vpow.pop %v1388
      %v1390 = vmul.f32 %v1387, 1.442695
      %v1391 = vpow.pop %v1390
      %v1392 = vadd.f32 %v1389, 1.0
      %v1393 = vadd.f32 %v1391, 1.0
      %v1394 = vrcp.pop %v1392
      %v1395 = vmul.f32 1.0, %v1394
      %v1396 = vrcp.pop %v1393
      %v1397 = vmul.f32 1.0, %v1396
      %v1400 = vrot.slane %v1294, 4
      %v1401 = vrot.slane %v1296, 4
      %v1404 = vunpack.c.l.bf16 %v1400
      %v1405 = vunpack.c.l.bf16 %v1401
      %v1406 = vadd.f32 %v1404, %v1335
      %v1407 = vadd.f32 %v1405, %v1339
      %v1408 = vxor.u32 %v1406, 2147483648
      %v1409 = vxor.u32 %v1407, 2147483648
      %v1410 = vmul.f32 %v1408, 1.442695
      %v1411 = vpow.pop %v1410
      %v1412 = vmul.f32 %v1409, 1.442695
      %v1413 = vpow.pop %v1412
      %v1414 = vadd.f32 %v1411, 1.0
      %v1415 = vadd.f32 %v1413, 1.0
      %v1416 = vrcp.pop %v1414
      %v1417 = vmul.f32 1.0, %v1416
      %v1418 = vrcp.pop %v1415
      %v1419 = vmul.f32 1.0, %v1418
      %v1420 = vmul.f32 %v1395, %v1376
      %v1421 = vmul.f32 %v1397, %v1379
      %v1422 = vunpack.c.l.bf16 %v1295
      %v1423 = vunpack.c.l.bf16 %v1297
      %v1424 = vadd.f32 %v1422, %v1420
      %v1425 = vadd.f32 %v1423, %v1421
      %v1426 = vtanh.pop %v1424
      %v1427 = vtanh.pop %v1425
      %v1428 = vsub.f32 %v1281, %v1426
      %v1429 = vsub.f32 %v1282, %v1427
      %v1430 = vmul.f32 %v1417, %v1428
      %v1431 = vmul.f32 %v1419, %v1429
      %v1432 = vadd.f32 %v1426, %v1430
      %v1433 = vadd.f32 %v1427, %v1431
      %v1434 = vpack.c.bf16 %v1433, %v1432
      %v1436 = vunpack.c.l.b16 %v1434
      %v1437 = vunpack.c.h.b16 %v1434
      %v1438 = vpack.c.b16 %v1436, %v1436
      %v1439 = vpack.c.b16 %v1437, %v1437
      %s1442 = scalar_lea.vmem %s304, 8
      %1443 = vst [vmem:[%s1442] sm:$0xf] %v1438
      %1444 = vst [vmem:[%s1442 + $0x4] sm:$0xf] %v1439
      %s1445 = scalar_lea.vmem [#allocation2], 48
      %v1446 = vld [vmem:[%s1445] sm:$0xff]
      %v1447 = vld [vmem:[%s1445 + $0x8] sm:$0xf]
      %v1448 = vld [vmem:[%s1445 + $0xc] sm:$0xff]
      %v1449 = vld [vmem:[%s1445 + $0x14] sm:$0xf]
      %1450 = vmatprep.subr.bf16.mxu0 %v1121
      %1451 = vmatpush1.bf16.msra.mxu0 %v1120
      %1452 = vmatprep.subr.bf16.mxu0 %v1118
      %1453 = vmatpush1.bf16.msra.mxu0 %v1117
      %1454 = vmatprep.subr.bf16.mxu0 %v1115
      %1455 = vmatpush1.bf16.msra.mxu0 %v1114
      %1456 = vmatprep.subr.bf16.mxu0 %v1112
      %1457 = vmatpush1.bf16.msra.mxu0 %v1111
      %1458 = vmatprep.subr.bf16.mxu0 %v1109
      %1459 = vmatpush1.bf16.msra.mxu0 %v1108
      %1460 = vmatprep.subr.bf16.mxu0 %v1106
      %1461 = vmatpush1.bf16.msra.mxu0 %v1105
      %1462 = vmatprep.subr.bf16.mxu0 %v1103
      %1463 = vmatpush1.bf16.msra.mxu0 %v1102
      %1464 = vmatprep.subr.bf16.mxu0 %v1100
      %1465 = vmatpush1.bf16.msra.mxu0 %v1099
      %1466 = vmatprep.subr.bf16.mxu0 0
      %1467 = vmatpush2.bf16.msra.mxu0 0
      %1468 = vmatprep.subr.bf16.mxu0 0
      %1469 = vmatpush2.bf16.msra.mxu0 0
      %1470 = vmatprep.subr.bf16.mxu0 0
      %1471 = vmatpush2.bf16.msra.mxu0 0
      %1472 = vmatprep.subr.bf16.mxu0 0
      %1473 = vmatpush2.bf16.msra.mxu0 0
      %1474 = vmatprep.subr.bf16.mxu0 0
      %1475 = vmatpush2.bf16.msra.mxu0 0
      %1476 = vmatprep.subr.bf16.mxu0 0
      %1477 = vmatpush2.bf16.msra.mxu0 0
      %1478 = vmatprep.subr.bf16.mxu0 0
      %1479 = vmatpush2.bf16.msra.mxu0 0
      %1480 = vmatprep.subr.bf16.mxu0 0
      %1481 = vmatpush2.bf16.msra.mxu0 0
      %1482 = vmatprep.mubr.bf16.mxu0 0
      %1483 = vmatmul.mubr.bf16.gmra.mxu0 %v1434
      %v1484 = vpop.f32.mrf.mxu0
      %v1485 = vadd.f32 %v968, %v1484
      %v1486 = vpop.f32.mrf.mxu0
      %v1487 = vadd.f32 %v972, %v1486
      %v1488 = vpop.f32.mrf.mxu0
      %v1489 = vadd.f32 %v968, %v1488
      %v1490 = vpop.f32.mrf.mxu0
      %v1491 = vadd.f32 %v972, %v1490
      %1492 = vdwg.mxu0
      %1493 = vmatprep.subr.bf16.mxu0 0
      %1494 = vmatpush1.bf16.msra.mxu0 %v1122
      %1495 = vmatprep.subr.bf16.mxu0 0
      %1496 = vmatpush1.bf16.msra.mxu0 %v1119
      %1497 = vmatprep.subr.bf16.mxu0 0
      %1498 = vmatpush1.bf16.msra.mxu0 %v1116
      %1499 = vmatprep.subr.bf16.mxu0 0
      %1500 = vmatpush1.bf16.msra.mxu0 %v1113
      %1501 = vmatprep.subr.bf16.mxu0 0
      %1502 = vmatpush1.bf16.msra.mxu0 %v1110
      %1503 = vmatprep.subr.bf16.mxu0 0
      %1504 = vmatpush1.bf16.msra.mxu0 %v1107
      %1505 = vmatprep.subr.bf16.mxu0 0
      %1506 = vmatpush1.bf16.msra.mxu0 %v1104
      %1507 = vmatprep.subr.bf16.mxu0 0
      %1508 = vmatpush1.bf16.msra.mxu0 %v1101
      %1509 = vmatprep.subr.bf16.mxu0 0
      %1510 = vmatpush2.bf16.msra.mxu0 0
      %1511 = vmatprep.subr.bf16.mxu0 0
      %1512 = vmatpush2.bf16.msra.mxu0 0
      %1513 = vmatprep.subr.bf16.mxu0 0
      %1514 = vmatpush2.bf16.msra.mxu0 0
      %1515 = vmatprep.subr.bf16.mxu0 0
      %1516 = vmatpush2.bf16.msra.mxu0 0
      %1517 = vmatprep.subr.bf16.mxu0 0
      %1518 = vmatpush2.bf16.msra.mxu0 0
      %1519 = vmatprep.subr.bf16.mxu0 0
      %1520 = vmatpush2.bf16.msra.mxu0 0
      %1521 = vmatprep.subr.bf16.mxu0 0
      %1522 = vmatpush2.bf16.msra.mxu0 0
      %1523 = vmatprep.subr.bf16.mxu0 0
      %1524 = vmatpush2.bf16.msra.mxu0 0
      %1525 = vmatprep.mubr.bf16.mxu0 0
      %1526 = vmatmul.mubr.bf16.gmra.mxu0 %v1434
      %v1527 = vpop.f32.mrf.mxu0
      %v1528 = vadd.f32 %v976, %v1527
      %v1529 = vpop.f32.mrf.mxu0
      %v1530 = vpop.f32.mrf.mxu0
      %v1531 = vadd.f32 %v976, %v1530
      %v1532 = vpop.f32.mrf.mxu0
      %1533 = vdwg.mxu0
      %v1534 = vunpack.c.l.bf16 %v1446
      %v1535 = vunpack.c.l.bf16 %v1448
      %v1536 = vadd.f32 %v1534, %v1485
      %v1537 = vadd.f32 %v1535, %v1489
      %v1538 = vxor.u32 %v1536, 2147483648
      %v1539 = vxor.u32 %v1537, 2147483648
      %v1540 = vmul.f32 %v1538, 1.442695
      %v1541 = vpow.pop %v1540
      %v1542 = vmul.f32 %v1539, 1.442695
      %v1543 = vpow.pop %v1542
      %v1544 = vadd.f32 %v1541, 1.0
      %v1545 = vadd.f32 %v1543, 1.0
      %v1546 = vrcp.pop %v1544
      %v1547 = vmul.f32 1.0, %v1546
      %v1548 = vrcp.pop %v1545
      %v1549 = vmul.f32 1.0, %v1548
      %v1552 = vrot.slane %v1446, 4
      %v1553 = vrot.slane %v1448, 4
      %v1556 = vunpack.c.l.bf16 %v1552
      %v1557 = vunpack.c.l.bf16 %v1553
      %v1558 = vadd.f32 %v1556, %v1487
      %v1559 = vadd.f32 %v1557, %v1491
      %v1560 = vxor.u32 %v1558, 2147483648
      %v1561 = vxor.u32 %v1559, 2147483648
      %v1562 = vmul.f32 %v1560, 1.442695
      %v1563 = vpow.pop %v1562
      %v1564 = vmul.f32 %v1561, 1.442695
      %v1565 = vpow.pop %v1564
      %v1566 = vadd.f32 %v1563, 1.0
      %v1567 = vadd.f32 %v1565, 1.0
      %v1568 = vrcp.pop %v1566
      %v1569 = vmul.f32 1.0, %v1568
      %v1570 = vrcp.pop %v1567
      %v1571 = vmul.f32 1.0, %v1570
      %v1572 = vmul.f32 %v1547, %v1528
      %v1573 = vmul.f32 %v1549, %v1531
      %v1574 = vunpack.c.l.bf16 %v1447
      %v1575 = vunpack.c.l.bf16 %v1449
      %v1576 = vadd.f32 %v1574, %v1572
      %v1577 = vadd.f32 %v1575, %v1573
      %v1578 = vtanh.pop %v1576
      %v1579 = vtanh.pop %v1577
      %v1580 = vsub.f32 %v1432, %v1578
      %v1581 = vsub.f32 %v1433, %v1579
      %v1582 = vmul.f32 %v1569, %v1580
      %v1583 = vmul.f32 %v1571, %v1581
      %v1584 = vadd.f32 %v1578, %v1582
      %v1585 = vadd.f32 %v1579, %v1583
      %v1586 = vpack.c.bf16 %v1585, %v1584
      %v1588 = vunpack.c.l.b16 %v1586
      %v1589 = vunpack.c.h.b16 %v1586
      %v1590 = vpack.c.b16 %v1588, %v1588
      %v1591 = vpack.c.b16 %v1589, %v1589
      %s1594 = scalar_lea.vmem %s304, 16
      %1595 = vst [vmem:[%s1594] sm:$0xf] %v1590
      %1596 = vst [vmem:[%s1594 + $0x4] sm:$0xf] %v1591
      %s1597 = scalar_lea.vmem [#allocation2], 72
      %v1598 = vld [vmem:[%s1597] sm:$0xff]
      %v1599 = vld [vmem:[%s1597 + $0x8] sm:$0xf]
      %v1600 = vld [vmem:[%s1597 + $0xc] sm:$0xff]
      %v1601 = vld [vmem:[%s1597 + $0x14] sm:$0xf]
      %1602 = vmatprep.subr.bf16.mxu0 %v1121
      %1603 = vmatpush1.bf16.msra.mxu0 %v1120
      %1604 = vmatprep.subr.bf16.mxu0 %v1118
      %1605 = vmatpush1.bf16.msra.mxu0 %v1117
      %1606 = vmatprep.subr.bf16.mxu0 %v1115
      %1607 = vmatpush1.bf16.msra.mxu0 %v1114
      %1608 = vmatprep.subr.bf16.mxu0 %v1112
      %1609 = vmatpush1.bf16.msra.mxu0 %v1111
      %1610 = vmatprep.subr.bf16.mxu0 %v1109
      %1611 = vmatpush1.bf16.msra.mxu0 %v1108
      %1612 = vmatprep.subr.bf16.mxu0 %v1106
      %1613 = vmatpush1.bf16.msra.mxu0 %v1105
      %1614 = vmatprep.subr.bf16.mxu0 %v1103
      %1615 = vmatpush1.bf16.msra.mxu0 %v1102
      %1616 = vmatprep.subr.bf16.mxu0 %v1100
      %1617 = vmatpush1.bf16.msra.mxu0 %v1099
      %1618 = vmatprep.subr.bf16.mxu0 0
      %1619 = vmatpush2.bf16.msra.mxu0 0
      %1620 = vmatprep.subr.bf16.mxu0 0
      %1621 = vmatpush2.bf16.msra.mxu0 0
      %1622 = vmatprep.subr.bf16.mxu0 0
      %1623 = vmatpush2.bf16.msra.mxu0 0
      %1624 = vmatprep.subr.bf16.mxu0 0
      %1625 = vmatpush2.bf16.msra.mxu0 0
      %1626 = vmatprep.subr.bf16.mxu0 0
      %1627 = vmatpush2.bf16.msra.mxu0 0
      %1628 = vmatprep.subr.bf16.mxu0 0
      %1629 = vmatpush2.bf16.msra.mxu0 0
      %1630 = vmatprep.subr.bf16.mxu0 0
      %1631 = vmatpush2.bf16.msra.mxu0 0
      %1632 = vmatprep.subr.bf16.mxu0 0
      %1633 = vmatpush2.bf16.msra.mxu0 0
      %1634 = vmatprep.mubr.bf16.mxu0 0
      %1635 = vmatmul.mubr.bf16.gmra.mxu0 %v1586
      %v1636 = vpop.f32.mrf.mxu0
      %v1637 = vadd.f32 %v968, %v1636
      %v1638 = vpop.f32.mrf.mxu0
      %v1639 = vadd.f32 %v972, %v1638
      %v1640 = vpop.f32.mrf.mxu0
      %v1641 = vadd.f32 %v968, %v1640
      %v1642 = vpop.f32.mrf.mxu0
      %v1643 = vadd.f32 %v972, %v1642
      %1644 = vdwg.mxu0
      %1645 = vmatprep.subr.bf16.mxu0 0
      %1646 = vmatpush1.bf16.msra.mxu0 %v1122
      %1647 = vmatprep.subr.bf16.mxu0 0
      %1648 = vmatpush1.bf16.msra.mxu0 %v1119
      %1649 = vmatprep.subr.bf16.mxu0 0
      %1650 = vmatpush1.bf16.msra.mxu0 %v1116
      %1651 = vmatprep.subr.bf16.mxu0 0
      %1652 = vmatpush1.bf16.msra.mxu0 %v1113
      %1653 = vmatprep.subr.bf16.mxu0 0
      %1654 = vmatpush1.bf16.msra.mxu0 %v1110
      %1655 = vmatprep.subr.bf16.mxu0 0
      %1656 = vmatpush1.bf16.msra.mxu0 %v1107
      %1657 = vmatprep.subr.bf16.mxu0 0
      %1658 = vmatpush1.bf16.msra.mxu0 %v1104
      %1659 = vmatprep.subr.bf16.mxu0 0
      %1660 = vmatpush1.bf16.msra.mxu0 %v1101
      %1661 = vmatprep.subr.bf16.mxu0 0
      %1662 = vmatpush2.bf16.msra.mxu0 0
      %1663 = vmatprep.subr.bf16.mxu0 0
      %1664 = vmatpush2.bf16.msra.mxu0 0
      %1665 = vmatprep.subr.bf16.mxu0 0
      %1666 = vmatpush2.bf16.msra.mxu0 0
      %1667 = vmatprep.subr.bf16.mxu0 0
      %1668 = vmatpush2.bf16.msra.mxu0 0
      %1669 = vmatprep.subr.bf16.mxu0 0
      %1670 = vmatpush2.bf16.msra.mxu0 0
      %1671 = vmatprep.subr.bf16.mxu0 0
      %1672 = vmatpush2.bf16.msra.mxu0 0
      %1673 = vmatprep.subr.bf16.mxu0 0
      %1674 = vmatpush2.bf16.msra.mxu0 0
      %1675 = vmatprep.subr.bf16.mxu0 0
      %1676 = vmatpush2.bf16.msra.mxu0 0
      %1677 = vmatprep.mubr.bf16.mxu0 0
      %1678 = vmatmul.mubr.bf16.gmra.mxu0 %v1586
      %v1679 = vpop.f32.mrf.mxu0
      %v1680 = vadd.f32 %v976, %v1679
      %v1681 = vpop.f32.mrf.mxu0
      %v1682 = vpop.f32.mrf.mxu0
      %v1683 = vadd.f32 %v976, %v1682
      %v1684 = vpop.f32.mrf.mxu0
      %1685 = vdwg.mxu0
      %v1686 = vunpack.c.l.bf16 %v1598
      %v1687 = vunpack.c.l.bf16 %v1600
      %v1688 = vadd.f32 %v1686, %v1637
      %v1689 = vadd.f32 %v1687, %v1641
      %v1690 = vxor.u32 %v1688, 2147483648
      %v1691 = vxor.u32 %v1689, 2147483648
      %v1692 = vmul.f32 %v1690, 1.442695
      %v1693 = vpow.pop %v1692
      %v1694 = vmul.f32 %v1691, 1.442695
      %v1695 = vpow.pop %v1694
      %v1696 = vadd.f32 %v1693, 1.0
      %v1697 = vadd.f32 %v1695, 1.0
      %v1698 = vrcp.pop %v1696
      %v1699 = vmul.f32 1.0, %v1698
      %v1700 = vrcp.pop %v1697
      %v1701 = vmul.f32 1.0, %v1700
      %v1704 = vrot.slane %v1598, 4
      %v1705 = vrot.slane %v1600, 4
      %v1708 = vunpack.c.l.bf16 %v1704
      %v1709 = vunpack.c.l.bf16 %v1705
      %v1710 = vadd.f32 %v1708, %v1639
      %v1711 = vadd.f32 %v1709, %v1643
      %v1712 = vxor.u32 %v1710, 2147483648
      %v1713 = vxor.u32 %v1711, 2147483648
      %v1714 = vmul.f32 %v1712, 1.442695
      %v1715 = vpow.pop %v1714
      %v1716 = vmul.f32 %v1713, 1.442695
      %v1717 = vpow.pop %v1716
      %v1718 = vadd.f32 %v1715, 1.0
      %v1719 = vadd.f32 %v1717, 1.0
      %v1720 = vrcp.pop %v1718
      %v1721 = vmul.f32 1.0, %v1720
      %v1722 = vrcp.pop %v1719
      %v1723 = vmul.f32 1.0, %v1722
      %v1724 = vmul.f32 %v1699, %v1680
      %v1725 = vmul.f32 %v1701, %v1683
      %v1726 = vunpack.c.l.bf16 %v1599
      %v1727 = vunpack.c.l.bf16 %v1601
      %v1728 = vadd.f32 %v1726, %v1724
      %v1729 = vadd.f32 %v1727, %v1725
      %v1730 = vtanh.pop %v1728
      %v1731 = vtanh.pop %v1729
      %v1732 = vsub.f32 %v1584, %v1730
      %v1733 = vsub.f32 %v1585, %v1731
      %v1734 = vmul.f32 %v1721, %v1732
      %v1735 = vmul.f32 %v1723, %v1733
      %v1736 = vadd.f32 %v1730, %v1734
      %v1737 = vadd.f32 %v1731, %v1735
      %v1738 = vpack.c.bf16 %v1737, %v1736
      %v1740 = vunpack.c.l.b16 %v1738
      %v1741 = vunpack.c.h.b16 %v1738
      %v1742 = vpack.c.b16 %v1740, %v1740
      %v1743 = vpack.c.b16 %v1741, %v1741
      %s1746 = scalar_lea.vmem %s304, 24
      %1747 = vst [vmem:[%s1746] sm:$0xf] %v1742
      %1748 = vst [vmem:[%s1746 + $0x4] sm:$0xf] %v1743
      %s1749 = scalar_lea.vmem [#allocation2], 96
      %v1750 = vld [vmem:[%s1749] sm:$0xff]
      %v1751 = vld [vmem:[%s1749 + $0x8] sm:$0xf]
      %v1752 = vld [vmem:[%s1749 + $0xc] sm:$0xff]
      %v1753 = vld [vmem:[%s1749 + $0x14] sm:$0xf]
      %1754 = vmatprep.subr.bf16.mxu0 %v1121
      %1755 = vmatpush1.bf16.msra.mxu0 %v1120
      %1756 = vmatprep.subr.bf16.mxu0 %v1118
      %1757 = vmatpush1.bf16.msra.mxu0 %v1117
      %1758 = vmatprep.subr.bf16.mxu0 %v1115
      %1759 = vmatpush1.bf16.msra.mxu0 %v1114
      %1760 = vmatprep.subr.bf16.mxu0 %v1112
      %1761 = vmatpush1.bf16.msra.mxu0 %v1111
      %1762 = vmatprep.subr.bf16.mxu0 %v1109
      %1763 = vmatpush1.bf16.msra.mxu0 %v1108
      %1764 = vmatprep.subr.bf16.mxu0 %v1106
      %1765 = vmatpush1.bf16.msra.mxu0 %v1105
      %1766 = vmatprep.subr.bf16.mxu0 %v1103
      %1767 = vmatpush1.bf16.msra.mxu0 %v1102
      %1768 = vmatprep.subr.bf16.mxu0 %v1100
      %1769 = vmatpush1.bf16.msra.mxu0 %v1099
      %1770 = vmatprep.subr.bf16.mxu0 0
      %1771 = vmatpush2.bf16.msra.mxu0 0
      %1772 = vmatprep.subr.bf16.mxu0 0
      %1773 = vmatpush2.bf16.msra.mxu0 0
      %1774 = vmatprep.subr.bf16.mxu0 0
      %1775 = vmatpush2.bf16.msra.mxu0 0
      %1776 = vmatprep.subr.bf16.mxu0 0
      %1777 = vmatpush2.bf16.msra.mxu0 0
      %1778 = vmatprep.subr.bf16.mxu0 0
      %1779 = vmatpush2.bf16.msra.mxu0 0
      %1780 = vmatprep.subr.bf16.mxu0 0
      %1781 = vmatpush2.bf16.msra.mxu0 0
      %1782 = vmatprep.subr.bf16.mxu0 0
      %1783 = vmatpush2.bf16.msra.mxu0 0
      %1784 = vmatprep.subr.bf16.mxu0 0
      %1785 = vmatpush2.bf16.msra.mxu0 0
      %1786 = vmatprep.mubr.bf16.mxu0 0
      %1787 = vmatmul.mubr.bf16.gmra.mxu0 %v1738
      %v1788 = vpop.f32.mrf.mxu0
      %v1789 = vadd.f32 %v968, %v1788
      %v1790 = vpop.f32.mrf.mxu0
      %v1791 = vadd.f32 %v972, %v1790
      %v1792 = vpop.f32.mrf.mxu0
      %v1793 = vadd.f32 %v968, %v1792
      %v1794 = vpop.f32.mrf.mxu0
      %v1795 = vadd.f32 %v972, %v1794
      %1796 = vdwg.mxu0
      %1797 = vmatprep.subr.bf16.mxu0 0
      %1798 = vmatpush1.bf16.msra.mxu0 %v1122
      %1799 = vmatprep.subr.bf16.mxu0 0
      %1800 = vmatpush1.bf16.msra.mxu0 %v1119
      %1801 = vmatprep.subr.bf16.mxu0 0
      %1802 = vmatpush1.bf16.msra.mxu0 %v1116
      %1803 = vmatprep.subr.bf16.mxu0 0
      %1804 = vmatpush1.bf16.msra.mxu0 %v1113
      %1805 = vmatprep.subr.bf16.mxu0 0
      %1806 = vmatpush1.bf16.msra.mxu0 %v1110
      %1807 = vmatprep.subr.bf16.mxu0 0
      %1808 = vmatpush1.bf16.msra.mxu0 %v1107
      %1809 = vmatprep.subr.bf16.mxu0 0
      %1810 = vmatpush1.bf16.msra.mxu0 %v1104
      %1811 = vmatprep.subr.bf16.mxu0 0
      %1812 = vmatpush1.bf16.msra.mxu0 %v1101
      %1813 = vmatprep.subr.bf16.mxu0 0
      %1814 = vmatpush2.bf16.msra.mxu0 0
      %1815 = vmatprep.subr.bf16.mxu0 0
      %1816 = vmatpush2.bf16.msra.mxu0 0
      %1817 = vmatprep.subr.bf16.mxu0 0
      %1818 = vmatpush2.bf16.msra.mxu0 0
      %1819 = vmatprep.subr.bf16.mxu0 0
      %1820 = vmatpush2.bf16.msra.mxu0 0
      %1821 = vmatprep.subr.bf16.mxu0 0
      %1822 = vmatpush2.bf16.msra.mxu0 0
      %1823 = vmatprep.subr.bf16.mxu0 0
      %1824 = vmatpush2.bf16.msra.mxu0 0
      %1825 = vmatprep.subr.bf16.mxu0 0
      %1826 = vmatpush2.bf16.msra.mxu0 0
      %1827 = vmatprep.subr.bf16.mxu0 0
      %1828 = vmatpush2.bf16.msra.mxu0 0
      %1829 = vmatprep.mubr.bf16.mxu0 0
      %1830 = vmatmul.mubr.bf16.gmra.mxu0 %v1738
      %v1831 = vpop.f32.mrf.mxu0
      %v1832 = vadd.f32 %v976, %v1831
      %v1833 = vpop.f32.mrf.mxu0
      %v1834 = vpop.f32.mrf.mxu0
      %v1835 = vadd.f32 %v976, %v1834
      %v1836 = vpop.f32.mrf.mxu0
      %1837 = vdwg.mxu0
      %v1838 = vunpack.c.l.bf16 %v1750
      %v1839 = vunpack.c.l.bf16 %v1752
      %v1840 = vadd.f32 %v1838, %v1789
      %v1841 = vadd.f32 %v1839, %v1793
      %v1842 = vxor.u32 %v1840, 2147483648
      %v1843 = vxor.u32 %v1841, 2147483648
      %v1844 = vmul.f32 %v1842, 1.442695
      %v1845 = vpow.pop %v1844
      %v1846 = vmul.f32 %v1843, 1.442695
      %v1847 = vpow.pop %v1846
      %v1848 = vadd.f32 %v1845, 1.0
      %v1849 = vadd.f32 %v1847, 1.0
      %v1850 = vrcp.pop %v1848
      %v1851 = vmul.f32 1.0, %v1850
      %v1852 = vrcp.pop %v1849
      %v1853 = vmul.f32 1.0, %v1852
      %v1856 = vrot.slane %v1750, 4
      %v1857 = vrot.slane %v1752, 4
      %v1860 = vunpack.c.l.bf16 %v1856
      %v1861 = vunpack.c.l.bf16 %v1857
      %v1862 = vadd.f32 %v1860, %v1791
      %v1863 = vadd.f32 %v1861, %v1795
      %v1864 = vxor.u32 %v1862, 2147483648
      %v1865 = vxor.u32 %v1863, 2147483648
      %v1866 = vmul.f32 %v1864, 1.442695
      %v1867 = vpow.pop %v1866
      %v1868 = vmul.f32 %v1865, 1.442695
      %v1869 = vpow.pop %v1868
      %v1870 = vadd.f32 %v1867, 1.0
      %v1871 = vadd.f32 %v1869, 1.0
      %v1872 = vrcp.pop %v1870
      %v1873 = vmul.f32 1.0, %v1872
      %v1874 = vrcp.pop %v1871
      %v1875 = vmul.f32 1.0, %v1874
      %v1876 = vmul.f32 %v1851, %v1832
      %v1877 = vmul.f32 %v1853, %v1835
      %v1878 = vunpack.c.l.bf16 %v1751
      %v1879 = vunpack.c.l.bf16 %v1753
      %v1880 = vadd.f32 %v1878, %v1876
      %v1881 = vadd.f32 %v1879, %v1877
      %v1882 = vtanh.pop %v1880
      %v1883 = vtanh.pop %v1881
      %v1884 = vsub.f32 %v1736, %v1882
      %v1885 = vsub.f32 %v1737, %v1883
      %v1886 = vmul.f32 %v1873, %v1884
      %v1887 = vmul.f32 %v1875, %v1885
      %v1888 = vadd.f32 %v1882, %v1886
      %v1889 = vadd.f32 %v1883, %v1887
      %v1890 = vpack.c.bf16 %v1889, %v1888
      %v1892 = vunpack.c.l.b16 %v1890
      %v1893 = vunpack.c.h.b16 %v1890
      %v1894 = vpack.c.b16 %v1892, %v1892
      %v1895 = vpack.c.b16 %v1893, %v1893
      %s1898 = scalar_lea.vmem %s304, 32
      %1899 = vst [vmem:[%s1898] sm:$0xf] %v1894
      %1900 = vst [vmem:[%s1898 + $0x4] sm:$0xf] %v1895
      %s1901 = scalar_lea.vmem [#allocation2], 120
      %v1902 = vld [vmem:[%s1901] sm:$0xff]
      %v1903 = vld [vmem:[%s1901 + $0x8] sm:$0xf]
      %v1904 = vld [vmem:[%s1901 + $0xc] sm:$0xff]
      %v1905 = vld [vmem:[%s1901 + $0x14] sm:$0xf]
      %1906 = vmatprep.subr.bf16.mxu0 %v1121
      %1907 = vmatpush1.bf16.msra.mxu0 %v1120
      %1908 = vmatprep.subr.bf16.mxu0 %v1118
      %1909 = vmatpush1.bf16.msra.mxu0 %v1117
      %1910 = vmatprep.subr.bf16.mxu0 %v1115
      %1911 = vmatpush1.bf16.msra.mxu0 %v1114
      %1912 = vmatprep.subr.bf16.mxu0 %v1112
      %1913 = vmatpush1.bf16.msra.mxu0 %v1111
      %1914 = vmatprep.subr.bf16.mxu0 %v1109
      %1915 = vmatpush1.bf16.msra.mxu0 %v1108
      %1916 = vmatprep.subr.bf16.mxu0 %v1106
      %1917 = vmatpush1.bf16.msra.mxu0 %v1105
      %1918 = vmatprep.subr.bf16.mxu0 %v1103
      %1919 = vmatpush1.bf16.msra.mxu0 %v1102
      %1920 = vmatprep.subr.bf16.mxu0 %v1100
      %1921 = vmatpush1.bf16.msra.mxu0 %v1099
      %1922 = vmatprep.subr.bf16.mxu0 0
      %1923 = vmatpush2.bf16.msra.mxu0 0
      %1924 = vmatprep.subr.bf16.mxu0 0
      %1925 = vmatpush2.bf16.msra.mxu0 0
      %1926 = vmatprep.subr.bf16.mxu0 0
      %1927 = vmatpush2.bf16.msra.mxu0 0
      %1928 = vmatprep.subr.bf16.mxu0 0
      %1929 = vmatpush2.bf16.msra.mxu0 0
      %1930 = vmatprep.subr.bf16.mxu0 0
      %1931 = vmatpush2.bf16.msra.mxu0 0
      %1932 = vmatprep.subr.bf16.mxu0 0
      %1933 = vmatpush2.bf16.msra.mxu0 0
      %1934 = vmatprep.subr.bf16.mxu0 0
      %1935 = vmatpush2.bf16.msra.mxu0 0
      %1936 = vmatprep.subr.bf16.mxu0 0
      %1937 = vmatpush2.bf16.msra.mxu0 0
      %1938 = vmatprep.mubr.bf16.mxu0 0
      %1939 = vmatmul.mubr.bf16.gmra.mxu0 %v1890
      %v1940 = vpop.f32.mrf.mxu0
      %v1941 = vadd.f32 %v968, %v1940
      %v1942 = vpop.f32.mrf.mxu0
      %v1943 = vadd.f32 %v972, %v1942
      %v1944 = vpop.f32.mrf.mxu0
      %v1945 = vadd.f32 %v968, %v1944
      %v1946 = vpop.f32.mrf.mxu0
      %v1947 = vadd.f32 %v972, %v1946
      %1948 = vdwg.mxu0
      %1949 = vmatprep.subr.bf16.mxu0 0
      %1950 = vmatpush1.bf16.msra.mxu0 %v1122
      %1951 = vmatprep.subr.bf16.mxu0 0
      %1952 = vmatpush1.bf16.msra.mxu0 %v1119
      %1953 = vmatprep.subr.bf16.mxu0 0
      %1954 = vmatpush1.bf16.msra.mxu0 %v1116
      %1955 = vmatprep.subr.bf16.mxu0 0
      %1956 = vmatpush1.bf16.msra.mxu0 %v1113
      %1957 = vmatprep.subr.bf16.mxu0 0
      %1958 = vmatpush1.bf16.msra.mxu0 %v1110
      %1959 = vmatprep.subr.bf16.mxu0 0
      %1960 = vmatpush1.bf16.msra.mxu0 %v1107
      %1961 = vmatprep.subr.bf16.mxu0 0
      %1962 = vmatpush1.bf16.msra.mxu0 %v1104
      %1963 = vmatprep.subr.bf16.mxu0 0
      %1964 = vmatpush1.bf16.msra.mxu0 %v1101
      %1965 = vmatprep.subr.bf16.mxu0 0
      %1966 = vmatpush2.bf16.msra.mxu0 0
      %1967 = vmatprep.subr.bf16.mxu0 0
      %1968 = vmatpush2.bf16.msra.mxu0 0
      %1969 = vmatprep.subr.bf16.mxu0 0
      %1970 = vmatpush2.bf16.msra.mxu0 0
      %1971 = vmatprep.subr.bf16.mxu0 0
      %1972 = vmatpush2.bf16.msra.mxu0 0
      %1973 = vmatprep.subr.bf16.mxu0 0
      %1974 = vmatpush2.bf16.msra.mxu0 0
      %1975 = vmatprep.subr.bf16.mxu0 0
      %1976 = vmatpush2.bf16.msra.mxu0 0
      %1977 = vmatprep.subr.bf16.mxu0 0
      %1978 = vmatpush2.bf16.msra.mxu0 0
      %1979 = vmatprep.subr.bf16.mxu0 0
      %1980 = vmatpush2.bf16.msra.mxu0 0
      %1981 = vmatprep.mubr.bf16.mxu0 0
      %1982 = vmatmul.mubr.bf16.gmra.mxu0 %v1890
      %v1983 = vpop.f32.mrf.mxu0
      %v1984 = vadd.f32 %v976, %v1983
      %v1985 = vpop.f32.mrf.mxu0
      %v1986 = vpop.f32.mrf.mxu0
      %v1987 = vadd.f32 %v976, %v1986
      %v1988 = vpop.f32.mrf.mxu0
      %1989 = vdwg.mxu0
      %v1990 = vunpack.c.l.bf16 %v1902
      %v1991 = vunpack.c.l.bf16 %v1904
      %v1992 = vadd.f32 %v1990, %v1941
      %v1993 = vadd.f32 %v1991, %v1945
      %v1994 = vxor.u32 %v1992, 2147483648
      %v1995 = vxor.u32 %v1993, 2147483648
      %v1996 = vmul.f32 %v1994, 1.442695
      %v1997 = vpow.pop %v1996
      %v1998 = vmul.f32 %v1995, 1.442695
      %v1999 = vpow.pop %v1998
      %v2000 = vadd.f32 %v1997, 1.0
      %v2001 = vadd.f32 %v1999, 1.0
      %v2002 = vrcp.pop %v2000
      %v2003 = vmul.f32 1.0, %v2002
      %v2004 = vrcp.pop %v2001
      %v2005 = vmul.f32 1.0, %v2004
      %v2008 = vrot.slane %v1902, 4
      %v2009 = vrot.slane %v1904, 4
      %v2012 = vunpack.c.l.bf16 %v2008
      %v2013 = vunpack.c.l.bf16 %v2009
      %v2014 = vadd.f32 %v2012, %v1943
      %v2015 = vadd.f32 %v2013, %v1947
      %v2016 = vxor.u32 %v2014, 2147483648
      %v2017 = vxor.u32 %v2015, 2147483648
      %v2018 = vmul.f32 %v2016, 1.442695
      %v2019 = vpow.pop %v2018
      %v2020 = vmul.f32 %v2017, 1.442695
      %v2021 = vpow.pop %v2020
      %v2022 = vadd.f32 %v2019, 1.0
      %v2023 = vadd.f32 %v2021, 1.0
      %v2024 = vrcp.pop %v2022
      %v2025 = vmul.f32 1.0, %v2024
      %v2026 = vrcp.pop %v2023
      %v2027 = vmul.f32 1.0, %v2026
      %v2028 = vmul.f32 %v2003, %v1984
      %v2029 = vmul.f32 %v2005, %v1987
      %v2030 = vunpack.c.l.bf16 %v1903
      %v2031 = vunpack.c.l.bf16 %v1905
      %v2032 = vadd.f32 %v2030, %v2028
      %v2033 = vadd.f32 %v2031, %v2029
      %v2034 = vtanh.pop %v2032
      %v2035 = vtanh.pop %v2033
      %v2036 = vsub.f32 %v1888, %v2034
      %v2037 = vsub.f32 %v1889, %v2035
      %v2038 = vmul.f32 %v2025, %v2036
      %v2039 = vmul.f32 %v2027, %v2037
      %v2040 = vadd.f32 %v2034, %v2038
      %v2041 = vadd.f32 %v2035, %v2039
      %v2042 = vpack.c.bf16 %v2041, %v2040
      %v2044 = vunpack.c.l.b16 %v2042
      %v2045 = vunpack.c.h.b16 %v2042
      %v2046 = vpack.c.b16 %v2044, %v2044
      %v2047 = vpack.c.b16 %v2045, %v2045
      %s2050 = scalar_lea.vmem %s304, 40
      %2051 = vst [vmem:[%s2050] sm:$0xf] %v2046
      %2052 = vst [vmem:[%s2050 + $0x4] sm:$0xf] %v2047
      %s2053 = scalar_lea.vmem [#allocation2], 144
      %v2054 = vld [vmem:[%s2053] sm:$0xff]
      %v2055 = vld [vmem:[%s2053 + $0x8] sm:$0xf]
      %v2056 = vld [vmem:[%s2053 + $0xc] sm:$0xff]
      %v2057 = vld [vmem:[%s2053 + $0x14] sm:$0xf]
      %2058 = vmatprep.subr.bf16.mxu0 %v1121
      %2059 = vmatpush1.bf16.msra.mxu0 %v1120
      %2060 = vmatprep.subr.bf16.mxu0 %v1118
      %2061 = vmatpush1.bf16.msra.mxu0 %v1117
      %2062 = vmatprep.subr.bf16.mxu0 %v1115
      %2063 = vmatpush1.bf16.msra.mxu0 %v1114
      %2064 = vmatprep.subr.bf16.mxu0 %v1112
      %2065 = vmatpush1.bf16.msra.mxu0 %v1111
      %2066 = vmatprep.subr.bf16.mxu0 %v1109
      %2067 = vmatpush1.bf16.msra.mxu0 %v1108
      %2068 = vmatprep.subr.bf16.mxu0 %v1106
      %2069 = vmatpush1.bf16.msra.mxu0 %v1105
      %2070 = vmatprep.subr.bf16.mxu0 %v1103
      %2071 = vmatpush1.bf16.msra.mxu0 %v1102
      %2072 = vmatprep.subr.bf16.mxu0 %v1100
      %2073 = vmatpush1.bf16.msra.mxu0 %v1099
      %2074 = vmatprep.subr.bf16.mxu0 0
      %2075 = vmatpush2.bf16.msra.mxu0 0
      %2076 = vmatprep.subr.bf16.mxu0 0
      %2077 = vmatpush2.bf16.msra.mxu0 0
      %2078 = vmatprep.subr.bf16.mxu0 0
      %2079 = vmatpush2.bf16.msra.mxu0 0
      %2080 = vmatprep.subr.bf16.mxu0 0
      %2081 = vmatpush2.bf16.msra.mxu0 0
      %2082 = vmatprep.subr.bf16.mxu0 0
      %2083 = vmatpush2.bf16.msra.mxu0 0
      %2084 = vmatprep.subr.bf16.mxu0 0
      %2085 = vmatpush2.bf16.msra.mxu0 0
      %2086 = vmatprep.subr.bf16.mxu0 0
      %2087 = vmatpush2.bf16.msra.mxu0 0
      %2088 = vmatprep.subr.bf16.mxu0 0
      %2089 = vmatpush2.bf16.msra.mxu0 0
      %2090 = vmatprep.mubr.bf16.mxu0 0
      %2091 = vmatmul.mubr.bf16.gmra.mxu0 %v2042
      %v2092 = vpop.f32.mrf.mxu0
      %v2093 = vadd.f32 %v968, %v2092
      %v2094 = vpop.f32.mrf.mxu0
      %v2095 = vadd.f32 %v972, %v2094
      %v2096 = vpop.f32.mrf.mxu0
      %v2097 = vadd.f32 %v968, %v2096
      %v2098 = vpop.f32.mrf.mxu0
      %v2099 = vadd.f32 %v972, %v2098
      %2100 = vdwg.mxu0
      %2101 = vmatprep.subr.bf16.mxu0 0
      %2102 = vmatpush1.bf16.msra.mxu0 %v1122
      %2103 = vmatprep.subr.bf16.mxu0 0
      %2104 = vmatpush1.bf16.msra.mxu0 %v1119
      %2105 = vmatprep.subr.bf16.mxu0 0
      %2106 = vmatpush1.bf16.msra.mxu0 %v1116
      %2107 = vmatprep.subr.bf16.mxu0 0
      %2108 = vmatpush1.bf16.msra.mxu0 %v1113
      %2109 = vmatprep.subr.bf16.mxu0 0
      %2110 = vmatpush1.bf16.msra.mxu0 %v1110
      %2111 = vmatprep.subr.bf16.mxu0 0
      %2112 = vmatpush1.bf16.msra.mxu0 %v1107
      %2113 = vmatprep.subr.bf16.mxu0 0
      %2114 = vmatpush1.bf16.msra.mxu0 %v1104
      %2115 = vmatprep.subr.bf16.mxu0 0
      %2116 = vmatpush1.bf16.msra.mxu0 %v1101
      %2117 = vmatprep.subr.bf16.mxu0 0
      %2118 = vmatpush2.bf16.msra.mxu0 0
      %2119 = vmatprep.subr.bf16.mxu0 0
      %2120 = vmatpush2.bf16.msra.mxu0 0
      %2121 = vmatprep.subr.bf16.mxu0 0
      %2122 = vmatpush2.bf16.msra.mxu0 0
      %2123 = vmatprep.subr.bf16.mxu0 0
      %2124 = vmatpush2.bf16.msra.mxu0 0
      %2125 = vmatprep.subr.bf16.mxu0 0
      %2126 = vmatpush2.bf16.msra.mxu0 0
      %2127 = vmatprep.subr.bf16.mxu0 0
      %2128 = vmatpush2.bf16.msra.mxu0 0
      %2129 = vmatprep.subr.bf16.mxu0 0
      %2130 = vmatpush2.bf16.msra.mxu0 0
      %2131 = vmatprep.subr.bf16.mxu0 0
      %2132 = vmatpush2.bf16.msra.mxu0 0
      %2133 = vmatprep.mubr.bf16.mxu0 0
      %2134 = vmatmul.mubr.bf16.gmra.mxu0 %v2042
      %v2135 = vpop.f32.mrf.mxu0
      %v2136 = vadd.f32 %v976, %v2135
      %v2137 = vpop.f32.mrf.mxu0
      %v2138 = vpop.f32.mrf.mxu0
      %v2139 = vadd.f32 %v976, %v2138
      %v2140 = vpop.f32.mrf.mxu0
      %2141 = vdwg.mxu0
      %v2142 = vunpack.c.l.bf16 %v2054
      %v2143 = vunpack.c.l.bf16 %v2056
      %v2144 = vadd.f32 %v2142, %v2093
      %v2145 = vadd.f32 %v2143, %v2097
      %v2146 = vxor.u32 %v2144, 2147483648
      %v2147 = vxor.u32 %v2145, 2147483648
      %v2148 = vmul.f32 %v2146, 1.442695
      %v2149 = vpow.pop %v2148
      %v2150 = vmul.f32 %v2147, 1.442695
      %v2151 = vpow.pop %v2150
      %v2152 = vadd.f32 %v2149, 1.0
      %v2153 = vadd.f32 %v2151, 1.0
      %v2154 = vrcp.pop %v2152
      %v2155 = vmul.f32 1.0, %v2154
      %v2156 = vrcp.pop %v2153
      %v2157 = vmul.f32 1.0, %v2156
      %v2160 = vrot.slane %v2054, 4
      %v2161 = vrot.slane %v2056, 4
      %v2164 = vunpack.c.l.bf16 %v2160
      %v2165 = vunpack.c.l.bf16 %v2161
      %v2166 = vadd.f32 %v2164, %v2095
      %v2167 = vadd.f32 %v2165, %v2099
      %v2168 = vxor.u32 %v2166, 2147483648
      %v2169 = vxor.u32 %v2167, 2147483648
      %v2170 = vmul.f32 %v2168, 1.442695
      %v2171 = vpow.pop %v2170
      %v2172 = vmul.f32 %v2169, 1.442695
      %v2173 = vpow.pop %v2172
      %v2174 = vadd.f32 %v2171, 1.0
      %v2175 = vadd.f32 %v2173, 1.0
      %v2176 = vrcp.pop %v2174
      %v2177 = vmul.f32 1.0, %v2176
      %v2178 = vrcp.pop %v2175
      %v2179 = vmul.f32 1.0, %v2178
      %v2180 = vmul.f32 %v2155, %v2136
      %v2181 = vmul.f32 %v2157, %v2139
      %v2182 = vunpack.c.l.bf16 %v2055
      %v2183 = vunpack.c.l.bf16 %v2057
      %v2184 = vadd.f32 %v2182, %v2180
      %v2185 = vadd.f32 %v2183, %v2181
      %v2186 = vtanh.pop %v2184
      %v2187 = vtanh.pop %v2185
      %v2188 = vsub.f32 %v2040, %v2186
      %v2189 = vsub.f32 %v2041, %v2187
      %v2190 = vmul.f32 %v2177, %v2188
      %v2191 = vmul.f32 %v2179, %v2189
      %v2192 = vadd.f32 %v2186, %v2190
      %v2193 = vadd.f32 %v2187, %v2191
      %v2194 = vpack.c.bf16 %v2193, %v2192
      %v2196 = vunpack.c.l.b16 %v2194
      %v2197 = vunpack.c.h.b16 %v2194
      %v2198 = vpack.c.b16 %v2196, %v2196
      %v2199 = vpack.c.b16 %v2197, %v2197
      %s2202 = scalar_lea.vmem %s304, 48
      %2203 = vst [vmem:[%s2202] sm:$0xf] %v2198
      %2204 = vst [vmem:[%s2202 + $0x4] sm:$0xf] %v2199
      %s2205 = scalar_lea.vmem [#allocation2], 168
      %v2206 = vld [vmem:[%s2205] sm:$0xff]
      %v2207 = vld [vmem:[%s2205 + $0x8] sm:$0xf]
      %v2208 = vld [vmem:[%s2205 + $0xc] sm:$0xff]
      %v2209 = vld [vmem:[%s2205 + $0x14] sm:$0xf]
      %2210 = vmatprep.subr.bf16.mxu0 %v1121
      %2211 = vmatpush1.bf16.msra.mxu0 %v1120
      %2212 = vmatprep.subr.bf16.mxu0 %v1118
      %2213 = vmatpush1.bf16.msra.mxu0 %v1117
      %2214 = vmatprep.subr.bf16.mxu0 %v1115
      %2215 = vmatpush1.bf16.msra.mxu0 %v1114
      %2216 = vmatprep.subr.bf16.mxu0 %v1112
      %2217 = vmatpush1.bf16.msra.mxu0 %v1111
      %2218 = vmatprep.subr.bf16.mxu0 %v1109
      %2219 = vmatpush1.bf16.msra.mxu0 %v1108
      %2220 = vmatprep.subr.bf16.mxu0 %v1106
      %2221 = vmatpush1.bf16.msra.mxu0 %v1105
      %2222 = vmatprep.subr.bf16.mxu0 %v1103
      %2223 = vmatpush1.bf16.msra.mxu0 %v1102
      %2224 = vmatprep.subr.bf16.mxu0 %v1100
      %2225 = vmatpush1.bf16.msra.mxu0 %v1099
      %2226 = vmatprep.subr.bf16.mxu0 0
      %2227 = vmatpush2.bf16.msra.mxu0 0
      %2228 = vmatprep.subr.bf16.mxu0 0
      %2229 = vmatpush2.bf16.msra.mxu0 0
      %2230 = vmatprep.subr.bf16.mxu0 0
      %2231 = vmatpush2.bf16.msra.mxu0 0
      %2232 = vmatprep.subr.bf16.mxu0 0
      %2233 = vmatpush2.bf16.msra.mxu0 0
      %2234 = vmatprep.subr.bf16.mxu0 0
      %2235 = vmatpush2.bf16.msra.mxu0 0
      %2236 = vmatprep.subr.bf16.mxu0 0
      %2237 = vmatpush2.bf16.msra.mxu0 0
      %2238 = vmatprep.subr.bf16.mxu0 0
      %2239 = vmatpush2.bf16.msra.mxu0 0
      %2240 = vmatprep.subr.bf16.mxu0 0
      %2241 = vmatpush2.bf16.msra.mxu0 0
      %2242 = vmatprep.mubr.bf16.mxu0 0
      %2243 = vmatmul.mubr.bf16.gmra.mxu0 %v2194
      %v2244 = vpop.f32.mrf.mxu0
      %v2245 = vadd.f32 %v968, %v2244
      %v2246 = vpop.f32.mrf.mxu0
      %v2247 = vadd.f32 %v972, %v2246
      %v2248 = vpop.f32.mrf.mxu0
      %v2249 = vadd.f32 %v968, %v2248
      %v2250 = vpop.f32.mrf.mxu0
      %v2251 = vadd.f32 %v972, %v2250
      %2252 = vdwg.mxu0
      %2253 = vmatprep.subr.bf16.mxu0 0
      %2254 = vmatpush1.bf16.msra.mxu0 %v1122
      %2255 = vmatprep.subr.bf16.mxu0 0
      %2256 = vmatpush1.bf16.msra.mxu0 %v1119
      %2257 = vmatprep.subr.bf16.mxu0 0
      %2258 = vmatpush1.bf16.msra.mxu0 %v1116
      %2259 = vmatprep.subr.bf16.mxu0 0
      %2260 = vmatpush1.bf16.msra.mxu0 %v1113
      %2261 = vmatprep.subr.bf16.mxu0 0
      %2262 = vmatpush1.bf16.msra.mxu0 %v1110
      %2263 = vmatprep.subr.bf16.mxu0 0
      %2264 = vmatpush1.bf16.msra.mxu0 %v1107
      %2265 = vmatprep.subr.bf16.mxu0 0
      %2266 = vmatpush1.bf16.msra.mxu0 %v1104
      %2267 = vmatprep.subr.bf16.mxu0 0
      %2268 = vmatpush1.bf16.msra.mxu0 %v1101
      %2269 = vmatprep.subr.bf16.mxu0 0
      %2270 = vmatpush2.bf16.msra.mxu0 0
      %2271 = vmatprep.subr.bf16.mxu0 0
      %2272 = vmatpush2.bf16.msra.mxu0 0
      %2273 = vmatprep.subr.bf16.mxu0 0
      %2274 = vmatpush2.bf16.msra.mxu0 0
      %2275 = vmatprep.subr.bf16.mxu0 0
      %2276 = vmatpush2.bf16.msra.mxu0 0
      %2277 = vmatprep.subr.bf16.mxu0 0
      %2278 = vmatpush2.bf16.msra.mxu0 0
      %2279 = vmatprep.subr.bf16.mxu0 0
      %2280 = vmatpush2.bf16.msra.mxu0 0
      %2281 = vmatprep.subr.bf16.mxu0 0
      %2282 = vmatpush2.bf16.msra.mxu0 0
      %2283 = vmatprep.subr.bf16.mxu0 0
      %2284 = vmatpush2.bf16.msra.mxu0 0
      %2285 = vmatprep.mubr.bf16.mxu0 0
      %2286 = vmatmul.mubr.bf16.gmra.mxu0 %v2194
      %v2287 = vpop.f32.mrf.mxu0
      %v2288 = vadd.f32 %v976, %v2287
      %v2289 = vpop.f32.mrf.mxu0
      %v2290 = vpop.f32.mrf.mxu0
      %v2291 = vadd.f32 %v976, %v2290
      %v2292 = vpop.f32.mrf.mxu0
      %2293 = vdwg.mxu0
      %v2294 = vunpack.c.l.bf16 %v2206
      %v2295 = vunpack.c.l.bf16 %v2208
      %v2296 = vadd.f32 %v2294, %v2245
      %v2297 = vadd.f32 %v2295, %v2249
      %v2298 = vxor.u32 %v2296, 2147483648
      %v2299 = vxor.u32 %v2297, 2147483648
      %v2300 = vmul.f32 %v2298, 1.442695
      %v2301 = vpow.pop %v2300
      %v2302 = vmul.f32 %v2299, 1.442695
      %v2303 = vpow.pop %v2302
      %v2304 = vadd.f32 %v2301, 1.0
      %v2305 = vadd.f32 %v2303, 1.0
      %v2306 = vrcp.pop %v2304
      %v2307 = vmul.f32 1.0, %v2306
      %v2308 = vrcp.pop %v2305
      %v2309 = vmul.f32 1.0, %v2308
      %v2312 = vrot.slane %v2206, 4
      %v2313 = vrot.slane %v2208, 4
      %v2316 = vunpack.c.l.bf16 %v2312
      %v2317 = vunpack.c.l.bf16 %v2313
      %v2318 = vadd.f32 %v2316, %v2247
      %v2319 = vadd.f32 %v2317, %v2251
      %v2320 = vxor.u32 %v2318, 2147483648
      %v2321 = vxor.u32 %v2319, 2147483648
      %v2322 = vmul.f32 %v2320, 1.442695
      %v2323 = vpow.pop %v2322
      %v2324 = vmul.f32 %v2321, 1.442695
      %v2325 = vpow.pop %v2324
      %v2326 = vadd.f32 %v2323, 1.0
      %v2327 = vadd.f32 %v2325, 1.0
      %v2328 = vrcp.pop %v2326
      %v2329 = vmul.f32 1.0, %v2328
      %v2330 = vrcp.pop %v2327
      %v2331 = vmul.f32 1.0, %v2330
      %v2332 = vmul.f32 %v2307, %v2288
      %v2333 = vmul.f32 %v2309, %v2291
      %v2334 = vunpack.c.l.bf16 %v2207
      %v2335 = vunpack.c.l.bf16 %v2209
      %v2336 = vadd.f32 %v2334, %v2332
      %v2337 = vadd.f32 %v2335, %v2333
      %v2338 = vtanh.pop %v2336
      %v2339 = vtanh.pop %v2337
      %v2340 = vsub.f32 %v2192, %v2338
      %v2341 = vsub.f32 %v2193, %v2339
      %v2342 = vmul.f32 %v2329, %v2340
      %v2343 = vmul.f32 %v2331, %v2341
      %v2344 = vadd.f32 %v2338, %v2342
      %v2345 = vadd.f32 %v2339, %v2343
      %v2346 = vpack.c.bf16 %v2345, %v2344
      %v2348 = vunpack.c.l.b16 %v2346
      %v2349 = vunpack.c.h.b16 %v2346
      %v2350 = vpack.c.b16 %v2348, %v2348
      %v2351 = vpack.c.b16 %v2349, %v2349
      %s2354 = scalar_lea.vmem %s304, 56
      %2355 = vst [vmem:[%s2354] sm:$0xf] %v2350
      %2356 = vst [vmem:[%s2354 + $0x4] sm:$0xf] %v2351
      %2357 = vst [vmem:[#allocation3] sm:$0xff] %v2344
      %2358 = vst [vmem:[#allocation3 + $0x8] sm:$0xff] %v2345
      %p2359 = scmp.eq.s32.totalorder %s23, 1
      // Predicated region
      $region45: #{seq2seq_encoder_forward.2} parent=39 // pred_check
        %p2360 = pneg %p2359
      $region46: #{seq2seq_encoder_forward.2} parent=39 // pred_check_branch
        %2362 = sbr.rel (%p2360) target = $region48
      $region47: #{seq2seq_encoder_forward.2} parent=39 // pred_region
        %2363 = vst [vmem:[%s311] sm:$0xff] %v2344
        %2364 = vst [vmem:[%s311 + $0x8] sm:$0xff] %v2345
      $region48: #{seq2seq_encoder_forward.2} parent=39 // pred_fallthru
        _
      %s2365 = smul.u32 8, %s23
      %s2366 = smul.u32 2, %s22
      %p2367 = scmp.lt.s32.totalorder %s2365, 15
      %s2368 = scalar_select %p2367, %s2365, 15
      %p2369 = scmp.lt.s32.totalorder %s2366, 1
      %s2370 = scalar_select %p2369, %s2366, 1
      %s2371 = smul.addr %s2368, 2
      %s2372 = sadd.s32 %s2370, %s2371
      %s2373 = smul.addr %s2372, 4
      %s2374 = scalar_lea.vmem %s5, %s2373
      %s2375 = smul.u32 2, %s22
      %p2376 = scmp.lt.s32.totalorder %s2375, 1
      %s2377 = scalar_select %p2376, %s2375, 1
      %s2378 = smul.addr %s2377, 8
      %s2379 = scalar_lea.vmem %s6, %s2378
      // Predicated region
      $region49: #{seq2seq_encoder_forward.2} parent=39 // pred_check
        %p2380 = pneg %p162
      $region50: #{seq2seq_encoder_forward.2} parent=39 // pred_check_branch
        %2382 = sbr.rel (%p2380) target = $region52
      $region51: #{seq2seq_encoder_forward.2} parent=39 // pred_region
        %s2383 = smul.u32 8, %s23
        %s2384 = smul.u32 2, %s22
      $region52: #{seq2seq_encoder_forward.2} parent=39 // pred_fallthru
        _
      // Predicated region
      $region53: #{seq2seq_encoder_forward.2} parent=39 // pred_check
        %p2385 = pneg %p188
      $region54: #{seq2seq_encoder_forward.2} parent=39 // pred_check_branch
        %2387 = sbr.rel (%p2385) target = $region56
      $region55: #{seq2seq_encoder_forward.2} parent=39 // pred_region
        %s2388 = smul.u32 2, %s22
      $region56: #{seq2seq_encoder_forward.2} parent=39 // pred_fallthru
        _
      // Predicated region
      $region57: #{seq2seq_encoder_forward.2} parent=39 // pred_check
        %p2389 = pneg %p188
      $region58: #{seq2seq_encoder_forward.2} parent=39 // pred_check_branch
        %2391 = sbr.rel (%p2389) target = $region60
      $region59: #{seq2seq_encoder_forward.2} parent=39 // pred_region
        %s2392 = smul.u32 2, %s22
        %p2393 = scmp.lt.s32.totalorder %s2392, 1
        %s2394 = scalar_select %p2393, %s2392, 1
        %s2395 = smul.addr %s2394, 8
        %s2396 = scalar_lea.vmem %s6, %s2395
      $region60: #{seq2seq_encoder_forward.2} parent=39 // pred_fallthru
        _
    $region40: #{seq2seq_encoder_forward.2} parent=5 // pred_fallthru
      _
    %p2397 = scmp.le.s32.totalorder 2, %s13
    // Predicated region
    $region61: #{seq2seq_encoder_forward.2} parent=5 // pred_check
      %p2398 = pneg %p2397
    $region62: #{seq2seq_encoder_forward.2} parent=5 // pred_check_branch
      %2400 = sbr.rel (%p2398) target = $region64
    $region63: #{seq2seq_encoder_forward.2} parent=5 // pred_region
      %s2401 = ssub.s32 %s13, 2
      // Predicated region
      $region65: #{seq2seq_encoder_forward.2} parent=63 // pred_check
        %p2402 = pneg %p168
      $region66: #{seq2seq_encoder_forward.2} parent=63 // pred_check_branch
        %2404 = sbr.rel (%p2402) target = $region68
      $region67: #{seq2seq_encoder_forward.2} parent=63 // pred_region
        %s2405 = smul.u32 8, %s25
        %s2406 = smul.u32 2, %s24
        %p2407 = scmp.lt.s32.totalorder %s2405, 15
        %s2408 = scalar_select %p2407, %s2405, 15
        %p2409 = scmp.lt.s32.totalorder %s2406, 1
        %s2410 = scalar_select %p2409, %s2406, 1
        %s2411 = smul.addr %s2408, 2
        %s2412 = sadd.s32 %s2410, %s2411
        %s2413 = smul.addr %s2412, 4
        %s2414 = scalar_lea.vmem %s5, %s2413
      $region68: #{seq2seq_encoder_forward.2} parent=63 // pred_fallthru
        _
    $region64: #{seq2seq_encoder_forward.2} parent=5 // pred_fallthru
      _
  $region6: #{seq2seq_encoder_forward.2} parent=0 // loop_footer
    %s17 = sadd.s32 1, %s13
  $region7: #{seq2seq_encoder_forward.2} parent=0 // loop_footer_branch
    %12 = sbr.rel target = $region3
  $region8: #{seq2seq_encoder_forward.2} parent=0 // loop_exit
    _

// kernel: seq2seq_encoder_forward.3
$region0: #{seq2seq_encoder_forward.3}
  #allocation0 [shape = 'u32[]', space=smem, size = 0x4, offset = 0x4, fixed_abs, tag = 'smem constant byte address 0x4 - core index']
  #allocation1 [shape = 'u32[144,128]{1,0:T(1,128)}', space=vmem, size = 0x12000, scoped, tag = 'internal scratch']
  #allocation2 [shape = 'bf16[8,16,384]{2,1,0:T(8,128)(2,1)}', space=vmem, size = 0x18000, scoped, tag = 'scratch operand']
  #allocation3 [shape = 'f32[16,128]{1,0:T(8,128)}', space=vmem, size = 0x2000, scoped, tag = 'scratch operand']
  %s0 = inlined_call_operand.vmem [shape: bf16[16,16,128], index: 0, kind: input, shape index: {}]
  %s1 = inlined_call_operand.vmem [shape: bf16[128,384], index: 1, kind: input, shape index: {}]
  %s2 = inlined_call_operand.vmem [shape: bf16[128,384], index: 2, kind: input, shape index: {}]
  %s3 = inlined_call_operand.vmem [shape: f32[1,384], index: 3, kind: input, shape index: {}]
  %s4 = inlined_call_operand.vmem [shape: f32[1,384], index: 4, kind: input, shape index: {}]
  %s5 = inlined_call_operand.hbm [shape: f32[16,16,128], index: 5, kind: output, shape index: {0}]
  %s6 = inlined_call_operand.vmem [shape: f32[16,128], index: 6, kind: output, shape index: {1}]
  %7 = xla_tuple %s5, %s6
  %s8 = sld [smem:[#allocation0]]
  $region69: #{seq2seq_encoder_forward.3} parent=0
    _
  %s10 = ssub.s32 1, %s8
  %s11 = scalar_select 0, %s10, %s8
  $region1: #{seq2seq_encoder_forward.3} parent=0
    #allocation4 [shape = 'u8[131072]{0}', space=vmem, size = 0x20000, scoped, tag = 'output window, operand 0']
    #allocation5 [shape = 's32[2]{0}', space=sflag, size = 0x8, scoped, tag = 'scoped memory for seq2seq_encoder_forward.3']
    %12 = vsyncpa [#allocation5], 0
    %s13 = scalar_lea.sflag [#allocation5], 1
    %14 = vsyncpa %s13, 0
    loop: start=0, step=1, limit=4
    $region2: #{seq2seq_encoder_forward.3} parent=1 // loop_pre_header
      _
    $region3: #{seq2seq_encoder_forward.3} parent=1 // loop_header
      %s16 = sphi 0, %s20
      %p17 = scmp.ge.s32.totalorder %s16, 4
      %s23 = sphi 0, %s35
      %s24 = sphi 0, %s31
      %s25 = sphi 0, %s23
      %s26 = sphi 0, %s24
      %s27 = sphi 0, %s25
      %s28 = sphi 0, %s26
      %s40 = sphi 0, %s42
      %s43 = sphi 0, %s40
      %s44 = sphi 0, %s43
      %s60 = sphi 0, %s44
      %s64 = sphi 0, %s64
      %s66 = sphi 0, %s64
      %s67 = sphi 0, %s66
      %s81 = sphi 0, %s67
      %s85 = sphi 0, %s85
      %s87 = sphi 0, %s85
      %s88 = sphi 0, %s87
      %s102 = sphi 0, %s88
      %s106 = sphi 0, %s106
      %s108 = sphi 0, %s106
      %s109 = sphi 0, %s108
      %s123 = sphi 0, %s109
      %s127 = sphi 0, %s127
      %s129 = sphi 0, %s127
      %s130 = sphi 0, %s129
      %s144 = sphi 0, %s130
      %s152 = sphi 0, %s154
      %s155 = sphi 0, %s152
      %s156 = sphi 0, %s155
      %s172 = sphi 0, %s156
      %s178 = sphi 0, %s180
      %s181 = sphi 0, %s178
      %s182 = sphi 0, %s181
      %s198 = sphi 0, %s182
    $region4: #{seq2seq_encoder_forward.3} parent=1 // loop_header_branch
      %19 = sbr.rel (%p17) target = $region8
    $region5: #{seq2seq_encoder_forward.3} parent=1 // loop_body
      %s21 = ssub.s32 %s16, 1
      %s22 = ssub.s32 %s16, 2
      %s29 = sadd.s32 1, %s24
      %p30 = scmp.ge.s32.totalorder %s29, 2
      %s31 = scalar_select %p30, 0, %s29
      %s32 = sadd.s32 1, %s23
      %s33 = scalar_select %p30, %s32, %s23
      %p34 = scmp.ge.s32.totalorder %s33, 1
      %s35 = scalar_select %p34, 0, %s33
      %s36 = ssub.s32 %s24, %s31
      %s37 = ssub.s32 %s23, %s35
      %s38 = sor.u32 %s36, %s37
      %p39 = scmp.eq.s32.totalorder %s38, 0
      %s41 = sadd.s32 %s40, 1
      %s42 = scalar_select %p39, %s40, %s41
      %p45 = pneg %p39
      %p46 = scmp.eq.s32.totalorder %s16, 1
      %p47 = por %p45, %p46
      %p48 = scmp.ne.s32.totalorder %s40, %s43
      %p49 = scmp.eq.s32.totalorder %s16, 0
      %p50 = por %p48, %p49
      %p51 = scmp.ne.s32.totalorder %s40, %s43
      %p52 = scmp.eq.s32.totalorder %s21, 1
      %p53 = por %p51, %p52
      %p54 = scmp.ne.s32.totalorder %s43, %s44
      %p55 = scmp.eq.s32.totalorder %s21, 0
      %p56 = por %p54, %p55
      %p57 = scmp.ne.s32.totalorder %s43, %s44
      %p58 = scmp.eq.s32.totalorder %s22, 1
      %p59 = por %p57, %p58
      %p61 = scmp.ne.s32.totalorder %s44, %s60
      %p62 = scmp.eq.s32.totalorder %s22, 0
      %p63 = por %p61, %p62
      %s65 = sadd.s32 %s64, 1
      %p68 = scmp.eq.s32.totalorder %s16, 1
      %p69 = scmp.ne.s32.totalorder %s64, %s66
      %p70 = scmp.eq.s32.totalorder %s16, 0
      %p71 = por %p69, %p70
      %p72 = scmp.ne.s32.totalorder %s64, %s66
      %p73 = scmp.eq.s32.totalorder %s21, 1
      %p74 = por %p72, %p73
      %p75 = scmp.ne.s32.totalorder %s66, %s67
      %p76 = scmp.eq.s32.totalorder %s21, 0
      %p77 = por %p75, %p76
      %p78 = scmp.ne.s32.totalorder %s66, %s67
      %p79 = scmp.eq.s32.totalorder %s22, 1
      %p80 = por %p78, %p79
      %p82 = scmp.ne.s32.totalorder %s67, %s81
      %p83 = scmp.eq.s32.totalorder %s22, 0
      %p84 = por %p82, %p83
      %s86 = sadd.s32 %s85, 1
      %p89 = scmp.eq.s32.totalorder %s16, 1
      %p90 = scmp.ne.s32.totalorder %s85, %s87
      %p91 = scmp.eq.s32.totalorder %s16, 0
      %p92 = por %p90, %p91
      %p93 = scmp.ne.s32.totalorder %s85, %s87
      %p94 = scmp.eq.s32.totalorder %s21, 1
      %p95 = por %p93, %p94
      %p96 = scmp.ne.s32.totalorder %s87, %s88
      %p97 = scmp.eq.s32.totalorder %s21, 0
      %p98 = por %p96, %p97
      %p99 = scmp.ne.s32.totalorder %s87, %s88
      %p100 = scmp.eq.s32.totalorder %s22, 1
      %p101 = por %p99, %p100
      %p103 = scmp.ne.s32.totalorder %s88, %s102
      %p104 = scmp.eq.s32.totalorder %s22, 0
      %p105 = por %p103, %p104
      %s107 = sadd.s32 %s106, 1
      %p110 = scmp.eq.s32.totalorder %s16, 1
      %p111 = scmp.ne.s32.totalorder %s106, %s108
      %p112 = scmp.eq.s32.totalorder %s16, 0
      %p113 = por %p111, %p112
      %p114 = scmp.ne.s32.totalorder %s106, %s108
      %p115 = scmp.eq.s32.totalorder %s21, 1
      %p116 = por %p114, %p115
      %p117 = scmp.ne.s32.totalorder %s108, %s109
      %p118 = scmp.eq.s32.totalorder %s21, 0
      %p119 = por %p117, %p118
      %p120 = scmp.ne.s32.totalorder %s108, %s109
      %p121 = scmp.eq.s32.totalorder %s22, 1
      %p122 = por %p120, %p121
      %p124 = scmp.ne.s32.totalorder %s109, %s123
      %p125 = scmp.eq.s32.totalorder %s22, 0
      %p126 = por %p124, %p125
      %s128 = sadd.s32 %s127, 1
      %p131 = scmp.eq.s32.totalorder %s16, 1
      %p132 = scmp.ne.s32.totalorder %s127, %s129
      %p133 = scmp.eq.s32.totalorder %s16, 0
      %p134 = por %p132, %p133
      %p135 = scmp.ne.s32.totalorder %s127, %s129
      %p136 = scmp.eq.s32.totalorder %s21, 1
      %p137 = por %p135, %p136
      %p138 = scmp.ne.s32.totalorder %s129, %s130
      %p139 = scmp.eq.s32.totalorder %s21, 0
      %p140 = por %p138, %p139
      %p141 = scmp.ne.s32.totalorder %s129, %s130
      %p142 = scmp.eq.s32.totalorder %s22, 1
      %p143 = por %p141, %p142
      %p145 = scmp.ne.s32.totalorder %s130, %s144
      %p146 = scmp.eq.s32.totalorder %s22, 0
      %p147 = por %p145, %p146
      %s148 = ssub.s32 %s24, %s31
      %s149 = ssub.s32 %s23, %s35
      %s150 = sor.u32 %s148, %s149
      %p151 = scmp.eq.s32.totalorder %s150, 0
      %s153 = sadd.s32 %s152, 1
      %s154 = scalar_select %p151, %s152, %s153
      %p157 = pneg %p151
      %p158 = scmp.eq.s32.totalorder %s16, 1
      %p159 = por %p157, %p158
      %p160 = scmp.ne.s32.totalorder %s152, %s155
      %p161 = scmp.eq.s32.totalorder %s16, 0
      %p162 = por %p160, %p161
      %p163 = scmp.ne.s32.totalorder %s152, %s155
      %p164 = scmp.eq.s32.totalorder %s21, 1
      %p165 = por %p163, %p164
      %p166 = scmp.ne.s32.totalorder %s155, %s156
      %p167 = scmp.eq.s32.totalorder %s21, 0
      %p168 = por %p166, %p167
      %p169 = scmp.ne.s32.totalorder %s155, %s156
      %p170 = scmp.eq.s32.totalorder %s22, 1
      %p171 = por %p169, %p170
      %p173 = scmp.ne.s32.totalorder %s156, %s172
      %p174 = scmp.eq.s32.totalorder %s22, 0
      %p175 = por %p173, %p174
      %s176 = ssub.s32 %s23, %s35
      %p177 = scmp.eq.s32.totalorder %s176, 0
      %s179 = sadd.s32 %s178, 1
      %s180 = scalar_select %p177, %s178, %s179
      %p183 = pneg %p177
      %p184 = scmp.eq.s32.totalorder %s16, 1
      %p185 = por %p183, %p184
      %p186 = scmp.ne.s32.totalorder %s178, %s181
      %p187 = scmp.eq.s32.totalorder %s16, 0
      %p188 = por %p186, %p187
      %p189 = scmp.ne.s32.totalorder %s178, %s181
      %p190 = scmp.eq.s32.totalorder %s21, 1
      %p191 = por %p189, %p190
      %p192 = scmp.ne.s32.totalorder %s181, %s182
      %p193 = scmp.eq.s32.totalorder %s21, 0
      %p194 = por %p192, %p193
      %p195 = scmp.ne.s32.totalorder %s181, %s182
      %p196 = scmp.eq.s32.totalorder %s22, 1
      %p197 = por %p195, %p196
      %p199 = scmp.ne.s32.totalorder %s182, %s198
      %p200 = scmp.eq.s32.totalorder %s22, 0
      %p201 = por %p199, %p200
      %p202 = scmp.le.s32.totalorder 1, %s16
      %p203 = scmp.lt.s32.totalorder %s16, 3
      %p204 = pnand %p202, %p203
      %p205 = pneg %p204
      // Predicated region
      $region9: #{seq2seq_encoder_forward.3} parent=5 // pred_check
        _
      $region10: #{seq2seq_encoder_forward.3} parent=5 // pred_check_branch
        %207 = sbr.rel (%p204) target = $region12
      $region11: #{seq2seq_encoder_forward.3} parent=5 // pred_region
        %s208 = ssub.s32 %s16, 1
        // Predicated region
        $region13: #{seq2seq_encoder_forward.3} parent=11 // pred_check
          %p209 = pneg %p77
        $region14: #{seq2seq_encoder_forward.3} parent=11 // pred_check_branch
          %211 = sbr.rel (%p209) target = $region16
        $region15: #{seq2seq_encoder_forward.3} parent=11 // pred_region
          _
        $region16: #{seq2seq_encoder_forward.3} parent=11 // pred_fallthru
          _
        // Predicated region
        $region17: #{seq2seq_encoder_forward.3} parent=11 // pred_check
          %p212 = pneg %p98
        $region18: #{seq2seq_encoder_forward.3} parent=11 // pred_check_branch
          %214 = sbr.rel (%p212) target = $region20
        $region19: #{seq2seq_encoder_forward.3} parent=11 // pred_region
          _
        $region20: #{seq2seq_encoder_forward.3} parent=11 // pred_fallthru
          _
        // Predicated region
        $region21: #{seq2seq_encoder_forward.3} parent=11 // pred_check
          %p215 = pneg %p119
        $region22: #{seq2seq_encoder_forward.3} parent=11 // pred_check_branch
          %217 = sbr.rel (%p215) target = $region24
        $region23: #{seq2seq_encoder_forward.3} parent=11 // pred_region
          _
        $region24: #{seq2seq_encoder_forward.3} parent=11 // pred_fallthru
          _
        // Predicated region
        $region25: #{seq2seq_encoder_forward.3} parent=11 // pred_check
          %p218 = pneg %p140
        $region26: #{seq2seq_encoder_forward.3} parent=11 // pred_check_branch
          %220 = sbr.rel (%p218) target = $region28
        $region27: #{seq2seq_encoder_forward.3} parent=11 // pred_region
          _
        $region28: #{seq2seq_encoder_forward.3} parent=11 // pred_fallthru
          _
      $region12: #{seq2seq_encoder_forward.3} parent=5 // pred_fallthru
        _
      %p221 = scmp.lt.s32.totalorder %s16, 2
      // Predicated region
      $region29: #{seq2seq_encoder_forward.3} parent=5 // pred_check
        %p222 = pneg %p221
      $region30: #{seq2seq_encoder_forward.3} parent=5 // pred_check_branch
        %224 = sbr.rel (%p222) target = $region32
      $region31: #{seq2seq_encoder_forward.3} parent=5 // pred_region
        // Predicated region
        $region33: #{seq2seq_encoder_forward.3} parent=31 // pred_check
          %p225 = pneg %p50
        $region34: #{seq2seq_encoder_forward.3} parent=31 // pred_check_branch
          %227 = sbr.rel (%p225) target = $region36
        $region35: #{seq2seq_encoder_forward.3} parent=31 // pred_region
          %s228 = smul.u32 8, %s24
          %s229 = smul.u32 2, %s23
          %p230 = scmp.lt.s32.totalorder %s228, 15
          %s231 = scalar_select %p230, %s228, 15
          %p232 = scmp.lt.s32.totalorder %s229, 1
          %s233 = scalar_select %p232, %s229, 1
          %s234 = smul.addr %s231, 2
          %s235 = sadd.s32 %s233, %s234
          %s236 = smul.addr %s235, 4
          %s237 = scalar_lea.vmem %s0, %s236
          %s238 = smul.u32 8, %s24
          %s239 = smul.u32 2, %s23
        $region36: #{seq2seq_encoder_forward.3} parent=31 // pred_fallthru
          _
      $region32: #{seq2seq_encoder_forward.3} parent=5 // pred_fallthru
        _
      %p240 = scmp.le.s32.totalorder 1, %s16
      %p241 = scmp.lt.s32.totalorder %s16, 3
      %p242 = pnand %p240, %p241
      %p243 = pneg %p242
      // Predicated region
      $region37: #{seq2seq_encoder_forward.3} parent=5 // pred_check
        _
      $region38: #{seq2seq_encoder_forward.3} parent=5 // pred_check_branch
        %245 = sbr.rel (%p242) target = $region40
      $region39: #{seq2seq_encoder_forward.3} parent=5 // pred_region
        %s246 = ssub.s32 %s16, 1
        %s247 = smul.u32 8, %s26
        %s248 = smul.u32 2, %s25
        %p249 = scmp.lt.s32.totalorder %s247, 15
        %s250 = scalar_select %p249, %s247, 15
        %p251 = scmp.lt.s32.totalorder %s248, 1
        %s252 = scalar_select %p251, %s248, 1
        %s253 = smul.addr %s250, 2
        %s254 = sadd.s32 %s252, %s253
        %s255 = smul.addr %s254, 4
        %s256 = scalar_lea.vmem %s0, %s255
        %p257 = pneg %p56
        %p258 = pneg %p53
        %p259 = pneg %p77
        %p260 = pneg %p74
        %p261 = pneg %p98
        %p262 = pneg %p95
        %p263 = pneg %p119
        %p264 = pneg %p116
        %p265 = pneg %p140
        %p266 = pneg %p137
        %p267 = pneg %p168
        %p268 = pneg %p165
        %s269 = sand.u32 %s155, 1
        %s270 = scalar_lea.sflag [#allocation5], %s269
        %s271 = sand.u32 %s155, 1
        %s272 = smul.addr %s271, 128
        %s273 = scalar_lea.vmem [#allocation4], %s272
        %p274 = pneg %p194
        %p275 = pneg %p191
        %s276 = smul.u32 2, %s25
        %p277 = scmp.lt.s32.totalorder %s276, 1
        %s278 = scalar_select %p277, %s276, 1
        %s279 = smul.addr %s278, 8
        %s280 = scalar_lea.vmem %s6, %s279
        %s281 = smul.u32 8, %s26
        %s282 = smul.u32 2, %s25
        %p283 = scmp.lt.s32.totalorder %s281, 15
        %s284 = scalar_select %p283, %s281, 15
        %p285 = scmp.lt.s32.totalorder %s282, 1
        %s286 = scalar_select %p285, %s282, 1
        %s287 = smul.addr %s284, 2
        %s288 = sadd.s32 %s286, %s287
        %s289 = smul.addr %s288, 4
        %s290 = scalar_lea.vmem %s0, %s289
        %s291 = smul.u32 8, %s26
        %s292 = smul.u32 2, %s25
        %s293 = smul.u32 8, %s26
        %s294 = smul.u32 2, %s25
        %s295 = smul.u32 2, %s25
        %p296 = scmp.lt.s32.totalorder %s295, 1
        %s297 = scalar_select %p296, %s295, 1
        %s298 = smul.addr %s297, 8
        %s299 = scalar_lea.vmem %s6, %s298
        %s300 = smul.u32 2, %s25
        %p302 = scmp.eq.s32.totalorder %s26, 0
        // Predicated region
        $region41: #{seq2seq_encoder_forward.3} parent=39 // pred_check
          %p303 = pneg %p302
        $region42: #{seq2seq_encoder_forward.3} parent=39 // pred_check_branch
          %305 = sbr.rel (%p303) target = $region44
        $region43: #{seq2seq_encoder_forward.3} parent=39 // pred_region
          %306 = vst [vmem:[#allocation3] sm:$0xff] 0.0
          %307 = vst [vmem:[#allocation3 + $0x8] sm:$0xff] 0.0
        $region44: #{seq2seq_encoder_forward.3} parent=39 // pred_fallthru
          _
        %v308 = vld [vmem:[%s290] sm:$0xf]
        %v309 = vld [vmem:[%s290 + $0x4] sm:$0xf]
        %v310 = vld [vmem:[%s290 + $0x8] sm:$0xf]
        %v311 = vld [vmem:[%s290 + $0xc] sm:$0xf]
        %v312 = vld [vmem:[%s290 + $0x10] sm:$0xf]
        %v313 = vld [vmem:[%s290 + $0x14] sm:$0xf]
        %v314 = vld [vmem:[%s290 + $0x18] sm:$0xf]
        %v315 = vld [vmem:[%s290 + $0x1c] sm:$0xf]
        %v316 = vld [vmem:[%s290 + $0x20] sm:$0xf]
        %v317 = vld [vmem:[%s290 + $0x24] sm:$0xf]
        %v318 = vld [vmem:[%s290 + $0x28] sm:$0xf]
        %v319 = vld [vmem:[%s290 + $0x2c] sm:$0xf]
        %v320 = vld [vmem:[%s290 + $0x30] sm:$0xf]
        %v321 = vld [vmem:[%s290 + $0x34] sm:$0xf]
        %v322 = vld [vmem:[%s290 + $0x38] sm:$0xf]
        %v323 = vld [vmem:[%s290 + $0x3c] sm:$0xf]
        %v324 = vld [vmem:[%s1] sm:$0xff]
        %v325 = vld [vmem:[%s1 + $0x8] sm:$0xf]
        %v326 = vld [vmem:[%s1 + $0xc] sm:$0xff]
        %v327 = vld [vmem:[%s1 + $0x14] sm:$0xf]
        %v328 = vld [vmem:[%s1 + $0x18] sm:$0xff]
        %v329 = vld [vmem:[%s1 + $0x20] sm:$0xf]
        %v330 = vld [vmem:[%s1 + $0x24] sm:$0xff]
        %v331 = vld [vmem:[%s1 + $0x2c] sm:$0xf]
        %v332 = vld [vmem:[%s1 + $0x30] sm:$0xff]
        %v333 = vld [vmem:[%s1 + $0x38] sm:$0xf]
        %v334 = vld [vmem:[%s1 + $0x3c] sm:$0xff]
        %v335 = vld [vmem:[%s1 + $0x44] sm:$0xf]
        %v336 = vld [vmem:[%s1 + $0x48] sm:$0xff]
        %v337 = vld [vmem:[%s1 + $0x50] sm:$0xf]
        %v338 = vld [vmem:[%s1 + $0x54] sm:$0xff]
        %v339 = vld [vmem:[%s1 + $0x5c] sm:$0xf]
        %v340 = vld [vmem:[%s1 + $0x60] sm:$0xff]
        %v341 = vld [vmem:[%s1 + $0x68] sm:$0xf]
        %v342 = vld [vmem:[%s1 + $0x6c] sm:$0xff]
        %v343 = vld [vmem:[%s1 + $0x74] sm:$0xf]
        %v344 = vld [vmem:[%s1 + $0x78] sm:$0xff]
        %v345 = vld [vmem:[%s1 + $0x80] sm:$0xf]
        %v346 = vld [vmem:[%s1 + $0x84] sm:$0xff]
        %v347 = vld [vmem:[%s1 + $0x8c] sm:$0xf]
        %v348 = vld [vmem:[%s1 + $0x90] sm:$0xff]
        %v349 = vld [vmem:[%s1 + $0x98] sm:$0xf]
        %v350 = vld [vmem:[%s1 + $0x9c] sm:$0xff]
        %v351 = vld [vmem:[%s1 + $0xa4] sm:$0xf]
        %v352 = vld [vmem:[%s1 + $0xa8] sm:$0xff]
        %v353 = vld [vmem:[%s1 + $0xb0] sm:$0xf]
        %v354 = vld [vmem:[%s1 + $0xb4] sm:$0xff]
        %v355 = vld [vmem:[%s1 + $0xbc] sm:$0xf]
        %v356 = vld [vmem:[%s3] sm:$0x7]
        %v358 = vlaneseq
        %v359 = vshrl.u32 %v358, 7
        %v360 = vsub.s32 0, %v359
        %v361 = vrot.slane %v356, %v360
        %v362 = vlaneseq
        %v363 = vshrl.u32 %v362, 7
        %v364 = vsub.s32 1, %v363
        %v365 = vrot.slane %v356, %v364
        %v366 = vlaneseq
        %v367 = vshrl.u32 %v366, 7
        %v368 = vsub.s32 2, %v367
        %v369 = vrot.slane %v356, %v368
        %v389 = vunpack.c.l.b16 %v308
        %v390 = vunpack.c.l.b16 %v309
        %v391 = vunpack.c.l.b16 %v310
        %v392 = vunpack.c.l.b16 %v311
        %v393 = vunpack.c.l.b16 %v312
        %v394 = vunpack.c.l.b16 %v313
        %v395 = vunpack.c.l.b16 %v314
        %v396 = vunpack.c.l.b16 %v315
        %v397 = vunpack.c.l.b16 %v316
        %v398 = vunpack.c.l.b16 %v317
        %v399 = vunpack.c.l.b16 %v318
        %v400 = vunpack.c.l.b16 %v319
        %v401 = vunpack.c.l.b16 %v320
        %v402 = vunpack.c.l.b16 %v321
        %v403 = vunpack.c.l.b16 %v322
        %v404 = vunpack.c.l.b16 %v323
        %v405 = vpack.c.b16 %v390, %v389
        %v406 = vpack.c.b16 %v392, %v391
        %v407 = vpack.c.b16 %v394, %v393
        %v408 = vpack.c.b16 %v396, %v395
        %v409 = vpack.c.b16 %v398, %v397
        %v410 = vpack.c.b16 %v400, %v399
        %v411 = vpack.c.b16 %v402, %v401
        %v412 = vpack.c.b16 %v404, %v403
        %v453 = vunpack.c.l.b16 %v324
        %v454 = vunpack.c.h.b16 %v324
        %v455 = vunpack.c.l.b16 %v325
        %v456 = vunpack.c.l.b16 %v326
        %v457 = vunpack.c.h.b16 %v326
        %v458 = vunpack.c.l.b16 %v327
        %v459 = vunpack.c.l.b16 %v328
        %v460 = vunpack.c.h.b16 %v328
        %v461 = vunpack.c.l.b16 %v329
        %v462 = vunpack.c.l.b16 %v330
        %v463 = vunpack.c.h.b16 %v330
        %v464 = vunpack.c.l.b16 %v331
        %v465 = vunpack.c.l.b16 %v332
        %v466 = vunpack.c.h.b16 %v332
        %v467 = vunpack.c.l.b16 %v333
        %v468 = vunpack.c.l.b16 %v334
        %v469 = vunpack.c.h.b16 %v334
        %v470 = vunpack.c.l.b16 %v335
        %v471 = vunpack.c.l.b16 %v336
        %v472 = vunpack.c.h.b16 %v336
        %v473 = vunpack.c.l.b16 %v337
        %v474 = vunpack.c.l.b16 %v338
        %v475 = vunpack.c.h.b16 %v338
        %v476 = vunpack.c.l.b16 %v339
        %v477 = vunpack.c.l.b16 %v340
        %v478 = vunpack.c.h.b16 %v340
        %v479 = vunpack.c.l.b16 %v341
        %v480 = vunpack.c.l.b16 %v342
        %v481 = vunpack.c.h.b16 %v342
        %v482 = vunpack.c.l.b16 %v343
        %v483 = vunpack.c.l.b16 %v344
        %v484 = vunpack.c.h.b16 %v344
        %v485 = vunpack.c.l.b16 %v345
        %v486 = vunpack.c.l.b16 %v346
        %v487 = vunpack.c.h.b16 %v346
        %v488 = vunpack.c.l.b16 %v347
        %v489 = vunpack.c.l.b16 %v348
        %v490 = vunpack.c.h.b16 %v348
        %v491 = vunpack.c.l.b16 %v349
        %v492 = vunpack.c.l.b16 %v350
        %v493 = vunpack.c.h.b16 %v350
        %v494 = vunpack.c.l.b16 %v351
        %v495 = vunpack.c.l.b16 %v352
        %v496 = vunpack.c.h.b16 %v352
        %v497 = vunpack.c.l.b16 %v353
        %v498 = vunpack.c.l.b16 %v354
        %v499 = vunpack.c.h.b16 %v354
        %v500 = vunpack.c.l.b16 %v355
        %v501 = vpack.c.b16 %v456, %v453
        %v502 = vpack.c.b16 %v457, %v454
        %v503 = vpack.c.b16 %v458, %v455
        %v504 = vpack.c.b16 %v462, %v459
        %v505 = vpack.c.b16 %v463, %v460
        %v506 = vpack.c.b16 %v464, %v461
        %v507 = vpack.c.b16 %v468, %v465
        %v508 = vpack.c.b16 %v469, %v466
        %v509 = vpack.c.b16 %v470, %v467
        %v510 = vpack.c.b16 %v474, %v471
        %v511 = vpack.c.b16 %v475, %v472
        %v512 = vpack.c.b16 %v476, %v473
        %v513 = vpack.c.b16 %v480, %v477
        %v514 = vpack.c.b16 %v481, %v478
        %v515 = vpack.c.b16 %v482, %v479
        %v516 = vpack.c.b16 %v486, %v483
        %v517 = vpack.c.b16 %v487, %v484
        %v518 = vpack.c.b16 %v488, %v485
        %v519 = vpack.c.b16 %v492, %v489
        %v520 = vpack.c.b16 %v493, %v490
        %v521 = vpack.c.b16 %v494, %v491
        %v522 = vpack.c.b16 %v498, %v495
        %v523 = vpack.c.b16 %v499, %v496
        %v524 = vpack.c.b16 %v500, %v497
        %549 = vmatprep.subr.bf16.mxu0 %v523
        %550 = vmatpush1.bf16.msra.mxu0 %v522
        %551 = vmatprep.subr.bf16.mxu0 %v520
        %552 = vmatpush1.bf16.msra.mxu0 %v519
        %553 = vmatprep.subr.bf16.mxu0 %v517
        %554 = vmatpush1.bf16.msra.mxu0 %v516
        %555 = vmatprep.subr.bf16.mxu0 %v514
        %556 = vmatpush1.bf16.msra.mxu0 %v513
        %557 = vmatprep.subr.bf16.mxu0 %v511
        %558 = vmatpush1.bf16.msra.mxu0 %v510
        %559 = vmatprep.subr.bf16.mxu0 %v508
        %560 = vmatpush1.bf16.msra.mxu0 %v507
        %561 = vmatprep.subr.bf16.mxu0 %v505
        %562 = vmatpush1.bf16.msra.mxu0 %v504
        %563 = vmatprep.subr.bf16.mxu0 %v502
        %564 = vmatpush1.bf16.msra.mxu0 %v501
        %565 = vmatprep.subr.bf16.mxu0 0
        %566 = vmatpush2.bf16.msra.mxu0 0
        %567 = vmatprep.subr.bf16.mxu0 0
        %568 = vmatpush2.bf16.msra.mxu0 0
        %569 = vmatprep.subr.bf16.mxu0 0
        %570 = vmatpush2.bf16.msra.mxu0 0
        %571 = vmatprep.subr.bf16.mxu0 0
        %572 = vmatpush2.bf16.msra.mxu0 0
        %573 = vmatprep.subr.bf16.mxu0 0
        %574 = vmatpush2.bf16.msra.mxu0 0
        %575 = vmatprep.subr.bf16.mxu0 0
        %576 = vmatpush2.bf16.msra.mxu0 0
        %577 = vmatprep.subr.bf16.mxu0 0
        %578 = vmatpush2.bf16.msra.mxu0 0
        %579 = vmatprep.subr.bf16.mxu0 0
        %580 = vmatpush2.bf16.msra.mxu0 0
        %581 = vmatprep.mubr.bf16.mxu0 0
        %582 = vmatmul.mubr.bf16.gmra.mxu0 %v405
        %v583 = vpop.f32.mrf.mxu0
        %v584 = vadd.f32 %v361, %v583
        %v585 = vpop.f32.mrf.mxu0
        %v586 = vadd.f32 %v365, %v585
        %v587 = vpop.f32.mrf.mxu0
        %v588 = vadd.f32 %v361, %v587
        %v589 = vpop.f32.mrf.mxu0
        %v590 = vadd.f32 %v365, %v589
        %591 = vmatprep.mubr.bf16.mxu0 0
        %592 = vmatmul.mubr.bf16.gmra.mxu0 %v406
        %v593 = vpop.f32.mrf.mxu0
        %v594 = vadd.f32 %v361, %v593
        %v595 = vpop.f32.mrf.mxu0
        %v596 = vadd.f32 %v365, %v595
        %v597 = vpop.f32.mrf.mxu0
        %v598 = vadd.f32 %v361, %v597
        %v599 = vpop.f32.mrf.mxu0
        %v600 = vadd.f32 %v365, %v599
        %601 = vmatprep.mubr.bf16.mxu0 0
        %602 = vmatmul.mubr.bf16.gmra.mxu0 %v407
        %v603 = vpop.f32.mrf.mxu0
        %v604 = vadd.f32 %v361, %v603
        %v605 = vpop.f32.mrf.mxu0
        %v606 = vadd.f32 %v365, %v605
        %v607 = vpop.f32.mrf.mxu0
        %v608 = vadd.f32 %v361, %v607
        %v609 = vpop.f32.mrf.mxu0
        %v610 = vadd.f32 %v365, %v609
        %611 = vmatprep.mubr.bf16.mxu0 0
        %612 = vmatmul.mubr.bf16.gmra.mxu0 %v408
        %v613 = vpop.f32.mrf.mxu0
        %v614 = vadd.f32 %v361, %v613
        %v615 = vpop.f32.mrf.mxu0
        %v616 = vadd.f32 %v365, %v615
        %v617 = vpop.f32.mrf.mxu0
        %v618 = vadd.f32 %v361, %v617
        %v619 = vpop.f32.mrf.mxu0
        %v620 = vadd.f32 %v365, %v619
        %621 = vmatprep.mubr.bf16.mxu0 0
        %622 = vmatmul.mubr.bf16.gmra.mxu0 %v409
        %v623 = vpop.f32.mrf.mxu0
        %v624 = vadd.f32 %v361, %v623
        %v625 = vpop.f32.mrf.mxu0
        %v626 = vadd.f32 %v365, %v625
        %v627 = vpop.f32.mrf.mxu0
        %v628 = vadd.f32 %v361, %v627
        %v629 = vpop.f32.mrf.mxu0
        %v630 = vadd.f32 %v365, %v629
        %631 = vmatprep.mubr.bf16.mxu0 0
        %632 = vmatmul.mubr.bf16.gmra.mxu0 %v410
        %v633 = vpop.f32.mrf.mxu0
        %v634 = vadd.f32 %v361, %v633
        %v635 = vpop.f32.mrf.mxu0
        %v636 = vadd.f32 %v365, %v635
        %v637 = vpop.f32.mrf.mxu0
        %v638 = vadd.f32 %v361, %v637
        %v639 = vpop.f32.mrf.mxu0
        %v640 = vadd.f32 %v365, %v639
        %641 = vmatprep.mubr.bf16.mxu0 0
        %642 = vmatmul.mubr.bf16.gmra.mxu0 %v411
        %v643 = vpop.f32.mrf.mxu0
        %v644 = vadd.f32 %v361, %v643
        %v645 = vpop.f32.mrf.mxu0
        %v646 = vadd.f32 %v365, %v645
        %v647 = vpop.f32.mrf.mxu0
        %v648 = vadd.f32 %v361, %v647
        %v649 = vpop.f32.mrf.mxu0
        %v650 = vadd.f32 %v365, %v649
        %651 = vmatprep.mubr.bf16.mxu0 0
        %652 = vmatmul.mubr.bf16.gmra.mxu0 %v412
        %v653 = vpop.f32.mrf.mxu0
        %v654 = vadd.f32 %v361, %v653
        %v655 = vpop.f32.mrf.mxu0
        %v656 = vadd.f32 %v365, %v655
        %v657 = vpop.f32.mrf.mxu0
        %v658 = vadd.f32 %v361, %v657
        %v659 = vpop.f32.mrf.mxu0
        %v660 = vadd.f32 %v365, %v659
        %661 = vdwg.mxu0
        %662 = vmatprep.subr.bf16.mxu0 0
        %663 = vmatpush1.bf16.msra.mxu0 %v524
        %664 = vmatprep.subr.bf16.mxu0 0
        %665 = vmatpush1.bf16.msra.mxu0 %v521
        %666 = vmatprep.subr.bf16.mxu0 0
        %667 = vmatpush1.bf16.msra.mxu0 %v518
        %668 = vmatprep.subr.bf16.mxu0 0
        %669 = vmatpush1.bf16.msra.mxu0 %v515
        %670 = vmatprep.subr.bf16.mxu0 0
        %671 = vmatpush1.bf16.msra.mxu0 %v512
        %672 = vmatprep.subr.bf16.mxu0 0
        %673 = vmatpush1.bf16.msra.mxu0 %v509
        %674 = vmatprep.subr.bf16.mxu0 0
        %675 = vmatpush1.bf16.msra.mxu0 %v506
        %676 = vmatprep.subr.bf16.mxu0 0
        %677 = vmatpush1.bf16.msra.mxu0 %v503
        %678 = vmatprep.subr.bf16.mxu0 0
        %679 = vmatpush2.bf16.msra.mxu0 0
        %680 = vmatprep.subr.bf16.mxu0 0
        %681 = vmatpush2.bf16.msra.mxu0 0
        %682 = vmatprep.subr.bf16.mxu0 0
        %683 = vmatpush2.bf16.msra.mxu0 0
        %684 = vmatprep.subr.bf16.mxu0 0
        %685 = vmatpush2.bf16.msra.mxu0 0
        %686 = vmatprep.subr.bf16.mxu0 0
        %687 = vmatpush2.bf16.msra.mxu0 0
        %688 = vmatprep.subr.bf16.mxu0 0
        %689 = vmatpush2.bf16.msra.mxu0 0
        %690 = vmatprep.subr.bf16.mxu0 0
        %691 = vmatpush2.bf16.msra.mxu0 0
        %692 = vmatprep.subr.bf16.mxu0 0
        %693 = vmatpush2.bf16.msra.mxu0 0
        %694 = vmatprep.mubr.bf16.mxu0 0
        %695 = vmatmul.mubr.bf16.gmra.mxu0 %v405
        %v696 = vpop.f32.mrf.mxu0
        %v697 = vadd.f32 %v369, %v696
        %v698 = vpop.f32.mrf.mxu0
        %v699 = vpop.f32.mrf.mxu0
        %v700 = vadd.f32 %v369, %v699
        %v701 = vpop.f32.mrf.mxu0
        %702 = vmatprep.mubr.bf16.mxu0 0
        %703 = vmatmul.mubr.bf16.gmra.mxu0 %v406
        %v704 = vpop.f32.mrf.mxu0
        %v705 = vadd.f32 %v369, %v704
        %v706 = vpop.f32.mrf.mxu0
        %v707 = vpop.f32.mrf.mxu0
        %v708 = vadd.f32 %v369, %v707
        %v709 = vpop.f32.mrf.mxu0
        %710 = vmatprep.mubr.bf16.mxu0 0
        %711 = vmatmul.mubr.bf16.gmra.mxu0 %v407
        %v712 = vpop.f32.mrf.mxu0
        %v713 = vadd.f32 %v369, %v712
        %v714 = vpop.f32.mrf.mxu0
        %v715 = vpop.f32.mrf.mxu0
        %v716 = vadd.f32 %v369, %v715
        %v717 = vpop.f32.mrf.mxu0
        %718 = vmatprep.mubr.bf16.mxu0 0
        %719 = vmatmul.mubr.bf16.gmra.mxu0 %v408
        %v720 = vpop.f32.mrf.mxu0
        %v721 = vadd.f32 %v369, %v720
        %v722 = vpop.f32.mrf.mxu0
        %v723 = vpop.f32.mrf.mxu0
        %v724 = vadd.f32 %v369, %v723
        %v725 = vpop.f32.mrf.mxu0
        %726 = vmatprep.mubr.bf16.mxu0 0
        %727 = vmatmul.mubr.bf16.gmra.mxu0 %v409
        %v728 = vpop.f32.mrf.mxu0
        %v729 = vadd.f32 %v369, %v728
        %v730 = vpop.f32.mrf.mxu0
        %v731 = vpop.f32.mrf.mxu0
        %v732 = vadd.f32 %v369, %v731
        %v733 = vpop.f32.mrf.mxu0
        %734 = vmatprep.mubr.bf16.mxu0 0
        %735 = vmatmul.mubr.bf16.gmra.mxu0 %v410
        %v736 = vpop.f32.mrf.mxu0
        %v737 = vadd.f32 %v369, %v736
        %v738 = vpop.f32.mrf.mxu0
        %v739 = vpop.f32.mrf.mxu0
        %v740 = vadd.f32 %v369, %v739
        %v741 = vpop.f32.mrf.mxu0
        %742 = vmatprep.mubr.bf16.mxu0 0
        %743 = vmatmul.mubr.bf16.gmra.mxu0 %v411
        %v744 = vpop.f32.mrf.mxu0
        %v745 = vadd.f32 %v369, %v744
        %v746 = vpop.f32.mrf.mxu0
        %v747 = vpop.f32.mrf.mxu0
        %v748 = vadd.f32 %v369, %v747
        %v749 = vpop.f32.mrf.mxu0
        %750 = vmatprep.mubr.bf16.mxu0 0
        %751 = vmatmul.mubr.bf16.gmra.mxu0 %v412
        %v752 = vpop.f32.mrf.mxu0
        %v753 = vadd.f32 %v369, %v752
        %v754 = vpop.f32.mrf.mxu0
        %v755 = vpop.f32.mrf.mxu0
        %v756 = vadd.f32 %v369, %v755
        %v757 = vpop.f32.mrf.mxu0
        %758 = vdwg.mxu0
        %v759 = vpack.c.bf16 %v588, %v584
        %v760 = vpack.c.bf16 %v590, %v586
        %v761 = vpack.c.bf16 %v700, %v697
        %v762 = vpack.c.bf16 %v598, %v594
        %v763 = vpack.c.bf16 %v600, %v596
        %v764 = vpack.c.bf16 %v708, %v705
        %v765 = vpack.c.bf16 %v608, %v604
        %v766 = vpack.c.bf16 %v610, %v606
        %v767 = vpack.c.bf16 %v716, %v713
        %v768 = vpack.c.bf16 %v618, %v614
        %v769 = vpack.c.bf16 %v620, %v616
        %v770 = vpack.c.bf16 %v724, %v721
        %v771 = vpack.c.bf16 %v628, %v624
        %v772 = vpack.c.bf16 %v630, %v626
        %v773 = vpack.c.bf16 %v732, %v729
        %v774 = vpack.c.bf16 %v638, %v634
        %v775 = vpack.c.bf16 %v640, %v636
        %v776 = vpack.c.bf16 %v740, %v737
        %v777 = vpack.c.bf16 %v648, %v644
        %v778 = vpack.c.bf16 %v650, %v646
        %v779 = vpack.c.bf16 %v748, %v745
        %v780 = vpack.c.bf16 %v658, %v654
        %v781 = vpack.c.bf16 %v660, %v656
        %v782 = vpack.c.bf16 %v756, %v753
        %v807 = vunpack.c.l.b16 %v759
        %v808 = vunpack.c.l.b16 %v760
        %v809 = vunpack.c.l.b16 %v761
        %v810 = vunpack.c.h.b16 %v759
        %v811 = vunpack.c.h.b16 %v760
        %v812 = vunpack.c.h.b16 %v761
        %v813 = vunpack.c.l.b16 %v762
        %v814 = vunpack.c.l.b16 %v763
        %v815 = vunpack.c.l.b16 %v764
        %v816 = vunpack.c.h.b16 %v762
        %v817 = vunpack.c.h.b16 %v763
        %v818 = vunpack.c.h.b16 %v764
        %v819 = vunpack.c.l.b16 %v765
        %v820 = vunpack.c.l.b16 %v766
        %v821 = vunpack.c.l.b16 %v767
        %v822 = vunpack.c.h.b16 %v765
        %v823 = vunpack.c.h.b16 %v766
        %v824 = vunpack.c.h.b16 %v767
        %v825 = vunpack.c.l.b16 %v768
        %v826 = vunpack.c.l.b16 %v769
        %v827 = vunpack.c.l.b16 %v770
        %v828 = vunpack.c.h.b16 %v768
        %v829 = vunpack.c.h.b16 %v769
        %v830 = vunpack.c.h.b16 %v770
        %v831 = vunpack.c.l.b16 %v771
        %v832 = vunpack.c.l.b16 %v772
        %v833 = vunpack.c.l.b16 %v773
        %v834 = vunpack.c.h.b16 %v771
        %v835 = vunpack.c.h.b16 %v772
        %v836 = vunpack.c.h.b16 %v773
        %v837 = vunpack.c.l.b16 %v774
        %v838 = vunpack.c.l.b16 %v775
        %v839 = vunpack.c.l.b16 %v776
        %v840 = vunpack.c.h.b16 %v774
        %v841 = vunpack.c.h.b16 %v775
        %v842 = vunpack.c.h.b16 %v776
        %v843 = vunpack.c.l.b16 %v777
        %v844 = vunpack.c.l.b16 %v778
        %v845 = vunpack.c.l.b16 %v779
        %v846 = vunpack.c.h.b16 %v777
        %v847 = vunpack.c.h.b16 %v778
        %v848 = vunpack.c.h.b16 %v779
        %v849 = vunpack.c.l.b16 %v780
        %v850 = vunpack.c.l.b16 %v781
        %v851 = vunpack.c.l.b16 %v782
        %v852 = vunpack.c.h.b16 %v780
        %v853 = vunpack.c.h.b16 %v781
        %v854 = vunpack.c.h.b16 %v782
        %v855 = vpack.c.b16 %v808, %v807
        %v856 = vpack.c.b16 %v809, %v809
        %v857 = vpack.c.b16 %v811, %v810
        %v858 = vpack.c.b16 %v812, %v812
        %v859 = vpack.c.b16 %v814, %v813
        %v860 = vpack.c.b16 %v815, %v815
        %v861 = vpack.c.b16 %v817, %v816
        %v862 = vpack.c.b16 %v818, %v818
        %v863 = vpack.c.b16 %v820, %v819
        %v864 = vpack.c.b16 %v821, %v821
        %v865 = vpack.c.b16 %v823, %v822
        %v866 = vpack.c.b16 %v824, %v824
        %v867 = vpack.c.b16 %v826, %v825
        %v868 = vpack.c.b16 %v827, %v827
        %v869 = vpack.c.b16 %v829, %v828
        %v870 = vpack.c.b16 %v830, %v830
        %v871 = vpack.c.b16 %v832, %v831
        %v872 = vpack.c.b16 %v833, %v833
        %v873 = vpack.c.b16 %v835, %v834
        %v874 = vpack.c.b16 %v836, %v836
        %v875 = vpack.c.b16 %v838, %v837
        %v876 = vpack.c.b16 %v839, %v839
        %v877 = vpack.c.b16 %v841, %v840
        %v878 = vpack.c.b16 %v842, %v842
        %v879 = vpack.c.b16 %v844, %v843
        %v880 = vpack.c.b16 %v845, %v845
        %v881 = vpack.c.b16 %v847, %v846
        %v882 = vpack.c.b16 %v848, %v848
        %v883 = vpack.c.b16 %v850, %v849
        %v884 = vpack.c.b16 %v851, %v851
        %v885 = vpack.c.b16 %v853, %v852
        %v886 = vpack.c.b16 %v854, %v854
        %919 = vst [vmem:[#allocation2] sm:$0xff] %v855
        %920 = vst [vmem:[#allocation2 + $0x8] sm:$0xf] %v856
        %921 = vst [vmem:[#allocation2 + $0xc] sm:$0xff] %v857
        %922 = vst [vmem:[#allocation2 + $0x14] sm:$0xf] %v858
        %923 = vst [vmem:[#allocation2 + $0x18] sm:$0xff] %v859
        %924 = vst [vmem:[#allocation2 + $0x20] sm:$0xf] %v860
        %925 = vst [vmem:[#allocation2 + $0x24] sm:$0xff] %v861
        %926 = vst [vmem:[#allocation2 + $0x2c] sm:$0xf] %v862
        %927 = vst [vmem:[#allocation2 + $0x30] sm:$0xff] %v863
        %928 = vst [vmem:[#allocation2 + $0x38] sm:$0xf] %v864
        %929 = vst [vmem:[#allocation2 + $0x3c] sm:$0xff] %v865
        %930 = vst [vmem:[#allocation2 + $0x44] sm:$0xf] %v866
        %931 = vst [vmem:[#allocation2 + $0x48] sm:$0xff] %v867
        %932 = vst [vmem:[#allocation2 + $0x50] sm:$0xf] %v868
        %933 = vst [vmem:[#allocation2 + $0x54] sm:$0xff] %v869
        %934 = vst [vmem:[#allocation2 + $0x5c] sm:$0xf] %v870
        %935 = vst [vmem:[#allocation2 + $0x60] sm:$0xff] %v871
        %936 = vst [vmem:[#allocation2 + $0x68] sm:$0xf] %v872
        %937 = vst [vmem:[#allocation2 + $0x6c] sm:$0xff] %v873
        %938 = vst [vmem:[#allocation2 + $0x74] sm:$0xf] %v874
        %939 = vst [vmem:[#allocation2 + $0x78] sm:$0xff] %v875
        %940 = vst [vmem:[#allocation2 + $0x80] sm:$0xf] %v876
        %941 = vst [vmem:[#allocation2 + $0x84] sm:$0xff] %v877
        %942 = vst [vmem:[#allocation2 + $0x8c] sm:$0xf] %v878
        %943 = vst [vmem:[#allocation2 + $0x90] sm:$0xff] %v879
        %944 = vst [vmem:[#allocation2 + $0x98] sm:$0xf] %v880
        %945 = vst [vmem:[#allocation2 + $0x9c] sm:$0xff] %v881
        %946 = vst [vmem:[#allocation2 + $0xa4] sm:$0xf] %v882
        %947 = vst [vmem:[#allocation2 + $0xa8] sm:$0xff] %v883
        %948 = vst [vmem:[#allocation2 + $0xb0] sm:$0xf] %v884
        %949 = vst [vmem:[#allocation2 + $0xb4] sm:$0xff] %v885
        %950 = vst [vmem:[#allocation2 + $0xbc] sm:$0xf] %v886
        %v951 = vld [vmem:[%s4] sm:$0x7]
        %v953 = vlaneseq
        %v954 = vshrl.u32 %v953, 7
        %v955 = vsub.s32 0, %v954
        %v956 = vrot.slane %v951, %v955
        %v957 = vlaneseq
        %v958 = vshrl.u32 %v957, 7
        %v959 = vsub.s32 1, %v958
        %v960 = vrot.slane %v951, %v959
        %v961 = vlaneseq
        %v962 = vshrl.u32 %v961, 7
        %v963 = vsub.s32 2, %v962
        %v964 = vrot.slane %v951, %v963
        %v968 = vld [vmem:[%s2] sm:$0xff]
        %v969 = vld [vmem:[%s2 + $0x8] sm:$0xf]
        %v970 = vld [vmem:[%s2 + $0xc] sm:$0xff]
        %v971 = vld [vmem:[%s2 + $0x14] sm:$0xf]
        %v972 = vld [vmem:[%s2 + $0x18] sm:$0xff]
        %v973 = vld [vmem:[%s2 + $0x20] sm:$0xf]
        %v974 = vld [vmem:[%s2 + $0x24] sm:$0xff]
        %v975 = vld [vmem:[%s2 + $0x2c] sm:$0xf]
        %v976 = vld [vmem:[%s2 + $0x30] sm:$0xff]
        %v977 = vld [vmem:[%s2 + $0x38] sm:$0xf]
        %v978 = vld [vmem:[%s2 + $0x3c] sm:$0xff]
        %v979 = vld [vmem:[%s2 + $0x44] sm:$0xf]
        %v980 = vld [vmem:[%s2 + $0x48] sm:$0xff]
        %v981 = vld [vmem:[%s2 + $0x50] sm:$0xf]
        %v982 = vld [vmem:[%s2 + $0x54] sm:$0xff]
        %v983 = vld [vmem:[%s2 + $0x5c] sm:$0xf]
        %v984 = vld [vmem:[%s2 + $0x60] sm:$0xff]
        %v985 = vld [vmem:[%s2 + $0x68] sm:$0xf]
        %v986 = vld [vmem:[%s2 + $0x6c] sm:$0xff]
        %v987 = vld [vmem:[%s2 + $0x74] sm:$0xf]
        %v988 = vld [vmem:[%s2 + $0x78] sm:$0xff]
        %v989 = vld [vmem:[%s2 + $0x80] sm:$0xf]
        %v990 = vld [vmem:[%s2 + $0x84] sm:$0xff]
        %v991 = vld [vmem:[%s2 + $0x8c] sm:$0xf]
        %v992 = vld [vmem:[%s2 + $0x90] sm:$0xff]
        %v993 = vld [vmem:[%s2 + $0x98] sm:$0xf]
        %v994 = vld [vmem:[%s2 + $0x9c] sm:$0xff]
        %v995 = vld [vmem:[%s2 + $0xa4] sm:$0xf]
        %v996 = vld [vmem:[%s2 + $0xa8] sm:$0xff]
        %v997 = vld [vmem:[%s2 + $0xb0] sm:$0xf]
        %v998 = vld [vmem:[%s2 + $0xb4] sm:$0xff]
        %v999 = vld [vmem:[%s2 + $0xbc] sm:$0xf]
        %v1000 = vld [vmem:[#allocation3] sm:$0xff]
        %v1001 = vld [vmem:[#allocation3 + $0x8] sm:$0xff]
        %v1002 = vld [vmem:[#allocation2] sm:$0xff]
        %v1003 = vld [vmem:[#allocation2 + $0x8] sm:$0xf]
        %v1004 = vld [vmem:[#allocation2 + $0xc] sm:$0xff]
        %v1005 = vld [vmem:[#allocation2 + $0x14] sm:$0xf]
        %v1006 = vpack.c.bf16 %v1001, %v1000
        %v1039 = vunpack.c.l.b16 %v968
        %v1040 = vunpack.c.h.b16 %v968
        %v1041 = vunpack.c.l.b16 %v969
        %v1042 = vunpack.c.l.b16 %v970
        %v1043 = vunpack.c.h.b16 %v970
        %v1044 = vunpack.c.l.b16 %v971
        %v1045 = vunpack.c.l.b16 %v972
        %v1046 = vunpack.c.h.b16 %v972
        %v1047 = vunpack.c.l.b16 %v973
        %v1048 = vunpack.c.l.b16 %v974
        %v1049 = vunpack.c.h.b16 %v974
        %v1050 = vunpack.c.l.b16 %v975
        %v1051 = vunpack.c.l.b16 %v976
        %v1052 = vunpack.c.h.b16 %v976
        %v1053 = vunpack.c.l.b16 %v977
        %v1054 = vunpack.c.l.b16 %v978
        %v1055 = vunpack.c.h.b16 %v978
        %v1056 = vunpack.c.l.b16 %v979
        %v1057 = vunpack.c.l.b16 %v980
        %v1058 = vunpack.c.h.b16 %v980
        %v1059 = vunpack.c.l.b16 %v981
        %v1060 = vunpack.c.l.b16 %v982
        %v1061 = vunpack.c.h.b16 %v982
        %v1062 = vunpack.c.l.b16 %v983
        %v1063 = vunpack.c.l.b16 %v984
        %v1064 = vunpack.c.h.b16 %v984
        %v1065 = vunpack.c.l.b16 %v985
        %v1066 = vunpack.c.l.b16 %v986
        %v1067 = vunpack.c.h.b16 %v986
        %v1068 = vunpack.c.l.b16 %v987
        %v1069 = vunpack.c.l.b16 %v988
        %v1070 = vunpack.c.h.b16 %v988
        %v1071 = vunpack.c.l.b16 %v989
        %v1072 = vunpack.c.l.b16 %v990
        %v1073 = vunpack.c.h.b16 %v990
        %v1074 = vunpack.c.l.b16 %v991
        %v1075 = vunpack.c.l.b16 %v992
        %v1076 = vunpack.c.h.b16 %v992
        %v1077 = vunpack.c.l.b16 %v993
        %v1078 = vunpack.c.l.b16 %v994
        %v1079 = vunpack.c.h.b16 %v994
        %v1080 = vunpack.c.l.b16 %v995
        %v1081 = vunpack.c.l.b16 %v996
        %v1082 = vunpack.c.h.b16 %v996
        %v1083 = vunpack.c.l.b16 %v997
        %v1084 = vunpack.c.l.b16 %v998
        %v1085 = vunpack.c.h.b16 %v998
        %v1086 = vunpack.c.l.b16 %v999
        %v1087 = vpack.c.b16 %v1042, %v1039
        %v1088 = vpack.c.b16 %v1043, %v1040
        %v1089 = vpack.c.b16 %v1044, %v1041
        %v1090 = vpack.c.b16 %v1048, %v1045
        %v1091 = vpack.c.b16 %v1049, %v1046
        %v1092 = vpack.c.b16 %v1050, %v1047
        %v1093 = vpack.c.b16 %v1054, %v1051
        %v1094 = vpack.c.b16 %v1055, %v1052
        %v1095 = vpack.c.b16 %v1056, %v1053
        %v1096 = vpack.c.b16 %v1060, %v1057
        %v1097 = vpack.c.b16 %v1061, %v1058
        %v1098 = vpack.c.b16 %v1062, %v1059
        %v1099 = vpack.c.b16 %v1066, %v1063
        %v1100 = vpack.c.b16 %v1067, %v1064
        %v1101 = vpack.c.b16 %v1068, %v1065
        %v1102 = vpack.c.b16 %v1072, %v1069
        %v1103 = vpack.c.b16 %v1073, %v1070
        %v1104 = vpack.c.b16 %v1074, %v1071
        %v1105 = vpack.c.b16 %v1078, %v1075
        %v1106 = vpack.c.b16 %v1079, %v1076
        %v1107 = vpack.c.b16 %v1080, %v1077
        %v1108 = vpack.c.b16 %v1084, %v1081
        %v1109 = vpack.c.b16 %v1085, %v1082
        %v1110 = vpack.c.b16 %v1086, %v1083
        %1135 = vmatprep.subr.bf16.mxu0 %v1109
        %1136 = vmatpush1.bf16.msra.mxu0 %v1108
        %1137 = vmatprep.subr.bf16.mxu0 %v1106
        %1138 = vmatpush1.bf16.msra.mxu0 %v1105
        %1139 = vmatprep.subr.bf16.mxu0 %v1103
        %1140 = vmatpush1.bf16.msra.mxu0 %v1102
        %1141 = vmatprep.subr.bf16.mxu0 %v1100
        %1142 = vmatpush1.bf16.msra.mxu0 %v1099
        %1143 = vmatprep.subr.bf16.mxu0 %v1097
        %1144 = vmatpush1.bf16.msra.mxu0 %v1096
        %1145 = vmatprep.subr.bf16.mxu0 %v1094
        %1146 = vmatpush1.bf16.msra.mxu0 %v1093
        %1147 = vmatprep.subr.bf16.mxu0 %v1091
        %1148 = vmatpush1.bf16.msra.mxu0 %v1090
        %1149 = vmatprep.subr.bf16.mxu0 %v1088
        %1150 = vmatpush1.bf16.msra.mxu0 %v1087
        %1151 = vmatprep.subr.bf16.mxu0 0
        %1152 = vmatpush2.bf16.msra.mxu0 0
        %1153 = vmatprep.subr.bf16.mxu0 0
        %1154 = vmatpush2.bf16.msra.mxu0 0
        %1155 = vmatprep.subr.bf16.mxu0 0
        %1156 = vmatpush2.bf16.msra.mxu0 0
        %1157 = vmatprep.subr.bf16.mxu0 0
        %1158 = vmatpush2.bf16.msra.mxu0 0
        %1159 = vmatprep.subr.bf16.mxu0 0
        %1160 = vmatpush2.bf16.msra.mxu0 0
        %1161 = vmatprep.subr.bf16.mxu0 0
        %1162 = vmatpush2.bf16.msra.mxu0 0
        %1163 = vmatprep.subr.bf16.mxu0 0
        %1164 = vmatpush2.bf16.msra.mxu0 0
        %1165 = vmatprep.subr.bf16.mxu0 0
        %1166 = vmatpush2.bf16.msra.mxu0 0
        %1167 = vmatprep.mubr.bf16.mxu0 0
        %1168 = vmatmul.mubr.bf16.gmra.mxu0 %v1006
        %v1169 = vpop.f32.mrf.mxu0
        %v1170 = vadd.f32 %v956, %v1169
        %v1171 = vpop.f32.mrf.mxu0
        %v1172 = vadd.f32 %v960, %v1171
        %v1173 = vpop.f32.mrf.mxu0
        %v1174 = vadd.f32 %v956, %v1173
        %v1175 = vpop.f32.mrf.mxu0
        %v1176 = vadd.f32 %v960, %v1175
        %1177 = vdwg.mxu0
        %1178 = vmatprep.subr.bf16.mxu0 0
        %1179 = vmatpush1.bf16.msra.mxu0 %v1110
        %1180 = vmatprep.subr.bf16.mxu0 0
        %1181 = vmatpush1.bf16.msra.mxu0 %v1107
        %1182 = vmatprep.subr.bf16.mxu0 0
        %1183 = vmatpush1.bf16.msra.mxu0 %v1104
        %1184 = vmatprep.subr.bf16.mxu0 0
        %1185 = vmatpush1.bf16.msra.mxu0 %v1101
        %1186 = vmatprep.subr.bf16.mxu0 0
        %1187 = vmatpush1.bf16.msra.mxu0 %v1098
        %1188 = vmatprep.subr.bf16.mxu0 0
        %1189 = vmatpush1.bf16.msra.mxu0 %v1095
        %1190 = vmatprep.subr.bf16.mxu0 0
        %1191 = vmatpush1.bf16.msra.mxu0 %v1092
        %1192 = vmatprep.subr.bf16.mxu0 0
        %1193 = vmatpush1.bf16.msra.mxu0 %v1089
        %1194 = vmatprep.subr.bf16.mxu0 0
        %1195 = vmatpush2.bf16.msra.mxu0 0
        %1196 = vmatprep.subr.bf16.mxu0 0
        %1197 = vmatpush2.bf16.msra.mxu0 0
        %1198 = vmatprep.subr.bf16.mxu0 0
        %1199 = vmatpush2.bf16.msra.mxu0 0
        %1200 = vmatprep.subr.bf16.mxu0 0
        %1201 = vmatpush2.bf16.msra.mxu0 0
        %1202 = vmatprep.subr.bf16.mxu0 0
        %1203 = vmatpush2.bf16.msra.mxu0 0
        %1204 = vmatprep.subr.bf16.mxu0 0
        %1205 = vmatpush2.bf16.msra.mxu0 0
        %1206 = vmatprep.subr.bf16.mxu0 0
        %1207 = vmatpush2.bf16.msra.mxu0 0
        %1208 = vmatprep.subr.bf16.mxu0 0
        %1209 = vmatpush2.bf16.msra.mxu0 0
        %1210 = vmatprep.mubr.bf16.mxu0 0
        %1211 = vmatmul.mubr.bf16.gmra.mxu0 %v1006
        %v1212 = vpop.f32.mrf.mxu0
        %v1213 = vadd.f32 %v964, %v1212
        %v1214 = vpop.f32.mrf.mxu0
        %v1215 = vpop.f32.mrf.mxu0
        %v1216 = vadd.f32 %v964, %v1215
        %v1217 = vpop.f32.mrf.mxu0
        %1218 = vdwg.mxu0
        %v1219 = vunpack.c.l.bf16 %v1002
        %v1220 = vunpack.c.l.bf16 %v1004
        %v1221 = vadd.f32 %v1219, %v1170
        %v1222 = vadd.f32 %v1220, %v1174
        %v1223 = vxor.u32 %v1221, 2147483648
        %v1224 = vxor.u32 %v1222, 2147483648
        %v1225 = vmul.f32 %v1223, 1.442695
        %v1226 = vpow.pop %v1225
        %v1227 = vmul.f32 %v1224, 1.442695
        %v1228 = vpow.pop %v1227
        %v1229 = vadd.f32 %v1226, 1.0
        %v1230 = vadd.f32 %v1228, 1.0
        %v1231 = vrcp.pop %v1229
        %v1232 = vmul.f32 1.0, %v1231
        %v1233 = vrcp.pop %v1230
        %v1234 = vmul.f32 1.0, %v1233
        %v1237 = vrot.slane %v1002, 4
        %v1238 = vrot.slane %v1004, 4
        %v1241 = vunpack.c.l.bf16 %v1237
        %v1242 = vunpack.c.l.bf16 %v1238
        %v1243 = vadd.f32 %v1241, %v1172
        %v1244 = vadd.f32 %v1242, %v1176
        %v1245 = vxor.u32 %v1243, 2147483648
        %v1246 = vxor.u32 %v1244, 2147483648
        %v1247 = vmul.f32 %v1245, 1.442695
        %v1248 = vpow.pop %v1247
        %v1249 = vmul.f32 %v1246, 1.442695
        %v1250 = vpow.pop %v1249
        %v1251 = vadd.f32 %v1248, 1.0
        %v1252 = vadd.f32 %v1250, 1.0
        %v1253 = vrcp.pop %v1251
        %v1254 = vmul.f32 1.0, %v1253
        %v1255 = vrcp.pop %v1252
        %v1256 = vmul.f32 1.0, %v1255
        %v1257 = vmul.f32 %v1232, %v1213
        %v1258 = vmul.f32 %v1234, %v1216
        %v1259 = vunpack.c.l.bf16 %v1003
        %v1260 = vunpack.c.l.bf16 %v1005
        %v1261 = vadd.f32 %v1259, %v1257
        %v1262 = vadd.f32 %v1260, %v1258
        %v1263 = vtanh.pop %v1261
        %v1264 = vtanh.pop %v1262
        %v1265 = vsub.f32 %v1000, %v1263
        %v1266 = vsub.f32 %v1001, %v1264
        %v1267 = vmul.f32 %v1254, %v1265
        %v1268 = vmul.f32 %v1256, %v1266
        %v1269 = vadd.f32 %v1263, %v1267
        %v1270 = vadd.f32 %v1264, %v1268
        %1271 = vst [vmem:[%s273] sm:$0xff] %v1269
        %1272 = vst [vmem:[%s273 + $0x8] sm:$0xff] %v1270
        %s1273 = scalar_lea.vmem [#allocation2], 24
        %v1274 = vld [vmem:[%s1273] sm:$0xff]
        %v1275 = vld [vmem:[%s1273 + $0x8] sm:$0xf]
        %v1276 = vld [vmem:[%s1273 + $0xc] sm:$0xff]
        %v1277 = vld [vmem:[%s1273 + $0x14] sm:$0xf]
        %v1278 = vpack.c.bf16 %v1270, %v1269
        %1279 = vmatprep.subr.bf16.mxu0 %v1109
        %1280 = vmatpush1.bf16.msra.mxu0 %v1108
        %1281 = vmatprep.subr.bf16.mxu0 %v1106
        %1282 = vmatpush1.bf16.msra.mxu0 %v1105
        %1283 = vmatprep.subr.bf16.mxu0 %v1103
        %1284 = vmatpush1.bf16.msra.mxu0 %v1102
        %1285 = vmatprep.subr.bf16.mxu0 %v1100
        %1286 = vmatpush1.bf16.msra.mxu0 %v1099
        %1287 = vmatprep.subr.bf16.mxu0 %v1097
        %1288 = vmatpush1.bf16.msra.mxu0 %v1096
        %1289 = vmatprep.subr.bf16.mxu0 %v1094
        %1290 = vmatpush1.bf16.msra.mxu0 %v1093
        %1291 = vmatprep.subr.bf16.mxu0 %v1091
        %1292 = vmatpush1.bf16.msra.mxu0 %v1090
        %1293 = vmatprep.subr.bf16.mxu0 %v1088
        %1294 = vmatpush1.bf16.msra.mxu0 %v1087
        %1295 = vmatprep.subr.bf16.mxu0 0
        %1296 = vmatpush2.bf16.msra.mxu0 0
        %1297 = vmatprep.subr.bf16.mxu0 0
        %1298 = vmatpush2.bf16.msra.mxu0 0
        %1299 = vmatprep.subr.bf16.mxu0 0
        %1300 = vmatpush2.bf16.msra.mxu0 0
        %1301 = vmatprep.subr.bf16.mxu0 0
        %1302 = vmatpush2.bf16.msra.mxu0 0
        %1303 = vmatprep.subr.bf16.mxu0 0
        %1304 = vmatpush2.bf16.msra.mxu0 0
        %1305 = vmatprep.subr.bf16.mxu0 0
        %1306 = vmatpush2.bf16.msra.mxu0 0
        %1307 = vmatprep.subr.bf16.mxu0 0
        %1308 = vmatpush2.bf16.msra.mxu0 0
        %1309 = vmatprep.subr.bf16.mxu0 0
        %1310 = vmatpush2.bf16.msra.mxu0 0
        %1311 = vmatprep.mubr.bf16.mxu0 0
        %1312 = vmatmul.mubr.bf16.gmra.mxu0 %v1278
        %v1313 = vpop.f32.mrf.mxu0
        %v1314 = vadd.f32 %v956, %v1313
        %v1315 = vpop.f32.mrf.mxu0
        %v1316 = vadd.f32 %v960, %v1315
        %v1317 = vpop.f32.mrf.mxu0
        %v1318 = vadd.f32 %v956, %v1317
        %v1319 = vpop.f32.mrf.mxu0
        %v1320 = vadd.f32 %v960, %v1319
        %1321 = vdwg.mxu0
        %1322 = vmatprep.subr.bf16.mxu0 0
        %1323 = vmatpush1.bf16.msra.mxu0 %v1110
        %1324 = vmatprep.subr.bf16.mxu0 0
        %1325 = vmatpush1.bf16.msra.mxu0 %v1107
        %1326 = vmatprep.subr.bf16.mxu0 0
        %1327 = vmatpush1.bf16.msra.mxu0 %v1104
        %1328 = vmatprep.subr.bf16.mxu0 0
        %1329 = vmatpush1.bf16.msra.mxu0 %v1101
        %1330 = vmatprep.subr.bf16.mxu0 0
        %1331 = vmatpush1.bf16.msra.mxu0 %v1098
        %1332 = vmatprep.subr.bf16.mxu0 0
        %1333 = vmatpush1.bf16.msra.mxu0 %v1095
        %1334 = vmatprep.subr.bf16.mxu0 0
        %1335 = vmatpush1.bf16.msra.mxu0 %v1092
        %1336 = vmatprep.subr.bf16.mxu0 0
        %1337 = vmatpush1.bf16.msra.mxu0 %v1089
        %1338 = vmatprep.subr.bf16.mxu0 0
        %1339 = vmatpush2.bf16.msra.mxu0 0
        %1340 = vmatprep.subr.bf16.mxu0 0
        %1341 = vmatpush2.bf16.msra.mxu0 0
        %1342 = vmatprep.subr.bf16.mxu0 0
        %1343 = vmatpush2.bf16.msra.mxu0 0
        %1344 = vmatprep.subr.bf16.mxu0 0
        %1345 = vmatpush2.bf16.msra.mxu0 0
        %1346 = vmatprep.subr.bf16.mxu0 0
        %1347 = vmatpush2.bf16.msra.mxu0 0
        %1348 = vmatprep.subr.bf16.mxu0 0
        %1349 = vmatpush2.bf16.msra.mxu0 0
        %1350 = vmatprep.subr.bf16.mxu0 0
        %1351 = vmatpush2.bf16.msra.mxu0 0
        %1352 = vmatprep.subr.bf16.mxu0 0
        %1353 = vmatpush2.bf16.msra.mxu0 0
        %1354 = vmatprep.mubr.bf16.mxu0 0
        %1355 = vmatmul.mubr.bf16.gmra.mxu0 %v1278
        %v1356 = vpop.f32.mrf.mxu0
        %v1357 = vadd.f32 %v964, %v1356
        %v1358 = vpop.f32.mrf.mxu0
        %v1359 = vpop.f32.mrf.mxu0
        %v1360 = vadd.f32 %v964, %v1359
        %v1361 = vpop.f32.mrf.mxu0
        %1362 = vdwg.mxu0
        %v1363 = vunpack.c.l.bf16 %v1274
        %v1364 = vunpack.c.l.bf16 %v1276
        %v1365 = vadd.f32 %v1363, %v1314
        %v1366 = vadd.f32 %v1364, %v1318
        %v1367 = vxor.u32 %v1365, 2147483648
        %v1368 = vxor.u32 %v1366, 2147483648
        %v1369 = vmul.f32 %v1367, 1.442695
        %v1370 = vpow.pop %v1369
        %v1371 = vmul.f32 %v1368, 1.442695
        %v1372 = vpow.pop %v1371
        %v1373 = vadd.f32 %v1370, 1.0
        %v1374 = vadd.f32 %v1372, 1.0
        %v1375 = vrcp.pop %v1373
        %v1376 = vmul.f32 1.0, %v1375
        %v1377 = vrcp.pop %v1374
        %v1378 = vmul.f32 1.0, %v1377
        %v1381 = vrot.slane %v1274, 4
        %v1382 = vrot.slane %v1276, 4
        %v1385 = vunpack.c.l.bf16 %v1381
        %v1386 = vunpack.c.l.bf16 %v1382
        %v1387 = vadd.f32 %v1385, %v1316
        %v1388 = vadd.f32 %v1386, %v1320
        %v1389 = vxor.u32 %v1387, 2147483648
        %v1390 = vxor.u32 %v1388, 2147483648
        %v1391 = vmul.f32 %v1389, 1.442695
        %v1392 = vpow.pop %v1391
        %v1393 = vmul.f32 %v1390, 1.442695
        %v1394 = vpow.pop %v1393
        %v1395 = vadd.f32 %v1392, 1.0
        %v1396 = vadd.f32 %v1394, 1.0
        %v1397 = vrcp.pop %v1395
        %v1398 = vmul.f32 1.0, %v1397
        %v1399 = vrcp.pop %v1396
        %v1400 = vmul.f32 1.0, %v1399
        %v1401 = vmul.f32 %v1376, %v1357
        %v1402 = vmul.f32 %v1378, %v1360
        %v1403 = vunpack.c.l.bf16 %v1275
        %v1404 = vunpack.c.l.bf16 %v1277
        %v1405 = vadd.f32 %v1403, %v1401
        %v1406 = vadd.f32 %v1404, %v1402
        %v1407 = vtanh.pop %v1405
        %v1408 = vtanh.pop %v1406
        %v1409 = vsub.f32 %v1269, %v1407
        %v1410 = vsub.f32 %v1270, %v1408
        %v1411 = vmul.f32 %v1398, %v1409
        %v1412 = vmul.f32 %v1400, %v1410
        %v1413 = vadd.f32 %v1407, %v1411
        %v1414 = vadd.f32 %v1408, %v1412
        %s1415 = scalar_lea.vmem %s273, 16 [#allocation4]
        %1416 = vst [vmem:[%s1415] sm:$0xff] %v1413
        %1417 = vst [vmem:[%s1415 + $0x8] sm:$0xff] %v1414
        %s1418 = scalar_lea.vmem [#allocation2], 48
        %v1419 = vld [vmem:[%s1418] sm:$0xff]
        %v1420 = vld [vmem:[%s1418 + $0x8] sm:$0xf]
        %v1421 = vld [vmem:[%s1418 + $0xc] sm:$0xff]
        %v1422 = vld [vmem:[%s1418 + $0x14] sm:$0xf]
        %v1423 = vpack.c.bf16 %v1414, %v1413
        %1424 = vmatprep.subr.bf16.mxu0 %v1109
        %1425 = vmatpush1.bf16.msra.mxu0 %v1108
        %1426 = vmatprep.subr.bf16.mxu0 %v1106
        %1427 = vmatpush1.bf16.msra.mxu0 %v1105
        %1428 = vmatprep.subr.bf16.mxu0 %v1103
        %1429 = vmatpush1.bf16.msra.mxu0 %v1102
        %1430 = vmatprep.subr.bf16.mxu0 %v1100
        %1431 = vmatpush1.bf16.msra.mxu0 %v1099
        %1432 = vmatprep.subr.bf16.mxu0 %v1097
        %1433 = vmatpush1.bf16.msra.mxu0 %v1096
        %1434 = vmatprep.subr.bf16.mxu0 %v1094
        %1435 = vmatpush1.bf16.msra.mxu0 %v1093
        %1436 = vmatprep.subr.bf16.mxu0 %v1091
        %1437 = vmatpush1.bf16.msra.mxu0 %v1090
        %1438 = vmatprep.subr.bf16.mxu0 %v1088
        %1439 = vmatpush1.bf16.msra.mxu0 %v1087
        %1440 = vmatprep.subr.bf16.mxu0 0
        %1441 = vmatpush2.bf16.msra.mxu0 0
        %1442 = vmatprep.subr.bf16.mxu0 0
        %1443 = vmatpush2.bf16.msra.mxu0 0
        %1444 = vmatprep.subr.bf16.mxu0 0
        %1445 = vmatpush2.bf16.msra.mxu0 0
        %1446 = vmatprep.subr.bf16.mxu0 0
        %1447 = vmatpush2.bf16.msra.mxu0 0
        %1448 = vmatprep.subr.bf16.mxu0 0
        %1449 = vmatpush2.bf16.msra.mxu0 0
        %1450 = vmatprep.subr.bf16.mxu0 0
        %1451 = vmatpush2.bf16.msra.mxu0 0
        %1452 = vmatprep.subr.bf16.mxu0 0
        %1453 = vmatpush2.bf16.msra.mxu0 0
        %1454 = vmatprep.subr.bf16.mxu0 0
        %1455 = vmatpush2.bf16.msra.mxu0 0
        %1456 = vmatprep.mubr.bf16.mxu0 0
        %1457 = vmatmul.mubr.bf16.gmra.mxu0 %v1423
        %v1458 = vpop.f32.mrf.mxu0
        %v1459 = vadd.f32 %v956, %v1458
        %v1460 = vpop.f32.mrf.mxu0
        %v1461 = vadd.f32 %v960, %v1460
        %v1462 = vpop.f32.mrf.mxu0
        %v1463 = vadd.f32 %v956, %v1462
        %v1464 = vpop.f32.mrf.mxu0
        %v1465 = vadd.f32 %v960, %v1464
        %1466 = vdwg.mxu0
        %1467 = vmatprep.subr.bf16.mxu0 0
        %1468 = vmatpush1.bf16.msra.mxu0 %v1110
        %1469 = vmatprep.subr.bf16.mxu0 0
        %1470 = vmatpush1.bf16.msra.mxu0 %v1107
        %1471 = vmatprep.subr.bf16.mxu0 0
        %1472 = vmatpush1.bf16.msra.mxu0 %v1104
        %1473 = vmatprep.subr.bf16.mxu0 0
        %1474 = vmatpush1.bf16.msra.mxu0 %v1101
        %1475 = vmatprep.subr.bf16.mxu0 0
        %1476 = vmatpush1.bf16.msra.mxu0 %v1098
        %1477 = vmatprep.subr.bf16.mxu0 0
        %1478 = vmatpush1.bf16.msra.mxu0 %v1095
        %1479 = vmatprep.subr.bf16.mxu0 0
        %1480 = vmatpush1.bf16.msra.mxu0 %v1092
        %1481 = vmatprep.subr.bf16.mxu0 0
        %1482 = vmatpush1.bf16.msra.mxu0 %v1089
        %1483 = vmatprep.subr.bf16.mxu0 0
        %1484 = vmatpush2.bf16.msra.mxu0 0
        %1485 = vmatprep.subr.bf16.mxu0 0
        %1486 = vmatpush2.bf16.msra.mxu0 0
        %1487 = vmatprep.subr.bf16.mxu0 0
        %1488 = vmatpush2.bf16.msra.mxu0 0
        %1489 = vmatprep.subr.bf16.mxu0 0
        %1490 = vmatpush2.bf16.msra.mxu0 0
        %1491 = vmatprep.subr.bf16.mxu0 0
        %1492 = vmatpush2.bf16.msra.mxu0 0
        %1493 = vmatprep.subr.bf16.mxu0 0
        %1494 = vmatpush2.bf16.msra.mxu0 0
        %1495 = vmatprep.subr.bf16.mxu0 0
        %1496 = vmatpush2.bf16.msra.mxu0 0
        %1497 = vmatprep.subr.bf16.mxu0 0
        %1498 = vmatpush2.bf16.msra.mxu0 0
        %1499 = vmatprep.mubr.bf16.mxu0 0
        %1500 = vmatmul.mubr.bf16.gmra.mxu0 %v1423
        %v1501 = vpop.f32.mrf.mxu0
        %v1502 = vadd.f32 %v964, %v1501
        %v1503 = vpop.f32.mrf.mxu0
        %v1504 = vpop.f32.mrf.mxu0
        %v1505 = vadd.f32 %v964, %v1504
        %v1506 = vpop.f32.mrf.mxu0
        %1507 = vdwg.mxu0
        %v1508 = vunpack.c.l.bf16 %v1419
        %v1509 = vunpack.c.l.bf16 %v1421
        %v1510 = vadd.f32 %v1508, %v1459
        %v1511 = vadd.f32 %v1509, %v1463
        %v1512 = vxor.u32 %v1510, 2147483648
        %v1513 = vxor.u32 %v1511, 2147483648
        %v1514 = vmul.f32 %v1512, 1.442695
        %v1515 = vpow.pop %v1514
        %v1516 = vmul.f32 %v1513, 1.442695
        %v1517 = vpow.pop %v1516
        %v1518 = vadd.f32 %v1515, 1.0
        %v1519 = vadd.f32 %v1517, 1.0
        %v1520 = vrcp.pop %v1518
        %v1521 = vmul.f32 1.0, %v1520
        %v1522 = vrcp.pop %v1519
        %v1523 = vmul.f32 1.0, %v1522
        %v1526 = vrot.slane %v1419, 4
        %v1527 = vrot.slane %v1421, 4
        %v1530 = vunpack.c.l.bf16 %v1526
        %v1531 = vunpack.c.l.bf16 %v1527
        %v1532 = vadd.f32 %v1530, %v1461
        %v1533 = vadd.f32 %v1531, %v1465
        %v1534 = vxor.u32 %v1532, 2147483648
        %v1535 = vxor.u32 %v1533, 2147483648
        %v1536 = vmul.f32 %v1534, 1.442695
        %v1537 = vpow.pop %v1536
        %v1538 = vmul.f32 %v1535, 1.442695
        %v1539 = vpow.pop %v1538
        %v1540 = vadd.f32 %v1537, 1.0
        %v1541 = vadd.f32 %v1539, 1.0
        %v1542 = vrcp.pop %v1540
        %v1543 = vmul.f32 1.0, %v1542
        %v1544 = vrcp.pop %v1541
        %v1545 = vmul.f32 1.0, %v1544
        %v1546 = vmul.f32 %v1521, %v1502
        %v1547 = vmul.f32 %v1523, %v1505
        %v1548 = vunpack.c.l.bf16 %v1420
        %v1549 = vunpack.c.l.bf16 %v1422
        %v1550 = vadd.f32 %v1548, %v1546
        %v1551 = vadd.f32 %v1549, %v1547
        %v1552 = vtanh.pop %v1550
        %v1553 = vtanh.pop %v1551
        %v1554 = vsub.f32 %v1413, %v1552
        %v1555 = vsub.f32 %v1414, %v1553
        %v1556 = vmul.f32 %v1543, %v1554
        %v1557 = vmul.f32 %v1545, %v1555
        %v1558 = vadd.f32 %v1552, %v1556
        %v1559 = vadd.f32 %v1553, %v1557
        %s1560 = scalar_lea.vmem %s273, 32 [#allocation4]
        %1561 = vst [vmem:[%s1560] sm:$0xff] %v1558
        %1562 = vst [vmem:[%s1560 + $0x8] sm:$0xff] %v1559
        %s1563 = scalar_lea.vmem [#allocation2], 72
        %v1564 = vld [vmem:[%s1563] sm:$0xff]
        %v1565 = vld [vmem:[%s1563 + $0x8] sm:$0xf]
        %v1566 = vld [vmem:[%s1563 + $0xc] sm:$0xff]
        %v1567 = vld [vmem:[%s1563 + $0x14] sm:$0xf]
        %v1568 = vpack.c.bf16 %v1559, %v1558
        %1569 = vmatprep.subr.bf16.mxu0 %v1109
        %1570 = vmatpush1.bf16.msra.mxu0 %v1108
        %1571 = vmatprep.subr.bf16.mxu0 %v1106
        %1572 = vmatpush1.bf16.msra.mxu0 %v1105
        %1573 = vmatprep.subr.bf16.mxu0 %v1103
        %1574 = vmatpush1.bf16.msra.mxu0 %v1102
        %1575 = vmatprep.subr.bf16.mxu0 %v1100
        %1576 = vmatpush1.bf16.msra.mxu0 %v1099
        %1577 = vmatprep.subr.bf16.mxu0 %v1097
        %1578 = vmatpush1.bf16.msra.mxu0 %v1096
        %1579 = vmatprep.subr.bf16.mxu0 %v1094
        %1580 = vmatpush1.bf16.msra.mxu0 %v1093
        %1581 = vmatprep.subr.bf16.mxu0 %v1091
        %1582 = vmatpush1.bf16.msra.mxu0 %v1090
        %1583 = vmatprep.subr.bf16.mxu0 %v1088
        %1584 = vmatpush1.bf16.msra.mxu0 %v1087
        %1585 = vmatprep.subr.bf16.mxu0 0
        %1586 = vmatpush2.bf16.msra.mxu0 0
        %1587 = vmatprep.subr.bf16.mxu0 0
        %1588 = vmatpush2.bf16.msra.mxu0 0
        %1589 = vmatprep.subr.bf16.mxu0 0
        %1590 = vmatpush2.bf16.msra.mxu0 0
        %1591 = vmatprep.subr.bf16.mxu0 0
        %1592 = vmatpush2.bf16.msra.mxu0 0
        %1593 = vmatprep.subr.bf16.mxu0 0
        %1594 = vmatpush2.bf16.msra.mxu0 0
        %1595 = vmatprep.subr.bf16.mxu0 0
        %1596 = vmatpush2.bf16.msra.mxu0 0
        %1597 = vmatprep.subr.bf16.mxu0 0
        %1598 = vmatpush2.bf16.msra.mxu0 0
        %1599 = vmatprep.subr.bf16.mxu0 0
        %1600 = vmatpush2.bf16.msra.mxu0 0
        %1601 = vmatprep.mubr.bf16.mxu0 0
        %1602 = vmatmul.mubr.bf16.gmra.mxu0 %v1568
        %v1603 = vpop.f32.mrf.mxu0
        %v1604 = vadd.f32 %v956, %v1603
        %v1605 = vpop.f32.mrf.mxu0
        %v1606 = vadd.f32 %v960, %v1605
        %v1607 = vpop.f32.mrf.mxu0
        %v1608 = vadd.f32 %v956, %v1607
        %v1609 = vpop.f32.mrf.mxu0
        %v1610 = vadd.f32 %v960, %v1609
        %1611 = vdwg.mxu0
        %1612 = vmatprep.subr.bf16.mxu0 0
        %1613 = vmatpush1.bf16.msra.mxu0 %v1110
        %1614 = vmatprep.subr.bf16.mxu0 0
        %1615 = vmatpush1.bf16.msra.mxu0 %v1107
        %1616 = vmatprep.subr.bf16.mxu0 0
        %1617 = vmatpush1.bf16.msra.mxu0 %v1104
        %1618 = vmatprep.subr.bf16.mxu0 0
        %1619 = vmatpush1.bf16.msra.mxu0 %v1101
        %1620 = vmatprep.subr.bf16.mxu0 0
        %1621 = vmatpush1.bf16.msra.mxu0 %v1098
        %1622 = vmatprep.subr.bf16.mxu0 0
        %1623 = vmatpush1.bf16.msra.mxu0 %v1095
        %1624 = vmatprep.subr.bf16.mxu0 0
        %1625 = vmatpush1.bf16.msra.mxu0 %v1092
        %1626 = vmatprep.subr.bf16.mxu0 0
        %1627 = vmatpush1.bf16.msra.mxu0 %v1089
        %1628 = vmatprep.subr.bf16.mxu0 0
        %1629 = vmatpush2.bf16.msra.mxu0 0
        %1630 = vmatprep.subr.bf16.mxu0 0
        %1631 = vmatpush2.bf16.msra.mxu0 0
        %1632 = vmatprep.subr.bf16.mxu0 0
        %1633 = vmatpush2.bf16.msra.mxu0 0
        %1634 = vmatprep.subr.bf16.mxu0 0
        %1635 = vmatpush2.bf16.msra.mxu0 0
        %1636 = vmatprep.subr.bf16.mxu0 0
        %1637 = vmatpush2.bf16.msra.mxu0 0
        %1638 = vmatprep.subr.bf16.mxu0 0
        %1639 = vmatpush2.bf16.msra.mxu0 0
        %1640 = vmatprep.subr.bf16.mxu0 0
        %1641 = vmatpush2.bf16.msra.mxu0 0
        %1642 = vmatprep.subr.bf16.mxu0 0
        %1643 = vmatpush2.bf16.msra.mxu0 0
        %1644 = vmatprep.mubr.bf16.mxu0 0
        %1645 = vmatmul.mubr.bf16.gmra.mxu0 %v1568
        %v1646 = vpop.f32.mrf.mxu0
        %v1647 = vadd.f32 %v964, %v1646
        %v1648 = vpop.f32.mrf.mxu0
        %v1649 = vpop.f32.mrf.mxu0
        %v1650 = vadd.f32 %v964, %v1649
        %v1651 = vpop.f32.mrf.mxu0
        %1652 = vdwg.mxu0
        %v1653 = vunpack.c.l.bf16 %v1564
        %v1654 = vunpack.c.l.bf16 %v1566
        %v1655 = vadd.f32 %v1653, %v1604
        %v1656 = vadd.f32 %v1654, %v1608
        %v1657 = vxor.u32 %v1655, 2147483648
        %v1658 = vxor.u32 %v1656, 2147483648
        %v1659 = vmul.f32 %v1657, 1.442695
        %v1660 = vpow.pop %v1659
        %v1661 = vmul.f32 %v1658, 1.442695
        %v1662 = vpow.pop %v1661
        %v1663 = vadd.f32 %v1660, 1.0
        %v1664 = vadd.f32 %v1662, 1.0
        %v1665 = vrcp.pop %v1663
        %v1666 = vmul.f32 1.0, %v1665
        %v1667 = vrcp.pop %v1664
        %v1668 = vmul.f32 1.0, %v1667
        %v1671 = vrot.slane %v1564, 4
        %v1672 = vrot.slane %v1566, 4
        %v1675 = vunpack.c.l.bf16 %v1671
        %v1676 = vunpack.c.l.bf16 %v1672
        %v1677 = vadd.f32 %v1675, %v1606
        %v1678 = vadd.f32 %v1676, %v1610
        %v1679 = vxor.u32 %v1677, 2147483648
        %v1680 = vxor.u32 %v1678, 2147483648
        %v1681 = vmul.f32 %v1679, 1.442695
        %v1682 = vpow.pop %v1681
        %v1683 = vmul.f32 %v1680, 1.442695
        %v1684 = vpow.pop %v1683
        %v1685 = vadd.f32 %v1682, 1.0
        %v1686 = vadd.f32 %v1684, 1.0
        %v1687 = vrcp.pop %v1685
        %v1688 = vmul.f32 1.0, %v1687
        %v1689 = vrcp.pop %v1686
        %v1690 = vmul.f32 1.0, %v1689
        %v1691 = vmul.f32 %v1666, %v1647
        %v1692 = vmul.f32 %v1668, %v1650
        %v1693 = vunpack.c.l.bf16 %v1565
        %v1694 = vunpack.c.l.bf16 %v1567
        %v1695 = vadd.f32 %v1693, %v1691
        %v1696 = vadd.f32 %v1694, %v1692
        %v1697 = vtanh.pop %v1695
        %v1698 = vtanh.pop %v1696
        %v1699 = vsub.f32 %v1558, %v1697
        %v1700 = vsub.f32 %v1559, %v1698
        %v1701 = vmul.f32 %v1688, %v1699
        %v1702 = vmul.f32 %v1690, %v1700
        %v1703 = vadd.f32 %v1697, %v1701
        %v1704 = vadd.f32 %v1698, %v1702
        %s1705 = scalar_lea.vmem %s273, 48 [#allocation4]
        %1706 = vst [vmem:[%s1705] sm:$0xff] %v1703
        %1707 = vst [vmem:[%s1705 + $0x8] sm:$0xff] %v1704
        %s1708 = scalar_lea.vmem [#allocation2], 96
        %v1709 = vld [vmem:[%s1708] sm:$0xff]
        %v1710 = vld [vmem:[%s1708 + $0x8] sm:$0xf]
        %v1711 = vld [vmem:[%s1708 + $0xc] sm:$0xff]
        %v1712 = vld [vmem:[%s1708 + $0x14] sm:$0xf]
        %v1713 = vpack.c.bf16 %v1704, %v1703
        %1714 = vmatprep.subr.bf16.mxu0 %v1109
        %1715 = vmatpush1.bf16.msra.mxu0 %v1108
        %1716 = vmatprep.subr.bf16.mxu0 %v1106
        %1717 = vmatpush1.bf16.msra.mxu0 %v1105
        %1718 = vmatprep.subr.bf16.mxu0 %v1103
        %1719 = vmatpush1.bf16.msra.mxu0 %v1102
        %1720 = vmatprep.subr.bf16.mxu0 %v1100
        %1721 = vmatpush1.bf16.msra.mxu0 %v1099
        %1722 = vmatprep.subr.bf16.mxu0 %v1097
        %1723 = vmatpush1.bf16.msra.mxu0 %v1096
        %1724 = vmatprep.subr.bf16.mxu0 %v1094
        %1725 = vmatpush1.bf16.msra.mxu0 %v1093
        %1726 = vmatprep.subr.bf16.mxu0 %v1091
        %1727 = vmatpush1.bf16.msra.mxu0 %v1090
        %1728 = vmatprep.subr.bf16.mxu0 %v1088
        %1729 = vmatpush1.bf16.msra.mxu0 %v1087
        %1730 = vmatprep.subr.bf16.mxu0 0
        %1731 = vmatpush2.bf16.msra.mxu0 0
        %1732 = vmatprep.subr.bf16.mxu0 0
        %1733 = vmatpush2.bf16.msra.mxu0 0
        %1734 = vmatprep.subr.bf16.mxu0 0
        %1735 = vmatpush2.bf16.msra.mxu0 0
        %1736 = vmatprep.subr.bf16.mxu0 0
        %1737 = vmatpush2.bf16.msra.mxu0 0
        %1738 = vmatprep.subr.bf16.mxu0 0
        %1739 = vmatpush2.bf16.msra.mxu0 0
        %1740 = vmatprep.subr.bf16.mxu0 0
        %1741 = vmatpush2.bf16.msra.mxu0 0
        %1742 = vmatprep.subr.bf16.mxu0 0
        %1743 = vmatpush2.bf16.msra.mxu0 0
        %1744 = vmatprep.subr.bf16.mxu0 0
        %1745 = vmatpush2.bf16.msra.mxu0 0
        %1746 = vmatprep.mubr.bf16.mxu0 0
        %1747 = vmatmul.mubr.bf16.gmra.mxu0 %v1713
        %v1748 = vpop.f32.mrf.mxu0
        %v1749 = vadd.f32 %v956, %v1748
        %v1750 = vpop.f32.mrf.mxu0
        %v1751 = vadd.f32 %v960, %v1750
        %v1752 = vpop.f32.mrf.mxu0
        %v1753 = vadd.f32 %v956, %v1752
        %v1754 = vpop.f32.mrf.mxu0
        %v1755 = vadd.f32 %v960, %v1754
        %1756 = vdwg.mxu0
        %1757 = vmatprep.subr.bf16.mxu0 0
        %1758 = vmatpush1.bf16.msra.mxu0 %v1110
        %1759 = vmatprep.subr.bf16.mxu0 0
        %1760 = vmatpush1.bf16.msra.mxu0 %v1107
        %1761 = vmatprep.subr.bf16.mxu0 0
        %1762 = vmatpush1.bf16.msra.mxu0 %v1104
        %1763 = vmatprep.subr.bf16.mxu0 0
        %1764 = vmatpush1.bf16.msra.mxu0 %v1101
        %1765 = vmatprep.subr.bf16.mxu0 0
        %1766 = vmatpush1.bf16.msra.mxu0 %v1098
        %1767 = vmatprep.subr.bf16.mxu0 0
        %1768 = vmatpush1.bf16.msra.mxu0 %v1095
        %1769 = vmatprep.subr.bf16.mxu0 0
        %1770 = vmatpush1.bf16.msra.mxu0 %v1092
        %1771 = vmatprep.subr.bf16.mxu0 0
        %1772 = vmatpush1.bf16.msra.mxu0 %v1089
        %1773 = vmatprep.subr.bf16.mxu0 0
        %1774 = vmatpush2.bf16.msra.mxu0 0
        %1775 = vmatprep.subr.bf16.mxu0 0
        %1776 = vmatpush2.bf16.msra.mxu0 0
        %1777 = vmatprep.subr.bf16.mxu0 0
        %1778 = vmatpush2.bf16.msra.mxu0 0
        %1779 = vmatprep.subr.bf16.mxu0 0
        %1780 = vmatpush2.bf16.msra.mxu0 0
        %1781 = vmatprep.subr.bf16.mxu0 0
        %1782 = vmatpush2.bf16.msra.mxu0 0
        %1783 = vmatprep.subr.bf16.mxu0 0
        %1784 = vmatpush2.bf16.msra.mxu0 0
        %1785 = vmatprep.subr.bf16.mxu0 0
        %1786 = vmatpush2.bf16.msra.mxu0 0
        %1787 = vmatprep.subr.bf16.mxu0 0
        %1788 = vmatpush2.bf16.msra.mxu0 0
        %1789 = vmatprep.mubr.bf16.mxu0 0
        %1790 = vmatmul.mubr.bf16.gmra.mxu0 %v1713
        %v1791 = vpop.f32.mrf.mxu0
        %v1792 = vadd.f32 %v964, %v1791
        %v1793 = vpop.f32.mrf.mxu0
        %v1794 = vpop.f32.mrf.mxu0
        %v1795 = vadd.f32 %v964, %v1794
        %v1796 = vpop.f32.mrf.mxu0
        %1797 = vdwg.mxu0
        %v1798 = vunpack.c.l.bf16 %v1709
        %v1799 = vunpack.c.l.bf16 %v1711
        %v1800 = vadd.f32 %v1798, %v1749
        %v1801 = vadd.f32 %v1799, %v1753
        %v1802 = vxor.u32 %v1800, 2147483648
        %v1803 = vxor.u32 %v1801, 2147483648
        %v1804 = vmul.f32 %v1802, 1.442695
        %v1805 = vpow.pop %v1804
        %v1806 = vmul.f32 %v1803, 1.442695
        %v1807 = vpow.pop %v1806
        %v1808 = vadd.f32 %v1805, 1.0
        %v1809 = vadd.f32 %v1807, 1.0
        %v1810 = vrcp.pop %v1808
        %v1811 = vmul.f32 1.0, %v1810
        %v1812 = vrcp.pop %v1809
        %v1813 = vmul.f32 1.0, %v1812
        %v1816 = vrot.slane %v1709, 4
        %v1817 = vrot.slane %v1711, 4
        %v1820 = vunpack.c.l.bf16 %v1816
        %v1821 = vunpack.c.l.bf16 %v1817
        %v1822 = vadd.f32 %v1820, %v1751
        %v1823 = vadd.f32 %v1821, %v1755
        %v1824 = vxor.u32 %v1822, 2147483648
        %v1825 = vxor.u32 %v1823, 2147483648
        %v1826 = vmul.f32 %v1824, 1.442695
        %v1827 = vpow.pop %v1826
        %v1828 = vmul.f32 %v1825, 1.442695
        %v1829 = vpow.pop %v1828
        %v1830 = vadd.f32 %v1827, 1.0
        %v1831 = vadd.f32 %v1829, 1.0
        %v1832 = vrcp.pop %v1830
        %v1833 = vmul.f32 1.0, %v1832
        %v1834 = vrcp.pop %v1831
        %v1835 = vmul.f32 1.0, %v1834
        %v1836 = vmul.f32 %v1811, %v1792
        %v1837 = vmul.f32 %v1813, %v1795
        %v1838 = vunpack.c.l.bf16 %v1710
        %v1839 = vunpack.c.l.bf16 %v1712
        %v1840 = vadd.f32 %v1838, %v1836
        %v1841 = vadd.f32 %v1839, %v1837
        %v1842 = vtanh.pop %v1840
        %v1843 = vtanh.pop %v1841
        %v1844 = vsub.f32 %v1703, %v1842
        %v1845 = vsub.f32 %v1704, %v1843
        %v1846 = vmul.f32 %v1833, %v1844
        %v1847 = vmul.f32 %v1835, %v1845
        %v1848 = vadd.f32 %v1842, %v1846
        %v1849 = vadd.f32 %v1843, %v1847
        %s1850 = scalar_lea.vmem %s273, 64 [#allocation4]
        %1851 = vst [vmem:[%s1850] sm:$0xff] %v1848
        %1852 = vst [vmem:[%s1850 + $0x8] sm:$0xff] %v1849
        %s1853 = scalar_lea.vmem [#allocation2], 120
        %v1854 = vld [vmem:[%s1853] sm:$0xff]
        %v1855 = vld [vmem:[%s1853 + $0x8] sm:$0xf]
        %v1856 = vld [vmem:[%s1853 + $0xc] sm:$0xff]
        %v1857 = vld [vmem:[%s1853 + $0x14] sm:$0xf]
        %v1858 = vpack.c.bf16 %v1849, %v1848
        %1859 = vmatprep.subr.bf16.mxu0 %v1109
        %1860 = vmatpush1.bf16.msra.mxu0 %v1108
        %1861 = vmatprep.subr.bf16.mxu0 %v1106
        %1862 = vmatpush1.bf16.msra.mxu0 %v1105
        %1863 = vmatprep.subr.bf16.mxu0 %v1103
        %1864 = vmatpush1.bf16.msra.mxu0 %v1102
        %1865 = vmatprep.subr.bf16.mxu0 %v1100
        %1866 = vmatpush1.bf16.msra.mxu0 %v1099
        %1867 = vmatprep.subr.bf16.mxu0 %v1097
        %1868 = vmatpush1.bf16.msra.mxu0 %v1096
        %1869 = vmatprep.subr.bf16.mxu0 %v1094
        %1870 = vmatpush1.bf16.msra.mxu0 %v1093
        %1871 = vmatprep.subr.bf16.mxu0 %v1091
        %1872 = vmatpush1.bf16.msra.mxu0 %v1090
        %1873 = vmatprep.subr.bf16.mxu0 %v1088
        %1874 = vmatpush1.bf16.msra.mxu0 %v1087
        %1875 = vmatprep.subr.bf16.mxu0 0
        %1876 = vmatpush2.bf16.msra.mxu0 0
        %1877 = vmatprep.subr.bf16.mxu0 0
        %1878 = vmatpush2.bf16.msra.mxu0 0
        %1879 = vmatprep.subr.bf16.mxu0 0
        %1880 = vmatpush2.bf16.msra.mxu0 0
        %1881 = vmatprep.subr.bf16.mxu0 0
        %1882 = vmatpush2.bf16.msra.mxu0 0
        %1883 = vmatprep.subr.bf16.mxu0 0
        %1884 = vmatpush2.bf16.msra.mxu0 0
        %1885 = vmatprep.subr.bf16.mxu0 0
        %1886 = vmatpush2.bf16.msra.mxu0 0
        %1887 = vmatprep.subr.bf16.mxu0 0
        %1888 = vmatpush2.bf16.msra.mxu0 0
        %1889 = vmatprep.subr.bf16.mxu0 0
        %1890 = vmatpush2.bf16.msra.mxu0 0
        %1891 = vmatprep.mubr.bf16.mxu0 0
        %1892 = vmatmul.mubr.bf16.gmra.mxu0 %v1858
        %v1893 = vpop.f32.mrf.mxu0
        %v1894 = vadd.f32 %v956, %v1893
        %v1895 = vpop.f32.mrf.mxu0
        %v1896 = vadd.f32 %v960, %v1895
        %v1897 = vpop.f32.mrf.mxu0
        %v1898 = vadd.f32 %v956, %v1897
        %v1899 = vpop.f32.mrf.mxu0
        %v1900 = vadd.f32 %v960, %v1899
        %1901 = vdwg.mxu0
        %1902 = vmatprep.subr.bf16.mxu0 0
        %1903 = vmatpush1.bf16.msra.mxu0 %v1110
        %1904 = vmatprep.subr.bf16.mxu0 0
        %1905 = vmatpush1.bf16.msra.mxu0 %v1107
        %1906 = vmatprep.subr.bf16.mxu0 0
        %1907 = vmatpush1.bf16.msra.mxu0 %v1104
        %1908 = vmatprep.subr.bf16.mxu0 0
        %1909 = vmatpush1.bf16.msra.mxu0 %v1101
        %1910 = vmatprep.subr.bf16.mxu0 0
        %1911 = vmatpush1.bf16.msra.mxu0 %v1098
        %1912 = vmatprep.subr.bf16.mxu0 0
        %1913 = vmatpush1.bf16.msra.mxu0 %v1095
        %1914 = vmatprep.subr.bf16.mxu0 0
        %1915 = vmatpush1.bf16.msra.mxu0 %v1092
        %1916 = vmatprep.subr.bf16.mxu0 0
        %1917 = vmatpush1.bf16.msra.mxu0 %v1089
        %1918 = vmatprep.subr.bf16.mxu0 0
        %1919 = vmatpush2.bf16.msra.mxu0 0
        %1920 = vmatprep.subr.bf16.mxu0 0
        %1921 = vmatpush2.bf16.msra.mxu0 0
        %1922 = vmatprep.subr.bf16.mxu0 0
        %1923 = vmatpush2.bf16.msra.mxu0 0
        %1924 = vmatprep.subr.bf16.mxu0 0
        %1925 = vmatpush2.bf16.msra.mxu0 0
        %1926 = vmatprep.subr.bf16.mxu0 0
        %1927 = vmatpush2.bf16.msra.mxu0 0
        %1928 = vmatprep.subr.bf16.mxu0 0
        %1929 = vmatpush2.bf16.msra.mxu0 0
        %1930 = vmatprep.subr.bf16.mxu0 0
        %1931 = vmatpush2.bf16.msra.mxu0 0
        %1932 = vmatprep.subr.bf16.mxu0 0
        %1933 = vmatpush2.bf16.msra.mxu0 0
        %1934 = vmatprep.mubr.bf16.mxu0 0
        %1935 = vmatmul.mubr.bf16.gmra.mxu0 %v1858
        %v1936 = vpop.f32.mrf.mxu0
        %v1937 = vadd.f32 %v964, %v1936
        %v1938 = vpop.f32.mrf.mxu0
        %v1939 = vpop.f32.mrf.mxu0
        %v1940 = vadd.f32 %v964, %v1939
        %v1941 = vpop.f32.mrf.mxu0
        %1942 = vdwg.mxu0
        %v1943 = vunpack.c.l.bf16 %v1854
        %v1944 = vunpack.c.l.bf16 %v1856
        %v1945 = vadd.f32 %v1943, %v1894
        %v1946 = vadd.f32 %v1944, %v1898
        %v1947 = vxor.u32 %v1945, 2147483648
        %v1948 = vxor.u32 %v1946, 2147483648
        %v1949 = vmul.f32 %v1947, 1.442695
        %v1950 = vpow.pop %v1949
        %v1951 = vmul.f32 %v1948, 1.442695
        %v1952 = vpow.pop %v1951
        %v1953 = vadd.f32 %v1950, 1.0
        %v1954 = vadd.f32 %v1952, 1.0
        %v1955 = vrcp.pop %v1953
        %v1956 = vmul.f32 1.0, %v1955
        %v1957 = vrcp.pop %v1954
        %v1958 = vmul.f32 1.0, %v1957
        %v1961 = vrot.slane %v1854, 4
        %v1962 = vrot.slane %v1856, 4
        %v1965 = vunpack.c.l.bf16 %v1961
        %v1966 = vunpack.c.l.bf16 %v1962
        %v1967 = vadd.f32 %v1965, %v1896
        %v1968 = vadd.f32 %v1966, %v1900
        %v1969 = vxor.u32 %v1967, 2147483648
        %v1970 = vxor.u32 %v1968, 2147483648
        %v1971 = vmul.f32 %v1969, 1.442695
        %v1972 = vpow.pop %v1971
        %v1973 = vmul.f32 %v1970, 1.442695
        %v1974 = vpow.pop %v1973
        %v1975 = vadd.f32 %v1972, 1.0
        %v1976 = vadd.f32 %v1974, 1.0
        %v1977 = vrcp.pop %v1975
        %v1978 = vmul.f32 1.0, %v1977
        %v1979 = vrcp.pop %v1976
        %v1980 = vmul.f32 1.0, %v1979
        %v1981 = vmul.f32 %v1956, %v1937
        %v1982 = vmul.f32 %v1958, %v1940
        %v1983 = vunpack.c.l.bf16 %v1855
        %v1984 = vunpack.c.l.bf16 %v1857
        %v1985 = vadd.f32 %v1983, %v1981
        %v1986 = vadd.f32 %v1984, %v1982
        %v1987 = vtanh.pop %v1985
        %v1988 = vtanh.pop %v1986
        %v1989 = vsub.f32 %v1848, %v1987
        %v1990 = vsub.f32 %v1849, %v1988
        %v1991 = vmul.f32 %v1978, %v1989
        %v1992 = vmul.f32 %v1980, %v1990
        %v1993 = vadd.f32 %v1987, %v1991
        %v1994 = vadd.f32 %v1988, %v1992
        %s1995 = scalar_lea.vmem %s273, 80 [#allocation4]
        %1996 = vst [vmem:[%s1995] sm:$0xff] %v1993
        %1997 = vst [vmem:[%s1995 + $0x8] sm:$0xff] %v1994
        %s1998 = scalar_lea.vmem [#allocation2], 144
        %v1999 = vld [vmem:[%s1998] sm:$0xff]
        %v2000 = vld [vmem:[%s1998 + $0x8] sm:$0xf]
        %v2001 = vld [vmem:[%s1998 + $0xc] sm:$0xff]
        %v2002 = vld [vmem:[%s1998 + $0x14] sm:$0xf]
        %v2003 = vpack.c.bf16 %v1994, %v1993
        %2004 = vmatprep.subr.bf16.mxu0 %v1109
        %2005 = vmatpush1.bf16.msra.mxu0 %v1108
        %2006 = vmatprep.subr.bf16.mxu0 %v1106
        %2007 = vmatpush1.bf16.msra.mxu0 %v1105
        %2008 = vmatprep.subr.bf16.mxu0 %v1103
        %2009 = vmatpush1.bf16.msra.mxu0 %v1102
        %2010 = vmatprep.subr.bf16.mxu0 %v1100
        %2011 = vmatpush1.bf16.msra.mxu0 %v1099
        %2012 = vmatprep.subr.bf16.mxu0 %v1097
        %2013 = vmatpush1.bf16.msra.mxu0 %v1096
        %2014 = vmatprep.subr.bf16.mxu0 %v1094
        %2015 = vmatpush1.bf16.msra.mxu0 %v1093
        %2016 = vmatprep.subr.bf16.mxu0 %v1091
        %2017 = vmatpush1.bf16.msra.mxu0 %v1090
        %2018 = vmatprep.subr.bf16.mxu0 %v1088
        %2019 = vmatpush1.bf16.msra.mxu0 %v1087
        %2020 = vmatprep.subr.bf16.mxu0 0
        %2021 = vmatpush2.bf16.msra.mxu0 0
        %2022 = vmatprep.subr.bf16.mxu0 0
        %2023 = vmatpush2.bf16.msra.mxu0 0
        %2024 = vmatprep.subr.bf16.mxu0 0
        %2025 = vmatpush2.bf16.msra.mxu0 0
        %2026 = vmatprep.subr.bf16.mxu0 0
        %2027 = vmatpush2.bf16.msra.mxu0 0
        %2028 = vmatprep.subr.bf16.mxu0 0
        %2029 = vmatpush2.bf16.msra.mxu0 0
        %2030 = vmatprep.subr.bf16.mxu0 0
        %2031 = vmatpush2.bf16.msra.mxu0 0
        %2032 = vmatprep.subr.bf16.mxu0 0
        %2033 = vmatpush2.bf16.msra.mxu0 0
        %2034 = vmatprep.subr.bf16.mxu0 0
        %2035 = vmatpush2.bf16.msra.mxu0 0
        %2036 = vmatprep.mubr.bf16.mxu0 0
        %2037 = vmatmul.mubr.bf16.gmra.mxu0 %v2003
        %v2038 = vpop.f32.mrf.mxu0
        %v2039 = vadd.f32 %v956, %v2038
        %v2040 = vpop.f32.mrf.mxu0
        %v2041 = vadd.f32 %v960, %v2040
        %v2042 = vpop.f32.mrf.mxu0
        %v2043 = vadd.f32 %v956, %v2042
        %v2044 = vpop.f32.mrf.mxu0
        %v2045 = vadd.f32 %v960, %v2044
        %2046 = vdwg.mxu0
        %2047 = vmatprep.subr.bf16.mxu0 0
        %2048 = vmatpush1.bf16.msra.mxu0 %v1110
        %2049 = vmatprep.subr.bf16.mxu0 0
        %2050 = vmatpush1.bf16.msra.mxu0 %v1107
        %2051 = vmatprep.subr.bf16.mxu0 0
        %2052 = vmatpush1.bf16.msra.mxu0 %v1104
        %2053 = vmatprep.subr.bf16.mxu0 0
        %2054 = vmatpush1.bf16.msra.mxu0 %v1101
        %2055 = vmatprep.subr.bf16.mxu0 0
        %2056 = vmatpush1.bf16.msra.mxu0 %v1098
        %2057 = vmatprep.subr.bf16.mxu0 0
        %2058 = vmatpush1.bf16.msra.mxu0 %v1095
        %2059 = vmatprep.subr.bf16.mxu0 0
        %2060 = vmatpush1.bf16.msra.mxu0 %v1092
        %2061 = vmatprep.subr.bf16.mxu0 0
        %2062 = vmatpush1.bf16.msra.mxu0 %v1089
        %2063 = vmatprep.subr.bf16.mxu0 0
        %2064 = vmatpush2.bf16.msra.mxu0 0
        %2065 = vmatprep.subr.bf16.mxu0 0
        %2066 = vmatpush2.bf16.msra.mxu0 0
        %2067 = vmatprep.subr.bf16.mxu0 0
        %2068 = vmatpush2.bf16.msra.mxu0 0
        %2069 = vmatprep.subr.bf16.mxu0 0
        %2070 = vmatpush2.bf16.msra.mxu0 0
        %2071 = vmatprep.subr.bf16.mxu0 0
        %2072 = vmatpush2.bf16.msra.mxu0 0
        %2073 = vmatprep.subr.bf16.mxu0 0
        %2074 = vmatpush2.bf16.msra.mxu0 0
        %2075 = vmatprep.subr.bf16.mxu0 0
        %2076 = vmatpush2.bf16.msra.mxu0 0
        %2077 = vmatprep.subr.bf16.mxu0 0
        %2078 = vmatpush2.bf16.msra.mxu0 0
        %2079 = vmatprep.mubr.bf16.mxu0 0
        %2080 = vmatmul.mubr.bf16.gmra.mxu0 %v2003
        %v2081 = vpop.f32.mrf.mxu0
        %v2082 = vadd.f32 %v964, %v2081
        %v2083 = vpop.f32.mrf.mxu0
        %v2084 = vpop.f32.mrf.mxu0
        %v2085 = vadd.f32 %v964, %v2084
        %v2086 = vpop.f32.mrf.mxu0
        %2087 = vdwg.mxu0
        %v2088 = vunpack.c.l.bf16 %v1999
        %v2089 = vunpack.c.l.bf16 %v2001
        %v2090 = vadd.f32 %v2088, %v2039
        %v2091 = vadd.f32 %v2089, %v2043
        %v2092 = vxor.u32 %v2090, 2147483648
        %v2093 = vxor.u32 %v2091, 2147483648
        %v2094 = vmul.f32 %v2092, 1.442695
        %v2095 = vpow.pop %v2094
        %v2096 = vmul.f32 %v2093, 1.442695
        %v2097 = vpow.pop %v2096
        %v2098 = vadd.f32 %v2095, 1.0
        %v2099 = vadd.f32 %v2097, 1.0
        %v2100 = vrcp.pop %v2098
        %v2101 = vmul.f32 1.0, %v2100
        %v2102 = vrcp.pop %v2099
        %v2103 = vmul.f32 1.0, %v2102
        %v2106 = vrot.slane %v1999, 4
        %v2107 = vrot.slane %v2001, 4
        %v2110 = vunpack.c.l.bf16 %v2106
        %v2111 = vunpack.c.l.bf16 %v2107
        %v2112 = vadd.f32 %v2110, %v2041
        %v2113 = vadd.f32 %v2111, %v2045
        %v2114 = vxor.u32 %v2112, 2147483648
        %v2115 = vxor.u32 %v2113, 2147483648
        %v2116 = vmul.f32 %v2114, 1.442695
        %v2117 = vpow.pop %v2116
        %v2118 = vmul.f32 %v2115, 1.442695
        %v2119 = vpow.pop %v2118
        %v2120 = vadd.f32 %v2117, 1.0
        %v2121 = vadd.f32 %v2119, 1.0
        %v2122 = vrcp.pop %v2120
        %v2123 = vmul.f32 1.0, %v2122
        %v2124 = vrcp.pop %v2121
        %v2125 = vmul.f32 1.0, %v2124
        %v2126 = vmul.f32 %v2101, %v2082
        %v2127 = vmul.f32 %v2103, %v2085
        %v2128 = vunpack.c.l.bf16 %v2000
        %v2129 = vunpack.c.l.bf16 %v2002
        %v2130 = vadd.f32 %v2128, %v2126
        %v2131 = vadd.f32 %v2129, %v2127
        %v2132 = vtanh.pop %v2130
        %v2133 = vtanh.pop %v2131
        %v2134 = vsub.f32 %v1993, %v2132
        %v2135 = vsub.f32 %v1994, %v2133
        %v2136 = vmul.f32 %v2123, %v2134
        %v2137 = vmul.f32 %v2125, %v2135
        %v2138 = vadd.f32 %v2132, %v2136
        %v2139 = vadd.f32 %v2133, %v2137
        %s2140 = scalar_lea.vmem %s273, 96 [#allocation4]
        %2141 = vst [vmem:[%s2140] sm:$0xff] %v2138
        %2142 = vst [vmem:[%s2140 + $0x8] sm:$0xff] %v2139
        %s2143 = scalar_lea.vmem [#allocation2], 168
        %v2144 = vld [vmem:[%s2143] sm:$0xff]
        %v2145 = vld [vmem:[%s2143 + $0x8] sm:$0xf]
        %v2146 = vld [vmem:[%s2143 + $0xc] sm:$0xff]
        %v2147 = vld [vmem:[%s2143 + $0x14] sm:$0xf]
        %v2148 = vpack.c.bf16 %v2139, %v2138
        %2149 = vmatprep.subr.bf16.mxu0 %v1109
        %2150 = vmatpush1.bf16.msra.mxu0 %v1108
        %2151 = vmatprep.subr.bf16.mxu0 %v1106
        %2152 = vmatpush1.bf16.msra.mxu0 %v1105
        %2153 = vmatprep.subr.bf16.mxu0 %v1103
        %2154 = vmatpush1.bf16.msra.mxu0 %v1102
        %2155 = vmatprep.subr.bf16.mxu0 %v1100
        %2156 = vmatpush1.bf16.msra.mxu0 %v1099
        %2157 = vmatprep.subr.bf16.mxu0 %v1097
        %2158 = vmatpush1.bf16.msra.mxu0 %v1096
        %2159 = vmatprep.subr.bf16.mxu0 %v1094
        %2160 = vmatpush1.bf16.msra.mxu0 %v1093
        %2161 = vmatprep.subr.bf16.mxu0 %v1091
        %2162 = vmatpush1.bf16.msra.mxu0 %v1090
        %2163 = vmatprep.subr.bf16.mxu0 %v1088
        %2164 = vmatpush1.bf16.msra.mxu0 %v1087
        %2165 = vmatprep.subr.bf16.mxu0 0
        %2166 = vmatpush2.bf16.msra.mxu0 0
        %2167 = vmatprep.subr.bf16.mxu0 0
        %2168 = vmatpush2.bf16.msra.mxu0 0
        %2169 = vmatprep.subr.bf16.mxu0 0
        %2170 = vmatpush2.bf16.msra.mxu0 0
        %2171 = vmatprep.subr.bf16.mxu0 0
        %2172 = vmatpush2.bf16.msra.mxu0 0
        %2173 = vmatprep.subr.bf16.mxu0 0
        %2174 = vmatpush2.bf16.msra.mxu0 0
        %2175 = vmatprep.subr.bf16.mxu0 0
        %2176 = vmatpush2.bf16.msra.mxu0 0
        %2177 = vmatprep.subr.bf16.mxu0 0
        %2178 = vmatpush2.bf16.msra.mxu0 0
        %2179 = vmatprep.subr.bf16.mxu0 0
        %2180 = vmatpush2.bf16.msra.mxu0 0
        %2181 = vmatprep.mubr.bf16.mxu0 0
        %2182 = vmatmul.mubr.bf16.gmra.mxu0 %v2148
        %v2183 = vpop.f32.mrf.mxu0
        %v2184 = vadd.f32 %v956, %v2183
        %v2185 = vpop.f32.mrf.mxu0
        %v2186 = vadd.f32 %v960, %v2185
        %v2187 = vpop.f32.mrf.mxu0
        %v2188 = vadd.f32 %v956, %v2187
        %v2189 = vpop.f32.mrf.mxu0
        %v2190 = vadd.f32 %v960, %v2189
        %2191 = vdwg.mxu0
        %2192 = vmatprep.subr.bf16.mxu0 0
        %2193 = vmatpush1.bf16.msra.mxu0 %v1110
        %2194 = vmatprep.subr.bf16.mxu0 0
        %2195 = vmatpush1.bf16.msra.mxu0 %v1107
        %2196 = vmatprep.subr.bf16.mxu0 0
        %2197 = vmatpush1.bf16.msra.mxu0 %v1104
        %2198 = vmatprep.subr.bf16.mxu0 0
        %2199 = vmatpush1.bf16.msra.mxu0 %v1101
        %2200 = vmatprep.subr.bf16.mxu0 0
        %2201 = vmatpush1.bf16.msra.mxu0 %v1098
        %2202 = vmatprep.subr.bf16.mxu0 0
        %2203 = vmatpush1.bf16.msra.mxu0 %v1095
        %2204 = vmatprep.subr.bf16.mxu0 0
        %2205 = vmatpush1.bf16.msra.mxu0 %v1092
        %2206 = vmatprep.subr.bf16.mxu0 0
        %2207 = vmatpush1.bf16.msra.mxu0 %v1089
        %2208 = vmatprep.subr.bf16.mxu0 0
        %2209 = vmatpush2.bf16.msra.mxu0 0
        %2210 = vmatprep.subr.bf16.mxu0 0
        %2211 = vmatpush2.bf16.msra.mxu0 0
        %2212 = vmatprep.subr.bf16.mxu0 0
        %2213 = vmatpush2.bf16.msra.mxu0 0
        %2214 = vmatprep.subr.bf16.mxu0 0
        %2215 = vmatpush2.bf16.msra.mxu0 0
        %2216 = vmatprep.subr.bf16.mxu0 0
        %2217 = vmatpush2.bf16.msra.mxu0 0
        %2218 = vmatprep.subr.bf16.mxu0 0
        %2219 = vmatpush2.bf16.msra.mxu0 0
        %2220 = vmatprep.subr.bf16.mxu0 0
        %2221 = vmatpush2.bf16.msra.mxu0 0
        %2222 = vmatprep.subr.bf16.mxu0 0
        %2223 = vmatpush2.bf16.msra.mxu0 0
        %2224 = vmatprep.mubr.bf16.mxu0 0
        %2225 = vmatmul.mubr.bf16.gmra.mxu0 %v2148
        %v2226 = vpop.f32.mrf.mxu0
        %v2227 = vadd.f32 %v964, %v2226
        %v2228 = vpop.f32.mrf.mxu0
        %v2229 = vpop.f32.mrf.mxu0
        %v2230 = vadd.f32 %v964, %v2229
        %v2231 = vpop.f32.mrf.mxu0
        %2232 = vdwg.mxu0
        %v2233 = vunpack.c.l.bf16 %v2144
        %v2234 = vunpack.c.l.bf16 %v2146
        %v2235 = vadd.f32 %v2233, %v2184
        %v2236 = vadd.f32 %v2234, %v2188
        %v2237 = vxor.u32 %v2235, 2147483648
        %v2238 = vxor.u32 %v2236, 2147483648
        %v2239 = vmul.f32 %v2237, 1.442695
        %v2240 = vpow.pop %v2239
        %v2241 = vmul.f32 %v2238, 1.442695
        %v2242 = vpow.pop %v2241
        %v2243 = vadd.f32 %v2240, 1.0
        %v2244 = vadd.f32 %v2242, 1.0
        %v2245 = vrcp.pop %v2243
        %v2246 = vmul.f32 1.0, %v2245
        %v2247 = vrcp.pop %v2244
        %v2248 = vmul.f32 1.0, %v2247
        %v2251 = vrot.slane %v2144, 4
        %v2252 = vrot.slane %v2146, 4
        %v2255 = vunpack.c.l.bf16 %v2251
        %v2256 = vunpack.c.l.bf16 %v2252
        %v2257 = vadd.f32 %v2255, %v2186
        %v2258 = vadd.f32 %v2256, %v2190
        %v2259 = vxor.u32 %v2257, 2147483648
        %v2260 = vxor.u32 %v2258, 2147483648
        %v2261 = vmul.f32 %v2259, 1.442695
        %v2262 = vpow.pop %v2261
        %v2263 = vmul.f32 %v2260, 1.442695
        %v2264 = vpow.pop %v2263
        %v2265 = vadd.f32 %v2262, 1.0
        %v2266 = vadd.f32 %v2264, 1.0
        %v2267 = vrcp.pop %v2265
        %v2268 = vmul.f32 1.0, %v2267
        %v2269 = vrcp.pop %v2266
        %v2270 = vmul.f32 1.0, %v2269
        %v2271 = vmul.f32 %v2246, %v2227
        %v2272 = vmul.f32 %v2248, %v2230
        %v2273 = vunpack.c.l.bf16 %v2145
        %v2274 = vunpack.c.l.bf16 %v2147
        %v2275 = vadd.f32 %v2273, %v2271
        %v2276 = vadd.f32 %v2274, %v2272
        %v2277 = vtanh.pop %v2275
        %v2278 = vtanh.pop %v2276
        %v2279 = vsub.f32 %v2138, %v2277
        %v2280 = vsub.f32 %v2139, %v2278
        %v2281 = vmul.f32 %v2268, %v2279
        %v2282 = vmul.f32 %v2270, %v2280
        %v2283 = vadd.f32 %v2277, %v2281
        %v2284 = vadd.f32 %v2278, %v2282
        %s2285 = scalar_lea.vmem %s273, 112 [#allocation4]
        %2286 = vst [vmem:[%s2285] sm:$0xff] %v2283
        %2287 = vst [vmem:[%s2285 + $0x8] sm:$0xff] %v2284
        %2288 = vst [vmem:[#allocation3] sm:$0xff] %v2283
        %2289 = vst [vmem:[#allocation3 + $0x8] sm:$0xff] %v2284
        %p2290 = scmp.eq.s32.totalorder %s26, 1
        // Predicated region
        $region45: #{seq2seq_encoder_forward.3} parent=39 // pred_check
          %p2291 = pneg %p2290
        $region46: #{seq2seq_encoder_forward.3} parent=39 // pred_check_branch
          %2293 = sbr.rel (%p2291) target = $region48
        $region47: #{seq2seq_encoder_forward.3} parent=39 // pred_region
          %2294 = vst [vmem:[%s299] sm:$0xff] %v2283
          %2295 = vst [vmem:[%s299 + $0x8] sm:$0xff] %v2284
        $region48: #{seq2seq_encoder_forward.3} parent=39 // pred_fallthru
          _
        %s2296 = sand.u32 %s155, 1
        %s2297 = scalar_lea.sflag [#allocation5], %s2296
        %s2298 = sand.u32 %s155, 1
        %s2299 = smul.addr %s2298, 128
        %s2300 = scalar_lea.vmem [#allocation4], %s2299
        %s2301 = smul.u32 2, %s25
        %p2302 = scmp.lt.s32.totalorder %s2301, 1
        %s2303 = scalar_select %p2302, %s2301, 1
        %s2304 = smul.addr %s2303, 8
        %s2305 = scalar_lea.vmem %s6, %s2304
        // Predicated region
        $region49: #{seq2seq_encoder_forward.3} parent=39 // pred_check
          %p2306 = pneg %p165
        $region50: #{seq2seq_encoder_forward.3} parent=39 // pred_check_branch
          %2308 = sbr.rel (%p2306) target = $region52
        $region51: #{seq2seq_encoder_forward.3} parent=39 // pred_region
          %s2309 = smul.u32 8, %s26
          %s2310 = smul.u32 2, %s25
          %s2312 = ssub.s32 2048, 2048
          %2313 = vsyncadd %s2297, %s2312
          %s2314 = smul.addr %s2309, 2
          %s2315 = sadd.s32 %s2310, %s2314
          %s2316 = smul.addr %s2315, 128
          %s2317 = scalar_lea.hbm %s5, %s2316
          %s2318 = sshll.u32 %s2300, 4
          %s2319 = int_to_ptr.vmem [resolvable:$true] %s2318
          %2324 = dma.vmem_to_hbm [thread:$0]  %s2319, 2048, %s2317, %s2297, 128, 128, 8
        $region52: #{seq2seq_encoder_forward.3} parent=39 // pred_fallthru
          _
        // Predicated region
        $region53: #{seq2seq_encoder_forward.3} parent=39 // pred_check
          %p2325 = pneg %p191
        $region54: #{seq2seq_encoder_forward.3} parent=39 // pred_check_branch
          %2327 = sbr.rel (%p2325) target = $region56
        $region55: #{seq2seq_encoder_forward.3} parent=39 // pred_region
          %s2328 = smul.u32 2, %s25
        $region56: #{seq2seq_encoder_forward.3} parent=39 // pred_fallthru
          _
        // Predicated region
        $region57: #{seq2seq_encoder_forward.3} parent=39 // pred_check
          %p2329 = pneg %p191
        $region58: #{seq2seq_encoder_forward.3} parent=39 // pred_check_branch
          %2331 = sbr.rel (%p2329) target = $region60
        $region59: #{seq2seq_encoder_forward.3} parent=39 // pred_region
          %s2332 = smul.u32 2, %s25
          %p2333 = scmp.lt.s32.totalorder %s2332, 1
          %s2334 = scalar_select %p2333, %s2332, 1
          %s2335 = smul.addr %s2334, 8
          %s2336 = scalar_lea.vmem %s6, %s2335
        $region60: #{seq2seq_encoder_forward.3} parent=39 // pred_fallthru
          _
      $region40: #{seq2seq_encoder_forward.3} parent=5 // pred_fallthru
        _
      %p2337 = scmp.le.s32.totalorder 2, %s16
      // Predicated region
      $region61: #{seq2seq_encoder_forward.3} parent=5 // pred_check
        %p2338 = pneg %p2337
      $region62: #{seq2seq_encoder_forward.3} parent=5 // pred_check_branch
        %2340 = sbr.rel (%p2338) target = $region64
      $region63: #{seq2seq_encoder_forward.3} parent=5 // pred_region
        %s2341 = ssub.s32 %s16, 2
        // Predicated region
        $region65: #{seq2seq_encoder_forward.3} parent=63 // pred_check
          %p2342 = pneg %p171
        $region66: #{seq2seq_encoder_forward.3} parent=63 // pred_check_branch
          %2344 = sbr.rel (%p2342) target = $region68
        $region67: #{seq2seq_encoder_forward.3} parent=63 // pred_region
          %s2345 = sand.u32 %s156, 1
          %s2346 = scalar_lea.sflag [#allocation5], %s2345
          %s2347 = sand.u32 %s156, 1
          %s2348 = smul.addr %s2347, 128
          %s2349 = scalar_lea.vmem [#allocation4], %s2348
          %2350 = dma.done %s2346, 2048
        $region68: #{seq2seq_encoder_forward.3} parent=63 // pred_fallthru
          _
      $region64: #{seq2seq_encoder_forward.3} parent=5 // pred_fallthru
        _
    $region6: #{seq2seq_encoder_forward.3} parent=1 // loop_footer
      %s20 = sadd.s32 1, %s16
    $region7: #{seq2seq_encoder_forward.3} parent=1 // loop_footer_branch
      %15 = sbr.rel target = $region3
    $region8: #{seq2seq_encoder_forward.3} parent=1 // loop_exit
      _
    %2351 = vsyncpa [#allocation5], 1
    %s2352 = scalar_lea.sflag [#allocation5], 1
    %2353 = vsyncpa %s2352, 1

</llo_original>
